<compile_context>
chip_gen: v6e
topology: v6e:2x2x1
jax: 0.10.0
libtpu: 0.0.40
codegen_flags: <defaults>
</compile_context>

<pallas_src>
import functools

import jax
import jax.numpy as jnp
from jax.experimental import pallas as pl
from jax.experimental.pallas import tpu as pltpu

# ---- Encoder hyperparameters (consistent with the PyTorch module) ----------
NUM_EMBEDDINGS = 50        # vocab size
EMBEDDING_DIM  = 32        # E
HIDDEN_SIZE    = 32        # H
NUM_LAYERS     = 2
KERNEL_SIZE    = 3         # must be odd
MAX_LENGTH     = 100
PAD            = (KERNEL_SIZE - 1) // 2
SCALE          = 0.5 ** 0.5          # torch.sqrt(tensor([0.5]))
assert KERNEL_SIZE % 2 == 1, "Kernel_size must be odd"
# nn.Dropout at inference is the identity.
# TODO(synk): train-mode dropout (random masking) is not implemented.

# ---- packed parameter slab layout (rows x 128 lanes, bf16) -----------------
TOK_ROWS   = 64                          # token rows (vocab zero-padded to 64)
POS_SLOTS  = 192                         # positional slots (>= MAX_LENGTH)
TABLE_ROWS = TOK_ROWS + POS_SLOTS        # 256: combined tok|pos table, K-dense
SLAB_LANES = 128
OUT_LANES  = 128                         # lane-dense output slab width

OFF_TABLE    = 0
OFF_W_E2H    = OFF_TABLE + TABLE_ROWS                         # 256
OFF_B_E2H    = OFF_W_E2H + EMBEDDING_DIM                      # 288
OFF_CONV_W   = OFF_B_E2H + 8                                  # 296
_CONV_W_ROWS = NUM_LAYERS * 2 * KERNEL_SIZE * HIDDEN_SIZE     # 384
OFF_CONV_B   = OFF_CONV_W + _CONV_W_ROWS                      # 680
_CONV_B_ROWS = NUM_LAYERS * 2 * 8                             # 32
OFF_W_H2E    = OFF_CONV_B + _CONV_B_ROWS                      # 712
OFF_B_H2E    = OFF_W_H2E + HIDDEN_SIZE                        # 744
SLAB_ROWS    = OFF_B_H2E + 8                                  # 752 (8-aligned)

# Demo shapes: BL = 256 folded rows so the MXU sees real row counts.
BATCH   = 4
SEQ_LEN = 64    # must be a multiple of 8 and <= min(MAX_LENGTH, POS_SLOTS)


def _conv_w_off(layer, half, k):
    """Row offset of the (H, H) weight block: half 0 = GLU value, 1 = gate."""
    return OFF_CONV_W + ((layer * 2 + half) * KERNEL_SIZE + k) * HIDDEN_SIZE


def _conv_b_off(layer, half):
    return OFF_CONV_B + (layer * 2 + half) * 8


def encoder_kernel(ids_ref, slab_ref, out_ref, *, seq_len):
    rows = ids_ref.shape[0]          # folded rows in this tile (multiple of seq_len)
    E, H, K, NL = EMBEDDING_DIM, HIDDEN_SIZE, KERNEL_SIZE, NUM_LAYERS
    f32, bf16 = jnp.float32, jnp.bfloat16

    # ---- fused token + positional embedding: one one-hot MXU matmul --------
    # onehot has two disjoint ones per row: the token id column and the
    # (TOK_ROWS + position) column of the combined table.
    ids = ids_ref[...]                                               # (rows, 1) int32
    row_iota = jax.lax.broadcasted_iota(jnp.int32, (rows, TABLE_ROWS), 0)
    col_iota = jax.lax.broadcasted_iota(jnp.int32, (rows, TABLE_ROWS), 1)
    seq_pos_t = row_iota % seq_len
    onehot = jnp.logical_or(col_iota == ids,
                            col_iota == TOK_ROWS + seq_pos_t).astype(bf16)
    table = slab_ref[OFF_TABLE:OFF_TABLE + TABLE_ROWS, 0:E]         # (256, E) bf16
    embed = jnp.dot(onehot, table, preferred_element_type=f32)       # (rows, E) f32

    # ---- emb2hid linear (MXU, bf16 in / f32 acc) ----------------------------
    w_e2h = slab_ref[OFF_W_E2H:OFF_W_E2H + E, 0:H]
    b_e2h = slab_ref[OFF_B_E2H:OFF_B_E2H + 1, 0:H].astype(f32)
    x = jnp.dot(embed.astype(bf16), w_e2h, preferred_element_type=f32) + b_e2h

    # ---- hoisted per-tap validity masks (conv zero-pad + fold boundary) ----
    seq_pos_h = jax.lax.broadcasted_iota(jnp.int32, (rows, H), 0) % seq_len
    tap_masks = {}
    for k in range(K):
        s = k - PAD
        if s != 0:
            tap_masks[s] = jnp.logical_and(seq_pos_h + s >= 0,
                                           seq_pos_h + s < seq_len)

    # ---- conv -> GLU -> residual layers -------------------------------------
    for layer in range(NL):
        x_bf = x.astype(bf16)
        acc_v = jnp.zeros((rows, H), f32)      # GLU value half
        acc_g = jnp.zeros((rows, H), f32)      # GLU gate half
        for k in range(K):
            s = k - PAD
            if s == 0:
                tap = x_bf
            else:
                rolled = pltpu.roll(x, (-s) % rows, 0)   # y[t] = x[t+s] (circular)
                tap = jnp.where(tap_masks[s], rolled, 0.0).astype(bf16)
            ov = _conv_w_off(layer, 0, k)
            og = _conv_w_off(layer, 1, k)
            acc_v = acc_v + jnp.dot(tap, slab_ref[ov:ov + H, 0:H],
                                    preferred_element_type=f32)
            acc_g = acc_g + jnp.dot(tap, slab_ref[og:og + H, 0:H],
                                    preferred_element_type=f32)
        bv = _conv_b_off(layer, 0)
        bg = _conv_b_off(layer, 1)
        acc_v = acc_v + slab_ref[bv:bv + 1, 0:H].astype(f32)
        acc_g = acc_g + slab_ref[bg:bg + 1, 0:H].astype(f32)
        glu = acc_v * jax.nn.sigmoid(acc_g)               # F.glu over channels
        x = (glu + x) * SCALE                             # residual * sqrt(0.5)

    # ---- hid2emb + combined, one lane-dense 128-wide store ------------------
    w_h2e = slab_ref[OFF_W_H2E:OFF_W_H2E + H, 0:E]
    b_h2e = slab_ref[OFF_B_H2E:OFF_B_H2E + 1, 0:E].astype(f32)
    conved = jnp.dot(x.astype(bf16), w_h2e, preferred_element_type=f32) + b_h2e
    combined = (conved + embed) * SCALE
    out_ref[...] = jnp.concatenate(
        [conved, combined, jnp.zeros((rows, OUT_LANES - 2 * E), f32)], axis=1)


def _pick_tile_rows(total_rows, seq_len, target_rows=256):
    """Rows per grid tile: whole sequences only (so the roll+mask conv never
    crosses a tile edge).  ~256 rows keeps double-buffered tiles comfortably
    inside v7x's smaller (64 MiB physical / 32 MiB scoped) VMEM."""
    seqs = total_rows // seq_len
    per_tile = max(1, min(seqs, max(1, target_rows // seq_len)))
    while seqs % per_tile:
        per_tile -= 1
    return per_tile * seq_len


def encoder_forward(params, src):
    B, L = src.shape
    E = EMBEDDING_DIM
    assert L % 8 == 0, "folded layout assumes L is a multiple of 8"
    # TODO(synk): ragged / non-multiple-of-8 sequence lengths need padding+masking.
    assert L <= min(MAX_LENGTH, POS_SLOTS), "positional table slots exceeded"
    assert PAD < L, "roll+mask conv assumes padding < sequence length"
    # NOTE: token ids must be in [0, NUM_EMBEDDINGS); out-of-range ids map to
    # zero-padded table rows instead of raising, unlike torch.nn.Embedding.
    BL = B * L
    tile = _pick_tile_rows(BL, L)
    num_tiles = BL // tile

    ids = src.reshape(BL, 1).astype(jnp.int32)

    out = pl.pallas_call(
        functools.partial(encoder_kernel, seq_len=L),
        grid=(num_tiles,),
        in_specs=[
            pl.BlockSpec((tile, 1), lambda i: (i, 0)),                 # token ids
            pl.BlockSpec((SLAB_ROWS, SLAB_LANES), lambda i: (0, 0)),   # param slab
        ],
        out_specs=pl.BlockSpec((tile, OUT_LANES), lambda i: (i, 0)),
        out_shape=jax.ShapeDtypeStruct((BL, OUT_LANES), jnp.float32),
        compiler_params=pltpu.CompilerParams(
            dimension_semantics=("parallel",)),        # v7x: shard tiles over TCs
    )(ids, params["slab"])

    conved = out[:, :E].reshape(B, L, E)
    combined = out[:, E:2 * E].reshape(B, L, E)
    return conved, combined


def pack_param_slab(p):
    """Pack every parameter into one lane-dense bf16 slab (single input DMA)."""
    E, H, K, NL, V = (EMBEDDING_DIM, HIDDEN_SIZE, KERNEL_SIZE, NUM_LAYERS,
                      NUM_EMBEDDINGS)
    slab = jnp.zeros((SLAB_ROWS, SLAB_LANES), jnp.bfloat16)
    slab = slab.at[OFF_TABLE:OFF_TABLE + V, :E].set(p["tok_table"])
    npos = min(MAX_LENGTH, POS_SLOTS)
    slab = slab.at[OFF_TABLE + TOK_ROWS:OFF_TABLE + TOK_ROWS + npos, :E].set(
        p["pos_table"][:npos])
    slab = slab.at[OFF_W_E2H:OFF_W_E2H + E, :H].set(p["w_e2h"])
    slab = slab.at[OFF_B_E2H, :H].set(p["b_e2h"])
    for layer in range(NL):
        for half in range(2):                       # 0 = GLU value, 1 = gate
            for k in range(K):
                w = p["conv_w"][layer, k, :, half * H:(half + 1) * H]   # (H, H)
                off = _conv_w_off(layer, half, k)
                slab = slab.at[off:off + H, :H].set(w)
            boff = _conv_b_off(layer, half)
            slab = slab.at[boff, :H].set(p["conv_b"][layer, half * H:(half + 1) * H])
    slab = slab.at[OFF_W_H2E:OFF_W_H2E + H, :E].set(p["w_h2e"])
    slab = slab.at[OFF_B_H2E, :E].set(p["b_h2e"])
    return slab


def init_params(key):
    E, H, K, NL, V = (EMBEDDING_DIM, HIDDEN_SIZE, KERNEL_SIZE, NUM_LAYERS,
                      NUM_EMBEDDINGS)
    f32, bf16 = jnp.float32, jnp.bfloat16
    ks = jax.random.split(key, 8)
    # PyTorch Conv1d weight is (2H, H, K); stored here per-tap, channels-last as
    # (NL, K, H_in, 2H_out) with the GLU value half in out[:H], gate in out[H:].
    p = {
        "tok_table": (jax.random.normal(ks[0], (V, E), f32) * 0.1).astype(bf16),
        "pos_table": (jax.random.normal(ks[1], (MAX_LENGTH, E), f32) * 0.1).astype(bf16),
        "w_e2h": (jax.random.normal(ks[2], (E, H), f32) / jnp.sqrt(E)).astype(bf16),
        "b_e2h": (jax.random.normal(ks[3], (H,), f32) * 0.02).astype(bf16),
        "conv_w": (jax.random.normal(ks[4], (NL, K, H, 2 * H), f32)
                   / jnp.sqrt(K * H)).astype(bf16),
        "conv_b": (jax.random.normal(ks[5], (NL, 2 * H), f32) * 0.02).astype(bf16),
        "w_h2e": (jax.random.normal(ks[6], (H, E), f32) / jnp.sqrt(H)).astype(bf16),
        "b_h2e": (jax.random.normal(ks[7], (E,), f32) * 0.02).astype(bf16),
    }
    p["slab"] = pack_param_slab(p)
    return p


def encoder_reference(params, src):
    """Pure-JAX reference mirroring torch semantics, with the same bf16 matmul
    operands / f32 accumulation as the kernel so tolerances can stay tight."""
    B, L = src.shape
    E, H, NL = EMBEDDING_DIM, HIDDEN_SIZE, NUM_LAYERS
    f32, bf16 = jnp.float32, jnp.bfloat16
    embed = (params["tok_table"][src].astype(f32)
             + params["pos_table"][:L].astype(f32)[None])
    x = jnp.einsum("ble,eh->blh", embed.astype(bf16), params["w_e2h"],
                   preferred_element_type=f32) + params["b_e2h"].astype(f32)
    for layer in range(NL):
        w = params["conv_w"][layer]                       # (K, H, 2H) bf16
        w_oik = jnp.transpose(w, (2, 1, 0))               # (2H, H, K)
        y = jax.lax.conv_general_dilated(
            jnp.transpose(x, (0, 2, 1)).astype(bf16), w_oik,
            window_strides=(1,), padding=[(PAD, PAD)],
            dimension_numbers=("NCH", "OIH", "NCH"),
            preferred_element_type=f32)
        y = y + params["conv_b"][layer].astype(f32)[None, :, None]
        a, g = y[:, :H, :], y[:, H:, :]
        glu = jnp.transpose(a * jax.nn.sigmoid(g), (0, 2, 1))
        x = (glu + x) * SCALE
    conved = jnp.einsum("blh,he->ble", x.astype(bf16), params["w_h2e"],
                        preferred_element_type=f32) + params["b_h2e"].astype(f32)
    combined = (conved + embed) * SCALE
    return conved, combined


if __name__ == "__main__":
    key = jax.random.PRNGKey(0)
    pkey, skey = jax.random.split(key)
    params = init_params(pkey)
    src = jax.random.randint(skey, (BATCH, SEQ_LEN), 0, NUM_EMBEDDINGS,
                             dtype=jnp.int32)

    conved, combined = jax.jit(encoder_forward)(params, src)
    jax.block_until_ready((conved, combined))

    ref_conved, ref_combined = encoder_reference(params, src)
    assert conved.shape == (BATCH, SEQ_LEN, EMBEDDING_DIM)
    assert combined.shape == (BATCH, SEQ_LEN, EMBEDDING_DIM)
    assert jnp.allclose(conved, ref_conved, rtol=1e-3, atol=1e-3)
    assert jnp.allclose(combined, ref_combined, rtol=1e-3, atol=1e-3)
    print("KERNEL_OK")
</pallas_src>

<mosaic_0001>
module attributes {stable_mosaic.version = 11 : i64} {
  func.func @encoder_kernel(%arg0: i32, %arg1: memref<256x1xi32, #tpu.memory_space<vmem>>, %arg2: memref<752x128xbf16, #tpu.memory_space<vmem>>, %arg3: memref<256x128xf32, #tpu.memory_space<vmem>>) attributes {dimension_semantics = [#tpu.dimension_semantics<parallel>], iteration_bounds = array<i64: 1>, scalar_prefetch = 0 : i64, scratch_operands = 0 : i64, tpu.core_type = #tpu.core_type<tc>, window_params = [{transform_indices = @transform_0, window_bounds = array<i64: 256, 1>}, {pipeline_mode = #tpu.pipeline_mode<synchronous>, transform_indices = @transform_1, window_bounds = array<i64: 752, 128>}, {transform_indices = @transform_2, window_bounds = array<i64: 256, 128>}]} {
    %c0 = arith.constant 0 : index
    %c0_0 = arith.constant 0 : index
    %0 = vector.load %arg1[%c0, %c0_0] : memref<256x1xi32, #tpu.memory_space<vmem>>, vector<256x1xi32>
    %1 = tpu.iota {dimensions = array<i32: 0>} : vector<256x256xi32>
    %2 = tpu.iota {dimensions = array<i32: 1>} : vector<256x256xi32>
    %c64_i32 = arith.constant 64 : i32
    %c0_i32 = arith.constant 0 : i32
    %3 = arith.cmpi eq, %c64_i32, %c0_i32 : i32
    %c1_i32 = arith.constant 1 : i32
    %4 = arith.select %3, %c1_i32, %c64_i32 : i32
    %5 = vector.broadcast %4 : i32 to vector<256x256xi32>
    %6 = arith.remsi %1, %5 : vector<256x256xi32>
    %c0_i32_1 = arith.constant 0 : i32
    %7 = vector.broadcast %c0_i32_1 : i32 to vector<256x256xi32>
    %8 = arith.cmpi ne, %6, %7 : vector<256x256xi32>
    %c0_i32_2 = arith.constant 0 : i32
    %9 = vector.broadcast %c0_i32_2 : i32 to vector<256x256xi32>
    %10 = arith.cmpi slt, %6, %9 : vector<256x256xi32>
    %c0_i32_3 = arith.constant 0 : i32
    %11 = arith.cmpi slt, %4, %c0_i32_3 : i32
    %12 = vector.broadcast %11 : i1 to vector<256x256xi1>
    %13 = vector.broadcast %12 : vector<256x256xi1> to vector<256x256xi1>
    %14 = arith.xori %10, %13 : vector<256x256xi1>
    %15 = arith.andi %14, %8 : vector<256x256xi1>
    %16 = vector.broadcast %4 : i32 to vector<256x256xi32>
    %17 = arith.addi %6, %16 : vector<256x256xi32>
    %18 = arith.select %15, %17, %6 : vector<256x256xi1>, vector<256x256xi32>
    %19 = vector.broadcast %0 : vector<256x1xi32> to vector<256x256xi32>
    %20 = arith.cmpi eq, %2, %19 : vector<256x256xi32>
    %c64_i32_4 = arith.constant 64 : i32
    %21 = vector.broadcast %c64_i32_4 : i32 to vector<256x256xi32>
    %22 = arith.addi %21, %18 : vector<256x256xi32>
    %23 = arith.cmpi eq, %2, %22 : vector<256x256xi32>
    %24 = arith.ori %20, %23 : vector<256x256xi1>
    %25 = arith.extui %24 : vector<256x256xi1> to vector<256x256xi32>
    %26 = arith.sitofp %25 : vector<256x256xi32> to vector<256x256xf32>
    %27 = arith.truncf %26 : vector<256x256xf32> to vector<256x256xbf16>
    %c0_5 = arith.constant 0 : index
    %c0_6 = arith.constant 0 : index
    %28 = vector.load %arg2[%c0_5, %c0_6] : memref<752x128xbf16, #tpu.memory_space<vmem>>, vector<256x32xbf16>
    %cst = arith.constant dense<0.000000e+00> : vector<256x32xf32>
    %29 = tpu.matmul %27, %28, %cst {dimension_numbers = #tpu.dot_dimension_numbers<[1], [0], [0], [1], [0, 0, 1, 1], [], []>} : vector<256x256xbf16>, vector<256x32xbf16>, vector<256x32xf32> -> vector<256x32xf32>
    %c256 = arith.constant 256 : index
    %c0_7 = arith.constant 0 : index
    %30 = vector.load %arg2[%c256, %c0_7] : memref<752x128xbf16, #tpu.memory_space<vmem>>, vector<32x32xbf16>
    %c288 = arith.constant 288 : index
    %c0_8 = arith.constant 0 : index
    %31 = vector.load %arg2[%c288, %c0_8] : memref<752x128xbf16, #tpu.memory_space<vmem>>, vector<1x32xbf16>
    %32 = arith.extf %31 : vector<1x32xbf16> to vector<1x32xf32>
    %33 = arith.truncf %29 : vector<256x32xf32> to vector<256x32xbf16>
    %cst_9 = arith.constant dense<0.000000e+00> : vector<256x32xf32>
    %34 = tpu.matmul %33, %30, %cst_9 {dimension_numbers = #tpu.dot_dimension_numbers<[1], [0], [0], [1], [0, 0, 1, 1], [], []>} : vector<256x32xbf16>, vector<32x32xbf16>, vector<256x32xf32> -> vector<256x32xf32>
    %35 = vector.broadcast %32 : vector<1x32xf32> to vector<256x32xf32>
    %36 = arith.addf %34, %35 : vector<256x32xf32>
    %37 = tpu.iota {dimensions = array<i32: 0>} : vector<256x32xi32>
    %c64_i32_10 = arith.constant 64 : i32
    %c0_i32_11 = arith.constant 0 : i32
    %38 = arith.cmpi eq, %c64_i32_10, %c0_i32_11 : i32
    %c1_i32_12 = arith.constant 1 : i32
    %39 = arith.select %38, %c1_i32_12, %c64_i32_10 : i32
    %40 = vector.broadcast %39 : i32 to vector<256x32xi32>
    %41 = arith.remsi %37, %40 : vector<256x32xi32>
    %c0_i32_13 = arith.constant 0 : i32
    %42 = vector.broadcast %c0_i32_13 : i32 to vector<256x32xi32>
    %43 = arith.cmpi ne, %41, %42 : vector<256x32xi32>
    %c0_i32_14 = arith.constant 0 : i32
    %44 = vector.broadcast %c0_i32_14 : i32 to vector<256x32xi32>
    %45 = arith.cmpi slt, %41, %44 : vector<256x32xi32>
    %c0_i32_15 = arith.constant 0 : i32
    %46 = arith.cmpi slt, %39, %c0_i32_15 : i32
    %47 = vector.broadcast %46 : i1 to vector<256x32xi1>
    %48 = vector.broadcast %47 : vector<256x32xi1> to vector<256x32xi1>
    %49 = arith.xori %45, %48 : vector<256x32xi1>
    %50 = arith.andi %49, %43 : vector<256x32xi1>
    %51 = vector.broadcast %39 : i32 to vector<256x32xi32>
    %52 = arith.addi %41, %51 : vector<256x32xi32>
    %53 = arith.select %50, %52, %41 : vector<256x32xi1>, vector<256x32xi32>
    %c-1_i32 = arith.constant -1 : i32
    %54 = vector.broadcast %c-1_i32 : i32 to vector<256x32xi32>
    %55 = arith.addi %53, %54 : vector<256x32xi32>
    %c0_i32_16 = arith.constant 0 : i32
    %56 = vector.broadcast %c0_i32_16 : i32 to vector<256x32xi32>
    %57 = arith.cmpi sge, %55, %56 : vector<256x32xi32>
    %c-1_i32_17 = arith.constant -1 : i32
    %58 = vector.broadcast %c-1_i32_17 : i32 to vector<256x32xi32>
    %59 = arith.addi %53, %58 : vector<256x32xi32>
    %c64_i32_18 = arith.constant 64 : i32
    %60 = vector.broadcast %c64_i32_18 : i32 to vector<256x32xi32>
    %61 = arith.cmpi slt, %59, %60 : vector<256x32xi32>
    %62 = arith.andi %57, %61 : vector<256x32xi1>
    %c1_i32_19 = arith.constant 1 : i32
    %63 = vector.broadcast %c1_i32_19 : i32 to vector<256x32xi32>
    %64 = arith.addi %53, %63 : vector<256x32xi32>
    %c0_i32_20 = arith.constant 0 : i32
    %65 = vector.broadcast %c0_i32_20 : i32 to vector<256x32xi32>
    %66 = arith.cmpi sge, %64, %65 : vector<256x32xi32>
    %c1_i32_21 = arith.constant 1 : i32
    %67 = vector.broadcast %c1_i32_21 : i32 to vector<256x32xi32>
    %68 = arith.addi %53, %67 : vector<256x32xi32>
    %c64_i32_22 = arith.constant 64 : i32
    %69 = vector.broadcast %c64_i32_22 : i32 to vector<256x32xi32>
    %70 = arith.cmpi slt, %68, %69 : vector<256x32xi32>
    %71 = arith.andi %66, %70 : vector<256x32xi1>
    %72 = arith.truncf %36 : vector<256x32xf32> to vector<256x32xbf16>
    %cst_23 = arith.constant 0.000000e+00 : f32
    %73 = vector.broadcast %cst_23 : f32 to vector<256x32xf32>
    %cst_24 = arith.constant 0.000000e+00 : f32
    %74 = vector.broadcast %cst_24 : f32 to vector<256x32xf32>
    %c1_i32_25 = arith.constant 1 : i32
    %75 = tpu.dynamic_rotate %36 by %c1_i32_25 dim 0 : vector<256x32xf32>, i32 -> vector<256x32xf32>
    %cst_26 = arith.constant 0.000000e+00 : f32
    %76 = vector.broadcast %cst_26 : f32 to vector<256x32xf32>
    %77 = arith.select %62, %75, %76 : vector<256x32xi1>, vector<256x32xf32>
    %78 = arith.truncf %77 : vector<256x32xf32> to vector<256x32xbf16>
    %c296 = arith.constant 296 : index
    %c0_27 = arith.constant 0 : index
    %79 = vector.load %arg2[%c296, %c0_27] : memref<752x128xbf16, #tpu.memory_space<vmem>>, vector<32x32xbf16>
    %cst_28 = arith.constant dense<0.000000e+00> : vector<256x32xf32>
    %80 = tpu.matmul %78, %79, %cst_28 {dimension_numbers = #tpu.dot_dimension_numbers<[1], [0], [0], [1], [0, 0, 1, 1], [], []>} : vector<256x32xbf16>, vector<32x32xbf16>, vector<256x32xf32> -> vector<256x32xf32>
    %81 = arith.addf %73, %80 : vector<256x32xf32>
    %c392 = arith.constant 392 : index
    %c0_29 = arith.constant 0 : index
    %82 = vector.load %arg2[%c392, %c0_29] : memref<752x128xbf16, #tpu.memory_space<vmem>>, vector<32x32xbf16>
    %cst_30 = arith.constant dense<0.000000e+00> : vector<256x32xf32>
    %83 = tpu.matmul %78, %82, %cst_30 {dimension_numbers = #tpu.dot_dimension_numbers<[1], [0], [0], [1], [0, 0, 1, 1], [], []>} : vector<256x32xbf16>, vector<32x32xbf16>, vector<256x32xf32> -> vector<256x32xf32>
    %84 = arith.addf %74, %83 : vector<256x32xf32>
    %c328 = arith.constant 328 : index
    %c0_31 = arith.constant 0 : index
    %85 = vector.load %arg2[%c328, %c0_31] : memref<752x128xbf16, #tpu.memory_space<vmem>>, vector<32x32xbf16>
    %cst_32 = arith.constant dense<0.000000e+00> : vector<256x32xf32>
    %86 = tpu.matmul %72, %85, %cst_32 {dimension_numbers = #tpu.dot_dimension_numbers<[1], [0], [0], [1], [0, 0, 1, 1], [], []>} : vector<256x32xbf16>, vector<32x32xbf16>, vector<256x32xf32> -> vector<256x32xf32>
    %87 = arith.addf %81, %86 : vector<256x32xf32>
    %c424 = arith.constant 424 : index
    %c0_33 = arith.constant 0 : index
    %88 = vector.load %arg2[%c424, %c0_33] : memref<752x128xbf16, #tpu.memory_space<vmem>>, vector<32x32xbf16>
    %cst_34 = arith.constant dense<0.000000e+00> : vector<256x32xf32>
    %89 = tpu.matmul %72, %88, %cst_34 {dimension_numbers = #tpu.dot_dimension_numbers<[1], [0], [0], [1], [0, 0, 1, 1], [], []>} : vector<256x32xbf16>, vector<32x32xbf16>, vector<256x32xf32> -> vector<256x32xf32>
    %90 = arith.addf %84, %89 : vector<256x32xf32>
    %c255_i32 = arith.constant 255 : i32
    %91 = tpu.dynamic_rotate %36 by %c255_i32 dim 0 : vector<256x32xf32>, i32 -> vector<256x32xf32>
    %cst_35 = arith.constant 0.000000e+00 : f32
    %92 = vector.broadcast %cst_35 : f32 to vector<256x32xf32>
    %93 = arith.select %71, %91, %92 : vector<256x32xi1>, vector<256x32xf32>
    %94 = arith.truncf %93 : vector<256x32xf32> to vector<256x32xbf16>
    %c360 = arith.constant 360 : index
    %c0_36 = arith.constant 0 : index
    %95 = vector.load %arg2[%c360, %c0_36] : memref<752x128xbf16, #tpu.memory_space<vmem>>, vector<32x32xbf16>
    %cst_37 = arith.constant dense<0.000000e+00> : vector<256x32xf32>
    %96 = tpu.matmul %94, %95, %cst_37 {dimension_numbers = #tpu.dot_dimension_numbers<[1], [0], [0], [1], [0, 0, 1, 1], [], []>} : vector<256x32xbf16>, vector<32x32xbf16>, vector<256x32xf32> -> vector<256x32xf32>
    %97 = arith.addf %87, %96 : vector<256x32xf32>
    %c456 = arith.constant 456 : index
    %c0_38 = arith.constant 0 : index
    %98 = vector.load %arg2[%c456, %c0_38] : memref<752x128xbf16, #tpu.memory_space<vmem>>, vector<32x32xbf16>
    %cst_39 = arith.constant dense<0.000000e+00> : vector<256x32xf32>
    %99 = tpu.matmul %94, %98, %cst_39 {dimension_numbers = #tpu.dot_dimension_numbers<[1], [0], [0], [1], [0, 0, 1, 1], [], []>} : vector<256x32xbf16>, vector<32x32xbf16>, vector<256x32xf32> -> vector<256x32xf32>
    %100 = arith.addf %90, %99 : vector<256x32xf32>
    %c680 = arith.constant 680 : index
    %c0_40 = arith.constant 0 : index
    %101 = vector.load %arg2[%c680, %c0_40] : memref<752x128xbf16, #tpu.memory_space<vmem>>, vector<1x32xbf16>
    %102 = arith.extf %101 : vector<1x32xbf16> to vector<1x32xf32>
    %103 = vector.broadcast %102 : vector<1x32xf32> to vector<256x32xf32>
    %104 = arith.addf %97, %103 : vector<256x32xf32>
    %c688 = arith.constant 688 : index
    %c0_41 = arith.constant 0 : index
    %105 = vector.load %arg2[%c688, %c0_41] : memref<752x128xbf16, #tpu.memory_space<vmem>>, vector<1x32xbf16>
    %106 = arith.extf %105 : vector<1x32xbf16> to vector<1x32xf32>
    %107 = vector.broadcast %106 : vector<1x32xf32> to vector<256x32xf32>
    %108 = arith.addf %100, %107 : vector<256x32xf32>
    %109 = arith.negf %108 : vector<256x32xf32>
    %110 = math.exp %109 : vector<256x32xf32>
    %cst_42 = arith.constant 1.000000e+00 : f32
    %111 = vector.broadcast %cst_42 : f32 to vector<256x32xf32>
    %112 = arith.addf %111, %110 : vector<256x32xf32>
    %113 = arith.divf %111, %112 : vector<256x32xf32>
    %114 = arith.mulf %104, %113 : vector<256x32xf32>
    %115 = arith.addf %114, %36 : vector<256x32xf32>
    %cst_43 = arith.constant 0.707106769 : f32
    %116 = vector.broadcast %cst_43 : f32 to vector<256x32xf32>
    %117 = arith.mulf %115, %116 : vector<256x32xf32>
    %118 = arith.truncf %117 : vector<256x32xf32> to vector<256x32xbf16>
    %cst_44 = arith.constant 0.000000e+00 : f32
    %119 = vector.broadcast %cst_44 : f32 to vector<256x32xf32>
    %cst_45 = arith.constant 0.000000e+00 : f32
    %120 = vector.broadcast %cst_45 : f32 to vector<256x32xf32>
    %c1_i32_46 = arith.constant 1 : i32
    %121 = tpu.dynamic_rotate %117 by %c1_i32_46 dim 0 : vector<256x32xf32>, i32 -> vector<256x32xf32>
    %cst_47 = arith.constant 0.000000e+00 : f32
    %122 = vector.broadcast %cst_47 : f32 to vector<256x32xf32>
    %123 = arith.select %62, %121, %122 : vector<256x32xi1>, vector<256x32xf32>
    %124 = arith.truncf %123 : vector<256x32xf32> to vector<256x32xbf16>
    %c488 = arith.constant 488 : index
    %c0_48 = arith.constant 0 : index
    %125 = vector.load %arg2[%c488, %c0_48] : memref<752x128xbf16, #tpu.memory_space<vmem>>, vector<32x32xbf16>
    %cst_49 = arith.constant dense<0.000000e+00> : vector<256x32xf32>
    %126 = tpu.matmul %124, %125, %cst_49 {dimension_numbers = #tpu.dot_dimension_numbers<[1], [0], [0], [1], [0, 0, 1, 1], [], []>} : vector<256x32xbf16>, vector<32x32xbf16>, vector<256x32xf32> -> vector<256x32xf32>
    %127 = arith.addf %119, %126 : vector<256x32xf32>
    %c584 = arith.constant 584 : index
    %c0_50 = arith.constant 0 : index
    %128 = vector.load %arg2[%c584, %c0_50] : memref<752x128xbf16, #tpu.memory_space<vmem>>, vector<32x32xbf16>
    %cst_51 = arith.constant dense<0.000000e+00> : vector<256x32xf32>
    %129 = tpu.matmul %124, %128, %cst_51 {dimension_numbers = #tpu.dot_dimension_numbers<[1], [0], [0], [1], [0, 0, 1, 1], [], []>} : vector<256x32xbf16>, vector<32x32xbf16>, vector<256x32xf32> -> vector<256x32xf32>
    %130 = arith.addf %120, %129 : vector<256x32xf32>
    %c520 = arith.constant 520 : index
    %c0_52 = arith.constant 0 : index
    %131 = vector.load %arg2[%c520, %c0_52] : memref<752x128xbf16, #tpu.memory_space<vmem>>, vector<32x32xbf16>
    %cst_53 = arith.constant dense<0.000000e+00> : vector<256x32xf32>
    %132 = tpu.matmul %118, %131, %cst_53 {dimension_numbers = #tpu.dot_dimension_numbers<[1], [0], [0], [1], [0, 0, 1, 1], [], []>} : vector<256x32xbf16>, vector<32x32xbf16>, vector<256x32xf32> -> vector<256x32xf32>
    %133 = arith.addf %127, %132 : vector<256x32xf32>
    %c616 = arith.constant 616 : index
    %c0_54 = arith.constant 0 : index
    %134 = vector.load %arg2[%c616, %c0_54] : memref<752x128xbf16, #tpu.memory_space<vmem>>, vector<32x32xbf16>
    %cst_55 = arith.constant dense<0.000000e+00> : vector<256x32xf32>
    %135 = tpu.matmul %118, %134, %cst_55 {dimension_numbers = #tpu.dot_dimension_numbers<[1], [0], [0], [1], [0, 0, 1, 1], [], []>} : vector<256x32xbf16>, vector<32x32xbf16>, vector<256x32xf32> -> vector<256x32xf32>
    %136 = arith.addf %130, %135 : vector<256x32xf32>
    %c255_i32_56 = arith.constant 255 : i32
    %137 = tpu.dynamic_rotate %117 by %c255_i32_56 dim 0 : vector<256x32xf32>, i32 -> vector<256x32xf32>
    %cst_57 = arith.constant 0.000000e+00 : f32
    %138 = vector.broadcast %cst_57 : f32 to vector<256x32xf32>
    %139 = arith.select %71, %137, %138 : vector<256x32xi1>, vector<256x32xf32>
    %140 = arith.truncf %139 : vector<256x32xf32> to vector<256x32xbf16>
    %c552 = arith.constant 552 : index
    %c0_58 = arith.constant 0 : index
    %141 = vector.load %arg2[%c552, %c0_58] : memref<752x128xbf16, #tpu.memory_space<vmem>>, vector<32x32xbf16>
    %cst_59 = arith.constant dense<0.000000e+00> : vector<256x32xf32>
    %142 = tpu.matmul %140, %141, %cst_59 {dimension_numbers = #tpu.dot_dimension_numbers<[1], [0], [0], [1], [0, 0, 1, 1], [], []>} : vector<256x32xbf16>, vector<32x32xbf16>, vector<256x32xf32> -> vector<256x32xf32>
    %143 = arith.addf %133, %142 : vector<256x32xf32>
    %c648 = arith.constant 648 : index
    %c0_60 = arith.constant 0 : index
    %144 = vector.load %arg2[%c648, %c0_60] : memref<752x128xbf16, #tpu.memory_space<vmem>>, vector<32x32xbf16>
    %cst_61 = arith.constant dense<0.000000e+00> : vector<256x32xf32>
    %145 = tpu.matmul %140, %144, %cst_61 {dimension_numbers = #tpu.dot_dimension_numbers<[1], [0], [0], [1], [0, 0, 1, 1], [], []>} : vector<256x32xbf16>, vector<32x32xbf16>, vector<256x32xf32> -> vector<256x32xf32>
    %146 = arith.addf %136, %145 : vector<256x32xf32>
    %c696 = arith.constant 696 : index
    %c0_62 = arith.constant 0 : index
    %147 = vector.load %arg2[%c696, %c0_62] : memref<752x128xbf16, #tpu.memory_space<vmem>>, vector<1x32xbf16>
    %148 = arith.extf %147 : vector<1x32xbf16> to vector<1x32xf32>
    %149 = vector.broadcast %148 : vector<1x32xf32> to vector<256x32xf32>
    %150 = arith.addf %143, %149 : vector<256x32xf32>
    %c704 = arith.constant 704 : index
    %c0_63 = arith.constant 0 : index
    %151 = vector.load %arg2[%c704, %c0_63] : memref<752x128xbf16, #tpu.memory_space<vmem>>, vector<1x32xbf16>
    %152 = arith.extf %151 : vector<1x32xbf16> to vector<1x32xf32>
    %153 = vector.broadcast %152 : vector<1x32xf32> to vector<256x32xf32>
    %154 = arith.addf %146, %153 : vector<256x32xf32>
    %155 = arith.negf %154 : vector<256x32xf32>
    %156 = math.exp %155 : vector<256x32xf32>
    %cst_64 = arith.constant 1.000000e+00 : f32
    %157 = vector.broadcast %cst_64 : f32 to vector<256x32xf32>
    %158 = arith.addf %157, %156 : vector<256x32xf32>
    %159 = arith.divf %157, %158 : vector<256x32xf32>
    %160 = arith.mulf %150, %159 : vector<256x32xf32>
    %161 = arith.addf %160, %117 : vector<256x32xf32>
    %cst_65 = arith.constant 0.707106769 : f32
    %162 = vector.broadcast %cst_65 : f32 to vector<256x32xf32>
    %163 = arith.mulf %161, %162 : vector<256x32xf32>
    %c712 = arith.constant 712 : index
    %c0_66 = arith.constant 0 : index
    %164 = vector.load %arg2[%c712, %c0_66] : memref<752x128xbf16, #tpu.memory_space<vmem>>, vector<32x32xbf16>
    %c744 = arith.constant 744 : index
    %c0_67 = arith.constant 0 : index
    %165 = vector.load %arg2[%c744, %c0_67] : memref<752x128xbf16, #tpu.memory_space<vmem>>, vector<1x32xbf16>
    %166 = arith.extf %165 : vector<1x32xbf16> to vector<1x32xf32>
    %167 = arith.truncf %163 : vector<256x32xf32> to vector<256x32xbf16>
    %cst_68 = arith.constant dense<0.000000e+00> : vector<256x32xf32>
    %168 = tpu.matmul %167, %164, %cst_68 {dimension_numbers = #tpu.dot_dimension_numbers<[1], [0], [0], [1], [0, 0, 1, 1], [], []>} : vector<256x32xbf16>, vector<32x32xbf16>, vector<256x32xf32> -> vector<256x32xf32>
    %169 = vector.broadcast %166 : vector<1x32xf32> to vector<256x32xf32>
    %170 = arith.addf %168, %169 : vector<256x32xf32>
    %171 = arith.addf %170, %29 : vector<256x32xf32>
    %cst_69 = arith.constant 0.707106769 : f32
    %172 = vector.broadcast %cst_69 : f32 to vector<256x32xf32>
    %173 = arith.mulf %171, %172 : vector<256x32xf32>
    %cst_70 = arith.constant 0.000000e+00 : f32
    %174 = vector.broadcast %cst_70 : f32 to vector<256x64xf32>
    %175 = tpu.concatenate %170, %173, %174 in 1 : vector<256x32xf32>, vector<256x32xf32>, vector<256x64xf32> -> vector<256x128xf32>
    %c0_71 = arith.constant 0 : index
    %c0_72 = arith.constant 0 : index
    %176 = vector.load %arg3[%c0_71, %c0_72] : memref<256x128xf32, #tpu.memory_space<vmem>>, vector<256x128xf32>
    tpu.vector_store %arg3[%c0_71, %c0_72], %175 {strides = array<i32>} : memref<256x128xf32, #tpu.memory_space<vmem>>, vector<256x128xf32>,
    return
  }
  func.func @transform_0(%arg0: i32) -> (i32, i32) {
    %c0_i32 = arith.constant 0 : i32
    %c0_i32_0 = arith.constant 0 : i32
    return %arg0, %c0_i32 : i32, i32
  }
  func.func @transform_1(%arg0: i32) -> (i32, i32) {
    %c0_i32 = arith.constant 0 : i32
    %c0_i32_0 = arith.constant 0 : i32
    %c0_i32_1 = arith.constant 0 : i32
    return %c0_i32, %c0_i32_0 : i32, i32
  }
  func.func @transform_2(%arg0: i32) -> (i32, i32) {
    %c0_i32 = arith.constant 0 : i32
    %c0_i32_0 = arith.constant 0 : i32
    return %arg0, %c0_i32 : i32, i32
  }
}

</mosaic_0001>

<llo_original>
// kernel: encoder_forward.1
$region0: #{encoder_forward.1}
  #allocation0 [shape = 'u32[]', space=smem, size = 0x4, offset = 0x4, fixed_abs, tag = 'smem constant byte address 0x4 - core index']
  #allocation1 [shape = 'u32[144,128]{1,0:T(1,128)}', space=vmem, size = 0x12000, scoped, tag = 'internal scratch']
  %s0 = inlined_call_operand.vmem [shape: s32[256,1], index: 0, kind: input, shape index: {}]
  %s1 = inlined_call_operand.hbm [shape: bf16[752,128], index: 1, kind: input, shape index: {}]
  %s2 = inlined_call_operand.vmem [shape: f32[256,128], index: 2, kind: output, shape index: {}]
  %s3 = sld [smem:[#allocation0]]
  $region22: #{encoder_forward.1} parent=0
    _
  %s5 = ssub.s32 1, %s3
  %s6 = scalar_select 0, %s5, %s3
  $region1: #{encoder_forward.1} parent=0
    #allocation2 [shape = 'u8[192512]{0}', space=vmem, size = 0x2f000, scoped, tag = 'input window, operand 1, single buffered']
    #allocation3 [shape = 's32[1]{0}', space=sflag, size = 0x4, scoped, tag = 'scoped memory for encoder_forward.1']
    %7 = vsyncpa [#allocation3], 0
    // Predicated region
    $region2: #{encoder_forward.1} parent=1 // pred_check
      _
    $region3: #{encoder_forward.1} parent=1 // pred_check_branch
      %9 = sbr.rel (0) target = $region5
    $region4: #{encoder_forward.1} parent=1 // pred_region
      _
    $region5: #{encoder_forward.1} parent=1 // pred_fallthru
      _
    // Predicated region
    $region6: #{encoder_forward.1} parent=1 // pred_check
      _
    $region7: #{encoder_forward.1} parent=1 // pred_check_branch
      %11 = sbr.rel (0) target = $region9
    $region8: #{encoder_forward.1} parent=1 // pred_region
      %s13 = ssub.s32 6016, 6016
      %14 = vsyncadd [#allocation3], %s13
      %s15 = sshll.u32 [#allocation2], 4
      %s16 = int_to_ptr.vmem [resolvable:$true] %s15
      %21 = dma.hbm_to_vmem [thread:$0]  %s1, 6016, %s16, [#allocation3], 64, 64, 4
    $region9: #{encoder_forward.1} parent=1 // pred_fallthru
      _
    // Predicated region
    $region10: #{encoder_forward.1} parent=1 // pred_check
      _
    $region11: #{encoder_forward.1} parent=1 // pred_check_branch
      %23 = sbr.rel (0) target = $region13
    $region12: #{encoder_forward.1} parent=1 // pred_region
      %24 = dma.done [#allocation3], 6016
    $region13: #{encoder_forward.1} parent=1 // pred_fallthru
      _
    %v26 = vld [vmem:[%s0] sm:$0xff]
    %v27 = vld [vmem:[%s0 + $0x8] sm:$0xff]
    %v28 = vld [vmem:[%s0 + $0x10] sm:$0xff]
    %v29 = vld [vmem:[%s0 + $0x18] sm:$0xff]
    %v30 = vld [vmem:[%s0 + $0x20] sm:$0xff]
    %v31 = vld [vmem:[%s0 + $0x28] sm:$0xff]
    %v32 = vld [vmem:[%s0 + $0x30] sm:$0xff]
    %v33 = vld [vmem:[%s0 + $0x38] sm:$0xff]
    %v34 = vld [vmem:[%s0 + $0x40] sm:$0xff]
    %v35 = vld [vmem:[%s0 + $0x48] sm:$0xff]
    %v36 = vld [vmem:[%s0 + $0x50] sm:$0xff]
    %v37 = vld [vmem:[%s0 + $0x58] sm:$0xff]
    %v38 = vld [vmem:[%s0 + $0x60] sm:$0xff]
    %v39 = vld [vmem:[%s0 + $0x68] sm:$0xff]
    %v40 = vld [vmem:[%s0 + $0x70] sm:$0xff]
    %v41 = vld [vmem:[%s0 + $0x78] sm:$0xff]
    %v42 = vld [vmem:[%s0 + $0x80] sm:$0xff]
    %v43 = vld [vmem:[%s0 + $0x88] sm:$0xff]
    %v44 = vld [vmem:[%s0 + $0x90] sm:$0xff]
    %v45 = vld [vmem:[%s0 + $0x98] sm:$0xff]
    %v46 = vld [vmem:[%s0 + $0xa0] sm:$0xff]
    %v47 = vld [vmem:[%s0 + $0xa8] sm:$0xff]
    %v48 = vld [vmem:[%s0 + $0xb0] sm:$0xff]
    %v49 = vld [vmem:[%s0 + $0xb8] sm:$0xff]
    %v50 = vld [vmem:[%s0 + $0xc0] sm:$0xff]
    %v51 = vld [vmem:[%s0 + $0xc8] sm:$0xff]
    %v52 = vld [vmem:[%s0 + $0xd0] sm:$0xff]
    %v53 = vld [vmem:[%s0 + $0xd8] sm:$0xff]
    %v54 = vld [vmem:[%s0 + $0xe0] sm:$0xff]
    %v55 = vld [vmem:[%s0 + $0xe8] sm:$0xff]
    %v56 = vld [vmem:[%s0 + $0xf0] sm:$0xff]
    %v57 = vld [vmem:[%s0 + $0xf8] sm:$0xff]
    %v58 = vlaneseq
    %v59 = vshrl.u32 %v58, 7
    %v60 = vadd.s32 %v59, 8
    %v61 = vadd.s32 %v59, 16
    %v62 = vadd.s32 %v59, 24
    %v63 = vadd.s32 %v59, 32
    %v64 = vadd.s32 %v59, 40
    %v65 = vadd.s32 %v59, 48
    %v66 = vadd.s32 %v59, 56
    %v67 = vadd.s32 %v59, 64
    %v68 = vadd.s32 %v59, 72
    %v69 = vadd.s32 %v59, 80
    %v70 = vadd.s32 %v59, 88
    %v71 = vadd.s32 %v59, 96
    %v72 = vadd.s32 %v59, 104
    %v73 = vadd.s32 %v59, 112
    %v74 = vadd.s32 %v59, 120
    %v75 = vadd.s32 %v59, 128
    %v76 = vadd.s32 %v59, 136
    %v77 = vadd.s32 %v59, 144
    %v78 = vadd.s32 %v59, 152
    %v79 = vadd.s32 %v59, 160
    %v80 = vadd.s32 %v59, 168
    %v81 = vadd.s32 %v59, 176
    %v82 = vadd.s32 %v59, 184
    %v83 = vadd.s32 %v59, 192
    %v84 = vadd.s32 %v59, 200
    %v85 = vadd.s32 %v59, 208
    %v86 = vadd.s32 %v59, 216
    %v87 = vadd.s32 %v59, 224
    %v88 = vadd.s32 %v59, 232
    %v89 = vadd.s32 %v59, 240
    %v90 = vadd.s32 %v59, 248
    %v91 = vlaneseq
    %v92 = vand.u32 %v91, 127
    %v93 = vadd.s32 %v92, 128
    %vm94 = vcmp.lt.s32.totalorder %v59, 0
    %v95 = vsub.s32 0, %v59
    %v96 = vsel %vm94, %v95, %v59
    %v97 = vshrl.u32 %v96, 6
    %v98 = vand.u32 %v96, 63
    %v99 = vsub.s32 0, %v98
    %v100 = vsel %vm94, %v99, %v98
    %vm101 = vcmp.lt.s32.totalorder %v60, 0
    %v102 = vsub.s32 0, %v60
    %v103 = vsel %vm101, %v102, %v60
    %v104 = vshrl.u32 %v103, 6
    %v105 = vand.u32 %v103, 63
    %v106 = vsub.s32 0, %v105
    %v107 = vsel %vm101, %v106, %v105
    %vm108 = vcmp.lt.s32.totalorder %v61, 0
    %v109 = vsub.s32 0, %v61
    %v110 = vsel %vm108, %v109, %v61
    %v111 = vshrl.u32 %v110, 6
    %v112 = vand.u32 %v110, 63
    %v113 = vsub.s32 0, %v112
    %v114 = vsel %vm108, %v113, %v112
    %vm115 = vcmp.lt.s32.totalorder %v62, 0
    %v116 = vsub.s32 0, %v62
    %v117 = vsel %vm115, %v116, %v62
    %v118 = vshrl.u32 %v117, 6
    %v119 = vand.u32 %v117, 63
    %v120 = vsub.s32 0, %v119
    %v121 = vsel %vm115, %v120, %v119
    %vm122 = vcmp.lt.s32.totalorder %v63, 0
    %v123 = vsub.s32 0, %v63
    %v124 = vsel %vm122, %v123, %v63
    %v125 = vshrl.u32 %v124, 6
    %v126 = vand.u32 %v124, 63
    %v127 = vsub.s32 0, %v126
    %v128 = vsel %vm122, %v127, %v126
    %vm129 = vcmp.lt.s32.totalorder %v64, 0
    %v130 = vsub.s32 0, %v64
    %v131 = vsel %vm129, %v130, %v64
    %v132 = vshrl.u32 %v131, 6
    %v133 = vand.u32 %v131, 63
    %v134 = vsub.s32 0, %v133
    %v135 = vsel %vm129, %v134, %v133
    %vm136 = vcmp.lt.s32.totalorder %v65, 0
    %v137 = vsub.s32 0, %v65
    %v138 = vsel %vm136, %v137, %v65
    %v139 = vshrl.u32 %v138, 6
    %v140 = vand.u32 %v138, 63
    %v141 = vsub.s32 0, %v140
    %v142 = vsel %vm136, %v141, %v140
    %vm143 = vcmp.lt.s32.totalorder %v66, 0
    %v144 = vsub.s32 0, %v66
    %v145 = vsel %vm143, %v144, %v66
    %v146 = vshrl.u32 %v145, 6
    %v147 = vand.u32 %v145, 63
    %v148 = vsub.s32 0, %v147
    %v149 = vsel %vm143, %v148, %v147
    %vm150 = vcmp.lt.s32.totalorder %v67, 0
    %v151 = vsub.s32 0, %v67
    %v152 = vsel %vm150, %v151, %v67
    %v153 = vshrl.u32 %v152, 6
    %v154 = vand.u32 %v152, 63
    %v155 = vsub.s32 0, %v154
    %v156 = vsel %vm150, %v155, %v154
    %vm157 = vcmp.lt.s32.totalorder %v68, 0
    %v158 = vsub.s32 0, %v68
    %v159 = vsel %vm157, %v158, %v68
    %v160 = vshrl.u32 %v159, 6
    %v161 = vand.u32 %v159, 63
    %v162 = vsub.s32 0, %v161
    %v163 = vsel %vm157, %v162, %v161
    %vm164 = vcmp.lt.s32.totalorder %v69, 0
    %v165 = vsub.s32 0, %v69
    %v166 = vsel %vm164, %v165, %v69
    %v167 = vshrl.u32 %v166, 6
    %v168 = vand.u32 %v166, 63
    %v169 = vsub.s32 0, %v168
    %v170 = vsel %vm164, %v169, %v168
    %vm171 = vcmp.lt.s32.totalorder %v70, 0
    %v172 = vsub.s32 0, %v70
    %v173 = vsel %vm171, %v172, %v70
    %v174 = vshrl.u32 %v173, 6
    %v175 = vand.u32 %v173, 63
    %v176 = vsub.s32 0, %v175
    %v177 = vsel %vm171, %v176, %v175
    %vm178 = vcmp.lt.s32.totalorder %v71, 0
    %v179 = vsub.s32 0, %v71
    %v180 = vsel %vm178, %v179, %v71
    %v181 = vshrl.u32 %v180, 6
    %v182 = vand.u32 %v180, 63
    %v183 = vsub.s32 0, %v182
    %v184 = vsel %vm178, %v183, %v182
    %vm185 = vcmp.lt.s32.totalorder %v72, 0
    %v186 = vsub.s32 0, %v72
    %v187 = vsel %vm185, %v186, %v72
    %v188 = vshrl.u32 %v187, 6
    %v189 = vand.u32 %v187, 63
    %v190 = vsub.s32 0, %v189
    %v191 = vsel %vm185, %v190, %v189
    %vm192 = vcmp.lt.s32.totalorder %v73, 0
    %v193 = vsub.s32 0, %v73
    %v194 = vsel %vm192, %v193, %v73
    %v195 = vshrl.u32 %v194, 6
    %v196 = vand.u32 %v194, 63
    %v197 = vsub.s32 0, %v196
    %v198 = vsel %vm192, %v197, %v196
    %vm199 = vcmp.lt.s32.totalorder %v74, 0
    %v200 = vsub.s32 0, %v74
    %v201 = vsel %vm199, %v200, %v74
    %v202 = vshrl.u32 %v201, 6
    %v203 = vand.u32 %v201, 63
    %v204 = vsub.s32 0, %v203
    %v205 = vsel %vm199, %v204, %v203
    %vm206 = vcmp.lt.s32.totalorder %v75, 0
    %v207 = vsub.s32 0, %v75
    %v208 = vsel %vm206, %v207, %v75
    %v209 = vshrl.u32 %v208, 6
    %v210 = vand.u32 %v208, 63
    %v211 = vsub.s32 0, %v210
    %v212 = vsel %vm206, %v211, %v210
    %vm213 = vcmp.lt.s32.totalorder %v76, 0
    %v214 = vsub.s32 0, %v76
    %v215 = vsel %vm213, %v214, %v76
    %v216 = vshrl.u32 %v215, 6
    %v217 = vand.u32 %v215, 63
    %v218 = vsub.s32 0, %v217
    %v219 = vsel %vm213, %v218, %v217
    %vm220 = vcmp.lt.s32.totalorder %v77, 0
    %v221 = vsub.s32 0, %v77
    %v222 = vsel %vm220, %v221, %v77
    %v223 = vshrl.u32 %v222, 6
    %v224 = vand.u32 %v222, 63
    %v225 = vsub.s32 0, %v224
    %v226 = vsel %vm220, %v225, %v224
    %vm227 = vcmp.lt.s32.totalorder %v78, 0
    %v228 = vsub.s32 0, %v78
    %v229 = vsel %vm227, %v228, %v78
    %v230 = vshrl.u32 %v229, 6
    %v231 = vand.u32 %v229, 63
    %v232 = vsub.s32 0, %v231
    %v233 = vsel %vm227, %v232, %v231
    %vm234 = vcmp.lt.s32.totalorder %v79, 0
    %v235 = vsub.s32 0, %v79
    %v236 = vsel %vm234, %v235, %v79
    %v237 = vshrl.u32 %v236, 6
    %v238 = vand.u32 %v236, 63
    %v239 = vsub.s32 0, %v238
    %v240 = vsel %vm234, %v239, %v238
    %vm241 = vcmp.lt.s32.totalorder %v80, 0
    %v242 = vsub.s32 0, %v80
    %v243 = vsel %vm241, %v242, %v80
    %v244 = vshrl.u32 %v243, 6
    %v245 = vand.u32 %v243, 63
    %v246 = vsub.s32 0, %v245
    %v247 = vsel %vm241, %v246, %v245
    %vm248 = vcmp.lt.s32.totalorder %v81, 0
    %v249 = vsub.s32 0, %v81
    %v250 = vsel %vm248, %v249, %v81
    %v251 = vshrl.u32 %v250, 6
    %v252 = vand.u32 %v250, 63
    %v253 = vsub.s32 0, %v252
    %v254 = vsel %vm248, %v253, %v252
    %vm255 = vcmp.lt.s32.totalorder %v82, 0
    %v256 = vsub.s32 0, %v82
    %v257 = vsel %vm255, %v256, %v82
    %v258 = vshrl.u32 %v257, 6
    %v259 = vand.u32 %v257, 63
    %v260 = vsub.s32 0, %v259
    %v261 = vsel %vm255, %v260, %v259
    %vm262 = vcmp.lt.s32.totalorder %v83, 0
    %v263 = vsub.s32 0, %v83
    %v264 = vsel %vm262, %v263, %v83
    %v265 = vshrl.u32 %v264, 6
    %v266 = vand.u32 %v264, 63
    %v267 = vsub.s32 0, %v266
    %v268 = vsel %vm262, %v267, %v266
    %vm269 = vcmp.lt.s32.totalorder %v84, 0
    %v270 = vsub.s32 0, %v84
    %v271 = vsel %vm269, %v270, %v84
    %v272 = vshrl.u32 %v271, 6
    %v273 = vand.u32 %v271, 63
    %v274 = vsub.s32 0, %v273
    %v275 = vsel %vm269, %v274, %v273
    %vm276 = vcmp.lt.s32.totalorder %v85, 0
    %v277 = vsub.s32 0, %v85
    %v278 = vsel %vm276, %v277, %v85
    %v279 = vshrl.u32 %v278, 6
    %v280 = vand.u32 %v278, 63
    %v281 = vsub.s32 0, %v280
    %v282 = vsel %vm276, %v281, %v280
    %vm283 = vcmp.lt.s32.totalorder %v86, 0
    %v284 = vsub.s32 0, %v86
    %v285 = vsel %vm283, %v284, %v86
    %v286 = vshrl.u32 %v285, 6
    %v287 = vand.u32 %v285, 63
    %v288 = vsub.s32 0, %v287
    %v289 = vsel %vm283, %v288, %v287
    %vm290 = vcmp.lt.s32.totalorder %v87, 0
    %v291 = vsub.s32 0, %v87
    %v292 = vsel %vm290, %v291, %v87
    %v293 = vshrl.u32 %v292, 6
    %v294 = vand.u32 %v292, 63
    %v295 = vsub.s32 0, %v294
    %v296 = vsel %vm290, %v295, %v294
    %vm297 = vcmp.lt.s32.totalorder %v88, 0
    %v298 = vsub.s32 0, %v88
    %v299 = vsel %vm297, %v298, %v88
    %v300 = vshrl.u32 %v299, 6
    %v301 = vand.u32 %v299, 63
    %v302 = vsub.s32 0, %v301
    %v303 = vsel %vm297, %v302, %v301
    %vm304 = vcmp.lt.s32.totalorder %v89, 0
    %v305 = vsub.s32 0, %v89
    %v306 = vsel %vm304, %v305, %v89
    %v307 = vshrl.u32 %v306, 6
    %v308 = vand.u32 %v306, 63
    %v309 = vsub.s32 0, %v308
    %v310 = vsel %vm304, %v309, %v308
    %vm311 = vcmp.lt.s32.totalorder %v90, 0
    %v312 = vsub.s32 0, %v90
    %v313 = vsel %vm311, %v312, %v90
    %v314 = vshrl.u32 %v313, 6
    %v315 = vand.u32 %v313, 63
    %v316 = vsub.s32 0, %v315
    %v317 = vsel %vm311, %v316, %v315
    %vm318 = vcmp.ne.s32.totalorder %v100, 0
    %vm319 = vcmp.ne.s32.totalorder %v107, 0
    %vm320 = vcmp.ne.s32.totalorder %v114, 0
    %vm321 = vcmp.ne.s32.totalorder %v121, 0
    %vm322 = vcmp.ne.s32.totalorder %v128, 0
    %vm323 = vcmp.ne.s32.totalorder %v135, 0
    %vm324 = vcmp.ne.s32.totalorder %v142, 0
    %vm325 = vcmp.ne.s32.totalorder %v149, 0
    %vm326 = vcmp.ne.s32.totalorder %v156, 0
    %vm327 = vcmp.ne.s32.totalorder %v163, 0
    %vm328 = vcmp.ne.s32.totalorder %v170, 0
    %vm329 = vcmp.ne.s32.totalorder %v177, 0
    %vm330 = vcmp.ne.s32.totalorder %v184, 0
    %vm331 = vcmp.ne.s32.totalorder %v191, 0
    %vm332 = vcmp.ne.s32.totalorder %v198, 0
    %vm333 = vcmp.ne.s32.totalorder %v205, 0
    %vm334 = vcmp.ne.s32.totalorder %v212, 0
    %vm335 = vcmp.ne.s32.totalorder %v219, 0
    %vm336 = vcmp.ne.s32.totalorder %v226, 0
    %vm337 = vcmp.ne.s32.totalorder %v233, 0
    %vm338 = vcmp.ne.s32.totalorder %v240, 0
    %vm339 = vcmp.ne.s32.totalorder %v247, 0
    %vm340 = vcmp.ne.s32.totalorder %v254, 0
    %vm341 = vcmp.ne.s32.totalorder %v261, 0
    %vm342 = vcmp.ne.s32.totalorder %v268, 0
    %vm343 = vcmp.ne.s32.totalorder %v275, 0
    %vm344 = vcmp.ne.s32.totalorder %v282, 0
    %vm345 = vcmp.ne.s32.totalorder %v289, 0
    %vm346 = vcmp.ne.s32.totalorder %v296, 0
    %vm347 = vcmp.ne.s32.totalorder %v303, 0
    %vm348 = vcmp.ne.s32.totalorder %v310, 0
    %vm349 = vcmp.ne.s32.totalorder %v317, 0
    %vm350 = vcmp.lt.s32.totalorder %v100, 0
    %vm351 = vcmp.lt.s32.totalorder %v107, 0
    %vm352 = vcmp.lt.s32.totalorder %v114, 0
    %vm353 = vcmp.lt.s32.totalorder %v121, 0
    %vm354 = vcmp.lt.s32.totalorder %v128, 0
    %vm355 = vcmp.lt.s32.totalorder %v135, 0
    %vm356 = vcmp.lt.s32.totalorder %v142, 0
    %vm357 = vcmp.lt.s32.totalorder %v149, 0
    %vm358 = vcmp.lt.s32.totalorder %v156, 0
    %vm359 = vcmp.lt.s32.totalorder %v163, 0
    %vm360 = vcmp.lt.s32.totalorder %v170, 0
    %vm361 = vcmp.lt.s32.totalorder %v177, 0
    %vm362 = vcmp.lt.s32.totalorder %v184, 0
    %vm363 = vcmp.lt.s32.totalorder %v191, 0
    %vm364 = vcmp.lt.s32.totalorder %v198, 0
    %vm365 = vcmp.lt.s32.totalorder %v205, 0
    %vm366 = vcmp.lt.s32.totalorder %v212, 0
    %vm367 = vcmp.lt.s32.totalorder %v219, 0
    %vm368 = vcmp.lt.s32.totalorder %v226, 0
    %vm369 = vcmp.lt.s32.totalorder %v233, 0
    %vm370 = vcmp.lt.s32.totalorder %v240, 0
    %vm371 = vcmp.lt.s32.totalorder %v247, 0
    %vm372 = vcmp.lt.s32.totalorder %v254, 0
    %vm373 = vcmp.lt.s32.totalorder %v261, 0
    %vm374 = vcmp.lt.s32.totalorder %v268, 0
    %vm375 = vcmp.lt.s32.totalorder %v275, 0
    %vm376 = vcmp.lt.s32.totalorder %v282, 0
    %vm377 = vcmp.lt.s32.totalorder %v289, 0
    %vm378 = vcmp.lt.s32.totalorder %v296, 0
    %vm379 = vcmp.lt.s32.totalorder %v303, 0
    %vm380 = vcmp.lt.s32.totalorder %v310, 0
    %vm381 = vcmp.lt.s32.totalorder %v317, 0
    %vm382 = vmand %vm350, %vm318
    %vm383 = vmand %vm351, %vm319
    %vm384 = vmand %vm352, %vm320
    %vm385 = vmand %vm353, %vm321
    %vm386 = vmand %vm354, %vm322
    %vm387 = vmand %vm355, %vm323
    %vm388 = vmand %vm356, %vm324
    %vm389 = vmand %vm357, %vm325
    %vm390 = vmand %vm358, %vm326
    %vm391 = vmand %vm359, %vm327
    %vm392 = vmand %vm360, %vm328
    %vm393 = vmand %vm361, %vm329
    %vm394 = vmand %vm362, %vm330
    %vm395 = vmand %vm363, %vm331
    %vm396 = vmand %vm364, %vm332
    %vm397 = vmand %vm365, %vm333
    %vm398 = vmand %vm366, %vm334
    %vm399 = vmand %vm367, %vm335
    %vm400 = vmand %vm368, %vm336
    %vm401 = vmand %vm369, %vm337
    %vm402 = vmand %vm370, %vm338
    %vm403 = vmand %vm371, %vm339
    %vm404 = vmand %vm372, %vm340
    %vm405 = vmand %vm373, %vm341
    %vm406 = vmand %vm374, %vm342
    %vm407 = vmand %vm375, %vm343
    %vm408 = vmand %vm376, %vm344
    %vm409 = vmand %vm377, %vm345
    %vm410 = vmand %vm378, %vm346
    %vm411 = vmand %vm379, %vm347
    %vm412 = vmand %vm380, %vm348
    %vm413 = vmand %vm381, %vm349
    %v414 = vadd.s32 %v100, 64
    %v415 = vadd.s32 %v107, 64
    %v416 = vadd.s32 %v114, 64
    %v417 = vadd.s32 %v121, 64
    %v418 = vadd.s32 %v128, 64
    %v419 = vadd.s32 %v135, 64
    %v420 = vadd.s32 %v142, 64
    %v421 = vadd.s32 %v149, 64
    %v422 = vadd.s32 %v156, 64
    %v423 = vadd.s32 %v163, 64
    %v424 = vadd.s32 %v170, 64
    %v425 = vadd.s32 %v177, 64
    %v426 = vadd.s32 %v184, 64
    %v427 = vadd.s32 %v191, 64
    %v428 = vadd.s32 %v198, 64
    %v429 = vadd.s32 %v205, 64
    %v430 = vadd.s32 %v212, 64
    %v431 = vadd.s32 %v219, 64
    %v432 = vadd.s32 %v226, 64
    %v433 = vadd.s32 %v233, 64
    %v434 = vadd.s32 %v240, 64
    %v435 = vadd.s32 %v247, 64
    %v436 = vadd.s32 %v254, 64
    %v437 = vadd.s32 %v261, 64
    %v438 = vadd.s32 %v268, 64
    %v439 = vadd.s32 %v275, 64
    %v440 = vadd.s32 %v282, 64
    %v441 = vadd.s32 %v289, 64
    %v442 = vadd.s32 %v296, 64
    %v443 = vadd.s32 %v303, 64
    %v444 = vadd.s32 %v310, 64
    %v445 = vadd.s32 %v317, 64
    %v446 = vsel %vm382, %v414, %v100
    %v447 = vsel %vm383, %v415, %v107
    %v448 = vsel %vm384, %v416, %v114
    %v449 = vsel %vm385, %v417, %v121
    %v450 = vsel %vm386, %v418, %v128
    %v451 = vsel %vm387, %v419, %v135
    %v452 = vsel %vm388, %v420, %v142
    %v453 = vsel %vm389, %v421, %v149
    %v454 = vsel %vm390, %v422, %v156
    %v455 = vsel %vm391, %v423, %v163
    %v456 = vsel %vm392, %v424, %v170
    %v457 = vsel %vm393, %v425, %v177
    %v458 = vsel %vm394, %v426, %v184
    %v459 = vsel %vm395, %v427, %v191
    %v460 = vsel %vm396, %v428, %v198
    %v461 = vsel %vm397, %v429, %v205
    %v462 = vsel %vm398, %v430, %v212
    %v463 = vsel %vm399, %v431, %v219
    %v464 = vsel %vm400, %v432, %v226
    %v465 = vsel %vm401, %v433, %v233
    %v466 = vsel %vm402, %v434, %v240
    %v467 = vsel %vm403, %v435, %v247
    %v468 = vsel %vm404, %v436, %v254
    %v469 = vsel %vm405, %v437, %v261
    %v470 = vsel %vm406, %v438, %v268
    %v471 = vsel %vm407, %v439, %v275
    %v472 = vsel %vm408, %v440, %v282
    %v473 = vsel %vm409, %v441, %v289
    %v474 = vsel %vm410, %v442, %v296
    %v475 = vsel %vm411, %v443, %v303
    %v476 = vsel %vm412, %v444, %v310
    %v477 = vsel %vm413, %v445, %v317
    %478 = vset.pattern.permute.xlu0 0
    %479 = vperm.xlu0 %478, %v26
    %v480 = vpop.permute.xlu0 %479
    %481 = vset.pattern.permute.xlu0 0
    %482 = vperm.xlu0 %481, %v27
    %v483 = vpop.permute.xlu0 %482
    %484 = vset.pattern.permute.xlu0 0
    %485 = vperm.xlu0 %484, %v28
    %v486 = vpop.permute.xlu0 %485
    %487 = vset.pattern.permute.xlu0 0
    %488 = vperm.xlu0 %487, %v29
    %v489 = vpop.permute.xlu0 %488
    %490 = vset.pattern.permute.xlu0 0
    %491 = vperm.xlu0 %490, %v30
    %v492 = vpop.permute.xlu0 %491
    %493 = vset.pattern.permute.xlu0 0
    %494 = vperm.xlu0 %493, %v31
    %v495 = vpop.permute.xlu0 %494
    %496 = vset.pattern.permute.xlu0 0
    %497 = vperm.xlu0 %496, %v32
    %v498 = vpop.permute.xlu0 %497
    %499 = vset.pattern.permute.xlu0 0
    %500 = vperm.xlu0 %499, %v33
    %v501 = vpop.permute.xlu0 %500
    %502 = vset.pattern.permute.xlu0 0
    %503 = vperm.xlu0 %502, %v34
    %v504 = vpop.permute.xlu0 %503
    %505 = vset.pattern.permute.xlu0 0
    %506 = vperm.xlu0 %505, %v35
    %v507 = vpop.permute.xlu0 %506
    %508 = vset.pattern.permute.xlu0 0
    %509 = vperm.xlu0 %508, %v36
    %v510 = vpop.permute.xlu0 %509
    %511 = vset.pattern.permute.xlu0 0
    %512 = vperm.xlu0 %511, %v37
    %v513 = vpop.permute.xlu0 %512
    %514 = vset.pattern.permute.xlu0 0
    %515 = vperm.xlu0 %514, %v38
    %v516 = vpop.permute.xlu0 %515
    %517 = vset.pattern.permute.xlu0 0
    %518 = vperm.xlu0 %517, %v39
    %v519 = vpop.permute.xlu0 %518
    %520 = vset.pattern.permute.xlu0 0
    %521 = vperm.xlu0 %520, %v40
    %v522 = vpop.permute.xlu0 %521
    %523 = vset.pattern.permute.xlu0 0
    %524 = vperm.xlu0 %523, %v41
    %v525 = vpop.permute.xlu0 %524
    %526 = vset.pattern.permute.xlu0 0
    %527 = vperm.xlu0 %526, %v42
    %v528 = vpop.permute.xlu0 %527
    %529 = vset.pattern.permute.xlu0 0
    %530 = vperm.xlu0 %529, %v43
    %v531 = vpop.permute.xlu0 %530
    %532 = vset.pattern.permute.xlu0 0
    %533 = vperm.xlu0 %532, %v44
    %v534 = vpop.permute.xlu0 %533
    %535 = vset.pattern.permute.xlu0 0
    %536 = vperm.xlu0 %535, %v45
    %v537 = vpop.permute.xlu0 %536
    %538 = vset.pattern.permute.xlu0 0
    %539 = vperm.xlu0 %538, %v46
    %v540 = vpop.permute.xlu0 %539
    %541 = vset.pattern.permute.xlu0 0
    %542 = vperm.xlu0 %541, %v47
    %v543 = vpop.permute.xlu0 %542
    %544 = vset.pattern.permute.xlu0 0
    %545 = vperm.xlu0 %544, %v48
    %v546 = vpop.permute.xlu0 %545
    %547 = vset.pattern.permute.xlu0 0
    %548 = vperm.xlu0 %547, %v49
    %v549 = vpop.permute.xlu0 %548
    %550 = vset.pattern.permute.xlu0 0
    %551 = vperm.xlu0 %550, %v50
    %v552 = vpop.permute.xlu0 %551
    %553 = vset.pattern.permute.xlu0 0
    %554 = vperm.xlu0 %553, %v51
    %v555 = vpop.permute.xlu0 %554
    %556 = vset.pattern.permute.xlu0 0
    %557 = vperm.xlu0 %556, %v52
    %v558 = vpop.permute.xlu0 %557
    %559 = vset.pattern.permute.xlu0 0
    %560 = vperm.xlu0 %559, %v53
    %v561 = vpop.permute.xlu0 %560
    %562 = vset.pattern.permute.xlu0 0
    %563 = vperm.xlu0 %562, %v54
    %v564 = vpop.permute.xlu0 %563
    %565 = vset.pattern.permute.xlu0 0
    %566 = vperm.xlu0 %565, %v55
    %v567 = vpop.permute.xlu0 %566
    %568 = vset.pattern.permute.xlu0 0
    %569 = vperm.xlu0 %568, %v56
    %v570 = vpop.permute.xlu0 %569
    %571 = vset.pattern.permute.xlu0 0
    %572 = vperm.xlu0 %571, %v57
    %v573 = vpop.permute.xlu0 %572
    %vm574 = vcmp.eq.s32.totalorder %v92, %v480
    %vm575 = vcmp.eq.s32.totalorder %v93, %v480
    %vm576 = vcmp.eq.s32.totalorder %v92, %v483
    %vm577 = vcmp.eq.s32.totalorder %v93, %v483
    %vm578 = vcmp.eq.s32.totalorder %v92, %v486
    %vm579 = vcmp.eq.s32.totalorder %v93, %v486
    %vm580 = vcmp.eq.s32.totalorder %v92, %v489
    %vm581 = vcmp.eq.s32.totalorder %v93, %v489
    %vm582 = vcmp.eq.s32.totalorder %v92, %v492
    %vm583 = vcmp.eq.s32.totalorder %v93, %v492
    %vm584 = vcmp.eq.s32.totalorder %v92, %v495
    %vm585 = vcmp.eq.s32.totalorder %v93, %v495
    %vm586 = vcmp.eq.s32.totalorder %v92, %v498
    %vm587 = vcmp.eq.s32.totalorder %v93, %v498
    %vm588 = vcmp.eq.s32.totalorder %v92, %v501
    %vm589 = vcmp.eq.s32.totalorder %v93, %v501
    %vm590 = vcmp.eq.s32.totalorder %v92, %v504
    %vm591 = vcmp.eq.s32.totalorder %v93, %v504
    %vm592 = vcmp.eq.s32.totalorder %v92, %v507
    %vm593 = vcmp.eq.s32.totalorder %v93, %v507
    %vm594 = vcmp.eq.s32.totalorder %v92, %v510
    %vm595 = vcmp.eq.s32.totalorder %v93, %v510
    %vm596 = vcmp.eq.s32.totalorder %v92, %v513
    %vm597 = vcmp.eq.s32.totalorder %v93, %v513
    %vm598 = vcmp.eq.s32.totalorder %v92, %v516
    %vm599 = vcmp.eq.s32.totalorder %v93, %v516
    %vm600 = vcmp.eq.s32.totalorder %v92, %v519
    %vm601 = vcmp.eq.s32.totalorder %v93, %v519
    %vm602 = vcmp.eq.s32.totalorder %v92, %v522
    %vm603 = vcmp.eq.s32.totalorder %v93, %v522
    %vm604 = vcmp.eq.s32.totalorder %v92, %v525
    %vm605 = vcmp.eq.s32.totalorder %v93, %v525
    %vm606 = vcmp.eq.s32.totalorder %v92, %v528
    %vm607 = vcmp.eq.s32.totalorder %v93, %v528
    %vm608 = vcmp.eq.s32.totalorder %v92, %v531
    %vm609 = vcmp.eq.s32.totalorder %v93, %v531
    %vm610 = vcmp.eq.s32.totalorder %v92, %v534
    %vm611 = vcmp.eq.s32.totalorder %v93, %v534
    %vm612 = vcmp.eq.s32.totalorder %v92, %v537
    %vm613 = vcmp.eq.s32.totalorder %v93, %v537
    %vm614 = vcmp.eq.s32.totalorder %v92, %v540
    %vm615 = vcmp.eq.s32.totalorder %v93, %v540
    %vm616 = vcmp.eq.s32.totalorder %v92, %v543
    %vm617 = vcmp.eq.s32.totalorder %v93, %v543
    %vm618 = vcmp.eq.s32.totalorder %v92, %v546
    %vm619 = vcmp.eq.s32.totalorder %v93, %v546
    %vm620 = vcmp.eq.s32.totalorder %v92, %v549
    %vm621 = vcmp.eq.s32.totalorder %v93, %v549
    %vm622 = vcmp.eq.s32.totalorder %v92, %v552
    %vm623 = vcmp.eq.s32.totalorder %v93, %v552
    %vm624 = vcmp.eq.s32.totalorder %v92, %v555
    %vm625 = vcmp.eq.s32.totalorder %v93, %v555
    %vm626 = vcmp.eq.s32.totalorder %v92, %v558
    %vm627 = vcmp.eq.s32.totalorder %v93, %v558
    %vm628 = vcmp.eq.s32.totalorder %v92, %v561
    %vm629 = vcmp.eq.s32.totalorder %v93, %v561
    %vm630 = vcmp.eq.s32.totalorder %v92, %v564
    %vm631 = vcmp.eq.s32.totalorder %v93, %v564
    %vm632 = vcmp.eq.s32.totalorder %v92, %v567
    %vm633 = vcmp.eq.s32.totalorder %v93, %v567
    %vm634 = vcmp.eq.s32.totalorder %v92, %v570
    %vm635 = vcmp.eq.s32.totalorder %v93, %v570
    %vm636 = vcmp.eq.s32.totalorder %v92, %v573
    %vm637 = vcmp.eq.s32.totalorder %v93, %v573
    %v638 = vadd.s32 %v446, 64
    %v639 = vadd.s32 %v447, 64
    %v640 = vadd.s32 %v448, 64
    %v641 = vadd.s32 %v449, 64
    %v642 = vadd.s32 %v450, 64
    %v643 = vadd.s32 %v451, 64
    %v644 = vadd.s32 %v452, 64
    %v645 = vadd.s32 %v453, 64
    %v646 = vadd.s32 %v454, 64
    %v647 = vadd.s32 %v455, 64
    %v648 = vadd.s32 %v456, 64
    %v649 = vadd.s32 %v457, 64
    %v650 = vadd.s32 %v458, 64
    %v651 = vadd.s32 %v459, 64
    %v652 = vadd.s32 %v460, 64
    %v653 = vadd.s32 %v461, 64
    %v654 = vadd.s32 %v462, 64
    %v655 = vadd.s32 %v463, 64
    %v656 = vadd.s32 %v464, 64
    %v657 = vadd.s32 %v465, 64
    %v658 = vadd.s32 %v466, 64
    %v659 = vadd.s32 %v467, 64
    %v660 = vadd.s32 %v468, 64
    %v661 = vadd.s32 %v469, 64
    %v662 = vadd.s32 %v470, 64
    %v663 = vadd.s32 %v471, 64
    %v664 = vadd.s32 %v472, 64
    %v665 = vadd.s32 %v473, 64
    %v666 = vadd.s32 %v474, 64
    %v667 = vadd.s32 %v475, 64
    %v668 = vadd.s32 %v476, 64
    %v669 = vadd.s32 %v477, 64
    %vm670 = vcmp.eq.s32.totalorder %v92, %v638
    %vm671 = vcmp.eq.s32.totalorder %v93, %v638
    %vm672 = vcmp.eq.s32.totalorder %v92, %v639
    %vm673 = vcmp.eq.s32.totalorder %v93, %v639
    %vm674 = vcmp.eq.s32.totalorder %v92, %v640
    %vm675 = vcmp.eq.s32.totalorder %v93, %v640
    %vm676 = vcmp.eq.s32.totalorder %v92, %v641
    %vm677 = vcmp.eq.s32.totalorder %v93, %v641
    %vm678 = vcmp.eq.s32.totalorder %v92, %v642
    %vm679 = vcmp.eq.s32.totalorder %v93, %v642
    %vm680 = vcmp.eq.s32.totalorder %v92, %v643
    %vm681 = vcmp.eq.s32.totalorder %v93, %v643
    %vm682 = vcmp.eq.s32.totalorder %v92, %v644
    %vm683 = vcmp.eq.s32.totalorder %v93, %v644
    %vm684 = vcmp.eq.s32.totalorder %v92, %v645
    %vm685 = vcmp.eq.s32.totalorder %v93, %v645
    %vm686 = vcmp.eq.s32.totalorder %v92, %v646
    %vm687 = vcmp.eq.s32.totalorder %v93, %v646
    %vm688 = vcmp.eq.s32.totalorder %v92, %v647
    %vm689 = vcmp.eq.s32.totalorder %v93, %v647
    %vm690 = vcmp.eq.s32.totalorder %v92, %v648
    %vm691 = vcmp.eq.s32.totalorder %v93, %v648
    %vm692 = vcmp.eq.s32.totalorder %v92, %v649
    %vm693 = vcmp.eq.s32.totalorder %v93, %v649
    %vm694 = vcmp.eq.s32.totalorder %v92, %v650
    %vm695 = vcmp.eq.s32.totalorder %v93, %v650
    %vm696 = vcmp.eq.s32.totalorder %v92, %v651
    %vm697 = vcmp.eq.s32.totalorder %v93, %v651
    %vm698 = vcmp.eq.s32.totalorder %v92, %v652
    %vm699 = vcmp.eq.s32.totalorder %v93, %v652
    %vm700 = vcmp.eq.s32.totalorder %v92, %v653
    %vm701 = vcmp.eq.s32.totalorder %v93, %v653
    %vm702 = vcmp.eq.s32.totalorder %v92, %v654
    %vm703 = vcmp.eq.s32.totalorder %v93, %v654
    %vm704 = vcmp.eq.s32.totalorder %v92, %v655
    %vm705 = vcmp.eq.s32.totalorder %v93, %v655
    %vm706 = vcmp.eq.s32.totalorder %v92, %v656
    %vm707 = vcmp.eq.s32.totalorder %v93, %v656
    %vm708 = vcmp.eq.s32.totalorder %v92, %v657
    %vm709 = vcmp.eq.s32.totalorder %v93, %v657
    %vm710 = vcmp.eq.s32.totalorder %v92, %v658
    %vm711 = vcmp.eq.s32.totalorder %v93, %v658
    %vm712 = vcmp.eq.s32.totalorder %v92, %v659
    %vm713 = vcmp.eq.s32.totalorder %v93, %v659
    %vm714 = vcmp.eq.s32.totalorder %v92, %v660
    %vm715 = vcmp.eq.s32.totalorder %v93, %v660
    %vm716 = vcmp.eq.s32.totalorder %v92, %v661
    %vm717 = vcmp.eq.s32.totalorder %v93, %v661
    %vm718 = vcmp.eq.s32.totalorder %v92, %v662
    %vm719 = vcmp.eq.s32.totalorder %v93, %v662
    %vm720 = vcmp.eq.s32.totalorder %v92, %v663
    %vm721 = vcmp.eq.s32.totalorder %v93, %v663
    %vm722 = vcmp.eq.s32.totalorder %v92, %v664
    %vm723 = vcmp.eq.s32.totalorder %v93, %v664
    %vm724 = vcmp.eq.s32.totalorder %v92, %v665
    %vm725 = vcmp.eq.s32.totalorder %v93, %v665
    %vm726 = vcmp.eq.s32.totalorder %v92, %v666
    %vm727 = vcmp.eq.s32.totalorder %v93, %v666
    %vm728 = vcmp.eq.s32.totalorder %v92, %v667
    %vm729 = vcmp.eq.s32.totalorder %v93, %v667
    %vm730 = vcmp.eq.s32.totalorder %v92, %v668
    %vm731 = vcmp.eq.s32.totalorder %v93, %v668
    %vm732 = vcmp.eq.s32.totalorder %v92, %v669
    %vm733 = vcmp.eq.s32.totalorder %v93, %v669
    %vm734 = vmor %vm574, %vm670
    %vm735 = vmor %vm575, %vm671
    %vm736 = vmor %vm576, %vm672
    %vm737 = vmor %vm577, %vm673
    %vm738 = vmor %vm578, %vm674
    %vm739 = vmor %vm579, %vm675
    %vm740 = vmor %vm580, %vm676
    %vm741 = vmor %vm581, %vm677
    %vm742 = vmor %vm582, %vm678
    %vm743 = vmor %vm583, %vm679
    %vm744 = vmor %vm584, %vm680
    %vm745 = vmor %vm585, %vm681
    %vm746 = vmor %vm586, %vm682
    %vm747 = vmor %vm587, %vm683
    %vm748 = vmor %vm588, %vm684
    %vm749 = vmor %vm589, %vm685
    %vm750 = vmor %vm590, %vm686
    %vm751 = vmor %vm591, %vm687
    %vm752 = vmor %vm592, %vm688
    %vm753 = vmor %vm593, %vm689
    %vm754 = vmor %vm594, %vm690
    %vm755 = vmor %vm595, %vm691
    %vm756 = vmor %vm596, %vm692
    %vm757 = vmor %vm597, %vm693
    %vm758 = vmor %vm598, %vm694
    %vm759 = vmor %vm599, %vm695
    %vm760 = vmor %vm600, %vm696
    %vm761 = vmor %vm601, %vm697
    %vm762 = vmor %vm602, %vm698
    %vm763 = vmor %vm603, %vm699
    %vm764 = vmor %vm604, %vm700
    %vm765 = vmor %vm605, %vm701
    %vm766 = vmor %vm606, %vm702
    %vm767 = vmor %vm607, %vm703
    %vm768 = vmor %vm608, %vm704
    %vm769 = vmor %vm609, %vm705
    %vm770 = vmor %vm610, %vm706
    %vm771 = vmor %vm611, %vm707
    %vm772 = vmor %vm612, %vm708
    %vm773 = vmor %vm613, %vm709
    %vm774 = vmor %vm614, %vm710
    %vm775 = vmor %vm615, %vm711
    %vm776 = vmor %vm616, %vm712
    %vm777 = vmor %vm617, %vm713
    %vm778 = vmor %vm618, %vm714
    %vm779 = vmor %vm619, %vm715
    %vm780 = vmor %vm620, %vm716
    %vm781 = vmor %vm621, %vm717
    %vm782 = vmor %vm622, %vm718
    %vm783 = vmor %vm623, %vm719
    %vm784 = vmor %vm624, %vm720
    %vm785 = vmor %vm625, %vm721
    %vm786 = vmor %vm626, %vm722
    %vm787 = vmor %vm627, %vm723
    %vm788 = vmor %vm628, %vm724
    %vm789 = vmor %vm629, %vm725
    %vm790 = vmor %vm630, %vm726
    %vm791 = vmor %vm631, %vm727
    %vm792 = vmor %vm632, %vm728
    %vm793 = vmor %vm633, %vm729
    %vm794 = vmor %vm634, %vm730
    %vm795 = vmor %vm635, %vm731
    %vm796 = vmor %vm636, %vm732
    %vm797 = vmor %vm637, %vm733
    %v798 = vsel %vm734, 1, 0
    %v799 = vsel %vm735, 1, 0
    %v800 = vsel %vm736, 1, 0
    %v801 = vsel %vm737, 1, 0
    %v802 = vsel %vm738, 1, 0
    %v803 = vsel %vm739, 1, 0
    %v804 = vsel %vm740, 1, 0
    %v805 = vsel %vm741, 1, 0
    %v806 = vsel %vm742, 1, 0
    %v807 = vsel %vm743, 1, 0
    %v808 = vsel %vm744, 1, 0
    %v809 = vsel %vm745, 1, 0
    %v810 = vsel %vm746, 1, 0
    %v811 = vsel %vm747, 1, 0
    %v812 = vsel %vm748, 1, 0
    %v813 = vsel %vm749, 1, 0
    %v814 = vsel %vm750, 1, 0
    %v815 = vsel %vm751, 1, 0
    %v816 = vsel %vm752, 1, 0
    %v817 = vsel %vm753, 1, 0
    %v818 = vsel %vm754, 1, 0
    %v819 = vsel %vm755, 1, 0
    %v820 = vsel %vm756, 1, 0
    %v821 = vsel %vm757, 1, 0
    %v822 = vsel %vm758, 1, 0
    %v823 = vsel %vm759, 1, 0
    %v824 = vsel %vm760, 1, 0
    %v825 = vsel %vm761, 1, 0
    %v826 = vsel %vm762, 1, 0
    %v827 = vsel %vm763, 1, 0
    %v828 = vsel %vm764, 1, 0
    %v829 = vsel %vm765, 1, 0
    %v830 = vsel %vm766, 1, 0
    %v831 = vsel %vm767, 1, 0
    %v832 = vsel %vm768, 1, 0
    %v833 = vsel %vm769, 1, 0
    %v834 = vsel %vm770, 1, 0
    %v835 = vsel %vm771, 1, 0
    %v836 = vsel %vm772, 1, 0
    %v837 = vsel %vm773, 1, 0
    %v838 = vsel %vm774, 1, 0
    %v839 = vsel %vm775, 1, 0
    %v840 = vsel %vm776, 1, 0
    %v841 = vsel %vm777, 1, 0
    %v842 = vsel %vm778, 1, 0
    %v843 = vsel %vm779, 1, 0
    %v844 = vsel %vm780, 1, 0
    %v845 = vsel %vm781, 1, 0
    %v846 = vsel %vm782, 1, 0
    %v847 = vsel %vm783, 1, 0
    %v848 = vsel %vm784, 1, 0
    %v849 = vsel %vm785, 1, 0
    %v850 = vsel %vm786, 1, 0
    %v851 = vsel %vm787, 1, 0
    %v852 = vsel %vm788, 1, 0
    %v853 = vsel %vm789, 1, 0
    %v854 = vsel %vm790, 1, 0
    %v855 = vsel %vm791, 1, 0
    %v856 = vsel %vm792, 1, 0
    %v857 = vsel %vm793, 1, 0
    %v858 = vsel %vm794, 1, 0
    %v859 = vsel %vm795, 1, 0
    %v860 = vsel %vm796, 1, 0
    %v861 = vsel %vm797, 1, 0
    %v862 = vcvt.s32.f32 %v798
    %v863 = vcvt.s32.f32 %v799
    %v864 = vcvt.s32.f32 %v800
    %v865 = vcvt.s32.f32 %v801
    %v866 = vcvt.s32.f32 %v802
    %v867 = vcvt.s32.f32 %v803
    %v868 = vcvt.s32.f32 %v804
    %v869 = vcvt.s32.f32 %v805
    %v870 = vcvt.s32.f32 %v806
    %v871 = vcvt.s32.f32 %v807
    %v872 = vcvt.s32.f32 %v808
    %v873 = vcvt.s32.f32 %v809
    %v874 = vcvt.s32.f32 %v810
    %v875 = vcvt.s32.f32 %v811
    %v876 = vcvt.s32.f32 %v812
    %v877 = vcvt.s32.f32 %v813
    %v878 = vcvt.s32.f32 %v814
    %v879 = vcvt.s32.f32 %v815
    %v880 = vcvt.s32.f32 %v816
    %v881 = vcvt.s32.f32 %v817
    %v882 = vcvt.s32.f32 %v818
    %v883 = vcvt.s32.f32 %v819
    %v884 = vcvt.s32.f32 %v820
    %v885 = vcvt.s32.f32 %v821
    %v886 = vcvt.s32.f32 %v822
    %v887 = vcvt.s32.f32 %v823
    %v888 = vcvt.s32.f32 %v824
    %v889 = vcvt.s32.f32 %v825
    %v890 = vcvt.s32.f32 %v826
    %v891 = vcvt.s32.f32 %v827
    %v892 = vcvt.s32.f32 %v828
    %v893 = vcvt.s32.f32 %v829
    %v894 = vcvt.s32.f32 %v830
    %v895 = vcvt.s32.f32 %v831
    %v896 = vcvt.s32.f32 %v832
    %v897 = vcvt.s32.f32 %v833
    %v898 = vcvt.s32.f32 %v834
    %v899 = vcvt.s32.f32 %v835
    %v900 = vcvt.s32.f32 %v836
    %v901 = vcvt.s32.f32 %v837
    %v902 = vcvt.s32.f32 %v838
    %v903 = vcvt.s32.f32 %v839
    %v904 = vcvt.s32.f32 %v840
    %v905 = vcvt.s32.f32 %v841
    %v906 = vcvt.s32.f32 %v842
    %v907 = vcvt.s32.f32 %v843
    %v908 = vcvt.s32.f32 %v844
    %v909 = vcvt.s32.f32 %v845
    %v910 = vcvt.s32.f32 %v846
    %v911 = vcvt.s32.f32 %v847
    %v912 = vcvt.s32.f32 %v848
    %v913 = vcvt.s32.f32 %v849
    %v914 = vcvt.s32.f32 %v850
    %v915 = vcvt.s32.f32 %v851
    %v916 = vcvt.s32.f32 %v852
    %v917 = vcvt.s32.f32 %v853
    %v918 = vcvt.s32.f32 %v854
    %v919 = vcvt.s32.f32 %v855
    %v920 = vcvt.s32.f32 %v856
    %v921 = vcvt.s32.f32 %v857
    %v922 = vcvt.s32.f32 %v858
    %v923 = vcvt.s32.f32 %v859
    %v924 = vcvt.s32.f32 %v860
    %v925 = vcvt.s32.f32 %v861
    %v926 = vpack.c.bf16 %v864, %v862
    %v927 = vpack.c.bf16 %v865, %v863
    %v928 = vpack.c.bf16 %v868, %v866
    %v929 = vpack.c.bf16 %v869, %v867
    %v930 = vpack.c.bf16 %v872, %v870
    %v931 = vpack.c.bf16 %v873, %v871
    %v932 = vpack.c.bf16 %v876, %v874
    %v933 = vpack.c.bf16 %v877, %v875
    %v934 = vpack.c.bf16 %v880, %v878
    %v935 = vpack.c.bf16 %v881, %v879
    %v936 = vpack.c.bf16 %v884, %v882
    %v937 = vpack.c.bf16 %v885, %v883
    %v938 = vpack.c.bf16 %v888, %v886
    %v939 = vpack.c.bf16 %v889, %v887
    %v940 = vpack.c.bf16 %v892, %v890
    %v941 = vpack.c.bf16 %v893, %v891
    %v942 = vpack.c.bf16 %v896, %v894
    %v943 = vpack.c.bf16 %v897, %v895
    %v944 = vpack.c.bf16 %v900, %v898
    %v945 = vpack.c.bf16 %v901, %v899
    %v946 = vpack.c.bf16 %v904, %v902
    %v947 = vpack.c.bf16 %v905, %v903
    %v948 = vpack.c.bf16 %v908, %v906
    %v949 = vpack.c.bf16 %v909, %v907
    %v950 = vpack.c.bf16 %v912, %v910
    %v951 = vpack.c.bf16 %v913, %v911
    %v952 = vpack.c.bf16 %v916, %v914
    %v953 = vpack.c.bf16 %v917, %v915
    %v954 = vpack.c.bf16 %v920, %v918
    %v955 = vpack.c.bf16 %v921, %v919
    %v956 = vpack.c.bf16 %v924, %v922
    %v957 = vpack.c.bf16 %v925, %v923
    %v958 = vld [vmem:[#allocation2] sm:$0xf]
    %v959 = vld [vmem:[#allocation2 + $0x4] sm:$0xf]
    %v960 = vld [vmem:[#allocation2 + $0x8] sm:$0xf]
    %v961 = vld [vmem:[#allocation2 + $0xc] sm:$0xf]
    %v962 = vld [vmem:[#allocation2 + $0x10] sm:$0xf]
    %v963 = vld [vmem:[#allocation2 + $0x14] sm:$0xf]
    %v964 = vld [vmem:[#allocation2 + $0x18] sm:$0xf]
    %v965 = vld [vmem:[#allocation2 + $0x1c] sm:$0xf]
    %v966 = vld [vmem:[#allocation2 + $0x20] sm:$0xf]
    %v967 = vld [vmem:[#allocation2 + $0x24] sm:$0xf]
    %v968 = vld [vmem:[#allocation2 + $0x28] sm:$0xf]
    %v969 = vld [vmem:[#allocation2 + $0x2c] sm:$0xf]
    %v970 = vld [vmem:[#allocation2 + $0x30] sm:$0xf]
    %v971 = vld [vmem:[#allocation2 + $0x34] sm:$0xf]
    %v972 = vld [vmem:[#allocation2 + $0x38] sm:$0xf]
    %v973 = vld [vmem:[#allocation2 + $0x3c] sm:$0xf]
    %v974 = vld [vmem:[#allocation2 + $0x40] sm:$0xf]
    %v975 = vld [vmem:[#allocation2 + $0x44] sm:$0xf]
    %v976 = vld [vmem:[#allocation2 + $0x48] sm:$0xf]
    %v977 = vld [vmem:[#allocation2 + $0x4c] sm:$0xf]
    %v978 = vld [vmem:[#allocation2 + $0x50] sm:$0xf]
    %v979 = vld [vmem:[#allocation2 + $0x54] sm:$0xf]
    %v980 = vld [vmem:[#allocation2 + $0x58] sm:$0xf]
    %v981 = vld [vmem:[#allocation2 + $0x5c] sm:$0xf]
    %v982 = vld [vmem:[#allocation2 + $0x60] sm:$0xf]
    %v983 = vld [vmem:[#allocation2 + $0x64] sm:$0xf]
    %v984 = vld [vmem:[#allocation2 + $0x68] sm:$0xf]
    %v985 = vld [vmem:[#allocation2 + $0x6c] sm:$0xf]
    %v986 = vld [vmem:[#allocation2 + $0x70] sm:$0xf]
    %v987 = vld [vmem:[#allocation2 + $0x74] sm:$0xf]
    %v988 = vld [vmem:[#allocation2 + $0x78] sm:$0xf]
    %v989 = vld [vmem:[#allocation2 + $0x7c] sm:$0xf]
    %v1022 = vunpack.c.l.b16 %v958
    %v1023 = vunpack.c.l.b16 %v959
    %v1024 = vunpack.c.l.b16 %v960
    %v1025 = vunpack.c.l.b16 %v961
    %v1026 = vunpack.c.l.b16 %v962
    %v1027 = vunpack.c.l.b16 %v963
    %v1028 = vunpack.c.l.b16 %v964
    %v1029 = vunpack.c.l.b16 %v965
    %v1030 = vunpack.c.l.b16 %v966
    %v1031 = vunpack.c.l.b16 %v967
    %v1032 = vunpack.c.l.b16 %v968
    %v1033 = vunpack.c.l.b16 %v969
    %v1034 = vunpack.c.l.b16 %v970
    %v1035 = vunpack.c.l.b16 %v971
    %v1036 = vunpack.c.l.b16 %v972
    %v1037 = vunpack.c.l.b16 %v973
    %v1038 = vunpack.c.l.b16 %v974
    %v1039 = vunpack.c.l.b16 %v975
    %v1040 = vunpack.c.l.b16 %v976
    %v1041 = vunpack.c.l.b16 %v977
    %v1042 = vunpack.c.l.b16 %v978
    %v1043 = vunpack.c.l.b16 %v979
    %v1044 = vunpack.c.l.b16 %v980
    %v1045 = vunpack.c.l.b16 %v981
    %v1046 = vunpack.c.l.b16 %v982
    %v1047 = vunpack.c.l.b16 %v983
    %v1048 = vunpack.c.l.b16 %v984
    %v1049 = vunpack.c.l.b16 %v985
    %v1050 = vunpack.c.l.b16 %v986
    %v1051 = vunpack.c.l.b16 %v987
    %v1052 = vunpack.c.l.b16 %v988
    %v1053 = vunpack.c.l.b16 %v989
    %v1054 = vpack.c.b16 %v1023, %v1022
    %v1055 = vpack.c.b16 %v1025, %v1024
    %v1056 = vpack.c.b16 %v1027, %v1026
    %v1057 = vpack.c.b16 %v1029, %v1028
    %v1058 = vpack.c.b16 %v1031, %v1030
    %v1059 = vpack.c.b16 %v1033, %v1032
    %v1060 = vpack.c.b16 %v1035, %v1034
    %v1061 = vpack.c.b16 %v1037, %v1036
    %v1062 = vpack.c.b16 %v1039, %v1038
    %v1063 = vpack.c.b16 %v1041, %v1040
    %v1064 = vpack.c.b16 %v1043, %v1042
    %v1065 = vpack.c.b16 %v1045, %v1044
    %v1066 = vpack.c.b16 %v1047, %v1046
    %v1067 = vpack.c.b16 %v1049, %v1048
    %v1068 = vpack.c.b16 %v1051, %v1050
    %v1069 = vpack.c.b16 %v1053, %v1052
    %1086 = vmatprep.subr.bf16.mxu0 0
    %1087 = vmatpush1.bf16.msra.mxu0 %v1061
    %1088 = vmatprep.subr.bf16.mxu0 0
    %1089 = vmatpush1.bf16.msra.mxu0 %v1060
    %1090 = vmatprep.subr.bf16.mxu0 0
    %1091 = vmatpush1.bf16.msra.mxu0 %v1059
    %1092 = vmatprep.subr.bf16.mxu0 0
    %1093 = vmatpush1.bf16.msra.mxu0 %v1058
    %1094 = vmatprep.subr.bf16.mxu0 0
    %1095 = vmatpush1.bf16.msra.mxu0 %v1057
    %1096 = vmatprep.subr.bf16.mxu0 0
    %1097 = vmatpush1.bf16.msra.mxu0 %v1056
    %1098 = vmatprep.subr.bf16.mxu0 0
    %1099 = vmatpush1.bf16.msra.mxu0 %v1055
    %1100 = vmatprep.subr.bf16.mxu0 0
    %1101 = vmatpush1.bf16.msra.mxu0 %v1054
    %1102 = vmatprep.subr.bf16.mxu0 0
    %1103 = vmatpush2.bf16.msra.mxu0 %v1069
    %1104 = vmatprep.subr.bf16.mxu0 0
    %1105 = vmatpush2.bf16.msra.mxu0 %v1068
    %1106 = vmatprep.subr.bf16.mxu0 0
    %1107 = vmatpush2.bf16.msra.mxu0 %v1067
    %1108 = vmatprep.subr.bf16.mxu0 0
    %1109 = vmatpush2.bf16.msra.mxu0 %v1066
    %1110 = vmatprep.subr.bf16.mxu0 0
    %1111 = vmatpush2.bf16.msra.mxu0 %v1065
    %1112 = vmatprep.subr.bf16.mxu0 0
    %1113 = vmatpush2.bf16.msra.mxu0 %v1064
    %1114 = vmatprep.subr.bf16.mxu0 0
    %1115 = vmatpush2.bf16.msra.mxu0 %v1063
    %1116 = vmatprep.subr.bf16.mxu0 0
    %1117 = vmatpush2.bf16.msra.mxu0 %v1062
    %1118 = vmatprep.mubr.bf16.mxu0 %v927
    %1119 = vmatmul.mubr.bf16.gmra.mxu0 %v926
    %v1120 = vpop.f32.mrf.mxu0
    %v1121 = vadd.f32 0.0, %v1120
    %v1122 = vpop.f32.mrf.mxu0
    %v1123 = vpop.f32.mrf.mxu0
    %v1124 = vadd.f32 0.0, %v1123
    %v1125 = vpop.f32.mrf.mxu0
    %1126 = vmatprep.mubr.bf16.mxu0 %v929
    %1127 = vmatmul.mubr.bf16.gmra.mxu0 %v928
    %v1128 = vpop.f32.mrf.mxu0
    %v1129 = vadd.f32 0.0, %v1128
    %v1130 = vpop.f32.mrf.mxu0
    %v1131 = vpop.f32.mrf.mxu0
    %v1132 = vadd.f32 0.0, %v1131
    %v1133 = vpop.f32.mrf.mxu0
    %1134 = vmatprep.mubr.bf16.mxu0 %v931
    %1135 = vmatmul.mubr.bf16.gmra.mxu0 %v930
    %v1136 = vpop.f32.mrf.mxu0
    %v1137 = vadd.f32 0.0, %v1136
    %v1138 = vpop.f32.mrf.mxu0
    %v1139 = vpop.f32.mrf.mxu0
    %v1140 = vadd.f32 0.0, %v1139
    %v1141 = vpop.f32.mrf.mxu0
    %1142 = vmatprep.mubr.bf16.mxu0 %v933
    %1143 = vmatmul.mubr.bf16.gmra.mxu0 %v932
    %v1144 = vpop.f32.mrf.mxu0
    %v1145 = vadd.f32 0.0, %v1144
    %v1146 = vpop.f32.mrf.mxu0
    %v1147 = vpop.f32.mrf.mxu0
    %v1148 = vadd.f32 0.0, %v1147
    %v1149 = vpop.f32.mrf.mxu0
    %1150 = vmatprep.mubr.bf16.mxu0 %v935
    %1151 = vmatmul.mubr.bf16.gmra.mxu0 %v934
    %v1152 = vpop.f32.mrf.mxu0
    %v1153 = vadd.f32 0.0, %v1152
    %v1154 = vpop.f32.mrf.mxu0
    %v1155 = vpop.f32.mrf.mxu0
    %v1156 = vadd.f32 0.0, %v1155
    %v1157 = vpop.f32.mrf.mxu0
    %1158 = vmatprep.mubr.bf16.mxu0 %v937
    %1159 = vmatmul.mubr.bf16.gmra.mxu0 %v936
    %v1160 = vpop.f32.mrf.mxu0
    %v1161 = vadd.f32 0.0, %v1160
    %v1162 = vpop.f32.mrf.mxu0
    %v1163 = vpop.f32.mrf.mxu0
    %v1164 = vadd.f32 0.0, %v1163
    %v1165 = vpop.f32.mrf.mxu0
    %1166 = vmatprep.mubr.bf16.mxu0 %v939
    %1167 = vmatmul.mubr.bf16.gmra.mxu0 %v938
    %v1168 = vpop.f32.mrf.mxu0
    %v1169 = vadd.f32 0.0, %v1168
    %v1170 = vpop.f32.mrf.mxu0
    %v1171 = vpop.f32.mrf.mxu0
    %v1172 = vadd.f32 0.0, %v1171
    %v1173 = vpop.f32.mrf.mxu0
    %1174 = vmatprep.mubr.bf16.mxu0 %v941
    %1175 = vmatmul.mubr.bf16.gmra.mxu0 %v940
    %v1176 = vpop.f32.mrf.mxu0
    %v1177 = vadd.f32 0.0, %v1176
    %v1178 = vpop.f32.mrf.mxu0
    %v1179 = vpop.f32.mrf.mxu0
    %v1180 = vadd.f32 0.0, %v1179
    %v1181 = vpop.f32.mrf.mxu0
    %1182 = vmatprep.mubr.bf16.mxu0 %v943
    %1183 = vmatmul.mubr.bf16.gmra.mxu0 %v942
    %v1184 = vpop.f32.mrf.mxu0
    %v1185 = vadd.f32 0.0, %v1184
    %v1186 = vpop.f32.mrf.mxu0
    %v1187 = vpop.f32.mrf.mxu0
    %v1188 = vadd.f32 0.0, %v1187
    %v1189 = vpop.f32.mrf.mxu0
    %1190 = vmatprep.mubr.bf16.mxu0 %v945
    %1191 = vmatmul.mubr.bf16.gmra.mxu0 %v944
    %v1192 = vpop.f32.mrf.mxu0
    %v1193 = vadd.f32 0.0, %v1192
    %v1194 = vpop.f32.mrf.mxu0
    %v1195 = vpop.f32.mrf.mxu0
    %v1196 = vadd.f32 0.0, %v1195
    %v1197 = vpop.f32.mrf.mxu0
    %1198 = vmatprep.mubr.bf16.mxu0 %v947
    %1199 = vmatmul.mubr.bf16.gmra.mxu0 %v946
    %v1200 = vpop.f32.mrf.mxu0
    %v1201 = vadd.f32 0.0, %v1200
    %v1202 = vpop.f32.mrf.mxu0
    %v1203 = vpop.f32.mrf.mxu0
    %v1204 = vadd.f32 0.0, %v1203
    %v1205 = vpop.f32.mrf.mxu0
    %1206 = vmatprep.mubr.bf16.mxu0 %v949
    %1207 = vmatmul.mubr.bf16.gmra.mxu0 %v948
    %v1208 = vpop.f32.mrf.mxu0
    %v1209 = vadd.f32 0.0, %v1208
    %v1210 = vpop.f32.mrf.mxu0
    %v1211 = vpop.f32.mrf.mxu0
    %v1212 = vadd.f32 0.0, %v1211
    %v1213 = vpop.f32.mrf.mxu0
    %1214 = vmatprep.mubr.bf16.mxu0 %v951
    %1215 = vmatmul.mubr.bf16.gmra.mxu0 %v950
    %v1216 = vpop.f32.mrf.mxu0
    %v1217 = vadd.f32 0.0, %v1216
    %v1218 = vpop.f32.mrf.mxu0
    %v1219 = vpop.f32.mrf.mxu0
    %v1220 = vadd.f32 0.0, %v1219
    %v1221 = vpop.f32.mrf.mxu0
    %1222 = vmatprep.mubr.bf16.mxu0 %v953
    %1223 = vmatmul.mubr.bf16.gmra.mxu0 %v952
    %v1224 = vpop.f32.mrf.mxu0
    %v1225 = vadd.f32 0.0, %v1224
    %v1226 = vpop.f32.mrf.mxu0
    %v1227 = vpop.f32.mrf.mxu0
    %v1228 = vadd.f32 0.0, %v1227
    %v1229 = vpop.f32.mrf.mxu0
    %1230 = vmatprep.mubr.bf16.mxu0 %v955
    %1231 = vmatmul.mubr.bf16.gmra.mxu0 %v954
    %v1232 = vpop.f32.mrf.mxu0
    %v1233 = vadd.f32 0.0, %v1232
    %v1234 = vpop.f32.mrf.mxu0
    %v1235 = vpop.f32.mrf.mxu0
    %v1236 = vadd.f32 0.0, %v1235
    %v1237 = vpop.f32.mrf.mxu0
    %1238 = vmatprep.mubr.bf16.mxu0 %v957
    %1239 = vmatmul.mubr.bf16.gmra.mxu0 %v956
    %v1240 = vpop.f32.mrf.mxu0
    %v1241 = vadd.f32 0.0, %v1240
    %v1242 = vpop.f32.mrf.mxu0
    %v1243 = vpop.f32.mrf.mxu0
    %v1244 = vadd.f32 0.0, %v1243
    %v1245 = vpop.f32.mrf.mxu0
    %1246 = vdwg.mxu0
    %v1247 = vld [vmem:[#allocation2 + $0x80] sm:$0xf]
    %v1248 = vld [vmem:[#allocation2 + $0x84] sm:$0xf]
    %v1249 = vld [vmem:[#allocation2 + $0x88] sm:$0xf]
    %v1250 = vld [vmem:[#allocation2 + $0x8c] sm:$0xf]
    %v1251 = vld [vmem:[#allocation2 + $0x90] sm:$0x1]
    %v1252 = vunpack.c.l.bf16 %v1251
    %v1253 = vpack.c.bf16 %v1124, %v1121
    %v1254 = vpack.c.bf16 %v1132, %v1129
    %v1255 = vpack.c.bf16 %v1140, %v1137
    %v1256 = vpack.c.bf16 %v1148, %v1145
    %v1257 = vpack.c.bf16 %v1156, %v1153
    %v1258 = vpack.c.bf16 %v1164, %v1161
    %v1259 = vpack.c.bf16 %v1172, %v1169
    %v1260 = vpack.c.bf16 %v1180, %v1177
    %v1261 = vpack.c.bf16 %v1188, %v1185
    %v1262 = vpack.c.bf16 %v1196, %v1193
    %v1263 = vpack.c.bf16 %v1204, %v1201
    %v1264 = vpack.c.bf16 %v1212, %v1209
    %v1265 = vpack.c.bf16 %v1220, %v1217
    %v1266 = vpack.c.bf16 %v1228, %v1225
    %v1267 = vpack.c.bf16 %v1236, %v1233
    %v1268 = vpack.c.bf16 %v1244, %v1241
    %v1269 = vlaneseq
    %v1270 = vshrl.u32 %v1269, 7
    %v1271 = vsub.s32 0, %v1270
    %v1272 = vrot.slane %v1252, %v1271
    %v1277 = vunpack.c.l.b16 %v1247
    %v1278 = vunpack.c.l.b16 %v1248
    %v1279 = vunpack.c.l.b16 %v1249
    %v1280 = vunpack.c.l.b16 %v1250
    %v1281 = vpack.c.b16 %v1278, %v1277
    %v1282 = vpack.c.b16 %v1280, %v1279
    %vm1285 = vcmask 261120
    %v1287 = vsel %vm1285, %v1253, 0
    %v1290 = vsel %vm1285, %v1254, 0
    %v1293 = vsel %vm1285, %v1255, 0
    %v1296 = vsel %vm1285, %v1256, 0
    %v1299 = vsel %vm1285, %v1257, 0
    %v1302 = vsel %vm1285, %v1258, 0
    %v1305 = vsel %vm1285, %v1259, 0
    %v1308 = vsel %vm1285, %v1260, 0
    %v1311 = vsel %vm1285, %v1261, 0
    %v1314 = vsel %vm1285, %v1262, 0
    %v1317 = vsel %vm1285, %v1263, 0
    %v1320 = vsel %vm1285, %v1264, 0
    %v1323 = vsel %vm1285, %v1265, 0
    %v1326 = vsel %vm1285, %v1266, 0
    %v1329 = vsel %vm1285, %v1267, 0
    %v1332 = vsel %vm1285, %v1268, 0
    %1334 = vmatprep.subr.bf16.mxu0 0
    %1335 = vmatpush1.bf16.msra.mxu0 0
    %1336 = vmatprep.subr.bf16.mxu0 0
    %1337 = vmatpush1.bf16.msra.mxu0 0
    %1338 = vmatprep.subr.bf16.mxu0 0
    %1339 = vmatpush1.bf16.msra.mxu0 0
    %1340 = vmatprep.subr.bf16.mxu0 0
    %1341 = vmatpush1.bf16.msra.mxu0 0
    %1342 = vmatprep.subr.bf16.mxu0 0
    %1343 = vmatpush1.bf16.msra.mxu0 0
    %1344 = vmatprep.subr.bf16.mxu0 0
    %1345 = vmatpush1.bf16.msra.mxu0 0
    %1346 = vmatprep.subr.bf16.mxu0 0
    %1347 = vmatpush1.bf16.msra.mxu0 %v1282
    %1348 = vmatprep.subr.bf16.mxu0 0
    %1349 = vmatpush1.bf16.msra.mxu0 %v1281
    %1350 = vmatprep.subr.bf16.mxu0 0
    %1351 = vmatpush2.bf16.msra.mxu0 0
    %1352 = vmatprep.subr.bf16.mxu0 0
    %1353 = vmatpush2.bf16.msra.mxu0 0
    %1354 = vmatprep.subr.bf16.mxu0 0
    %1355 = vmatpush2.bf16.msra.mxu0 0
    %1356 = vmatprep.subr.bf16.mxu0 0
    %1357 = vmatpush2.bf16.msra.mxu0 0
    %1358 = vmatprep.subr.bf16.mxu0 0
    %1359 = vmatpush2.bf16.msra.mxu0 0
    %1360 = vmatprep.subr.bf16.mxu0 0
    %1361 = vmatpush2.bf16.msra.mxu0 0
    %1362 = vmatprep.subr.bf16.mxu0 0
    %1363 = vmatpush2.bf16.msra.mxu0 0
    %1364 = vmatprep.subr.bf16.mxu0 0
    %1365 = vmatpush2.bf16.msra.mxu0 0
    %1366 = vmatprep.mubr.bf16.mxu0 0
    %1367 = vmatmul.mubr.bf16.gmra.mxu0 %v1287
    %v1368 = vpop.f32.mrf.mxu0
    %v1369 = vadd.f32 %v1272, %v1368
    %v1370 = vpop.f32.mrf.mxu0
    %v1371 = vpop.f32.mrf.mxu0
    %v1372 = vadd.f32 %v1272, %v1371
    %v1373 = vpop.f32.mrf.mxu0
    %1374 = vmatprep.mubr.bf16.mxu0 0
    %1375 = vmatmul.mubr.bf16.gmra.mxu0 %v1290
    %v1376 = vpop.f32.mrf.mxu0
    %v1377 = vadd.f32 %v1272, %v1376
    %v1378 = vpop.f32.mrf.mxu0
    %v1379 = vpop.f32.mrf.mxu0
    %v1380 = vadd.f32 %v1272, %v1379
    %v1381 = vpop.f32.mrf.mxu0
    %1382 = vmatprep.mubr.bf16.mxu0 0
    %1383 = vmatmul.mubr.bf16.gmra.mxu0 %v1293
    %v1384 = vpop.f32.mrf.mxu0
    %v1385 = vadd.f32 %v1272, %v1384
    %v1386 = vpop.f32.mrf.mxu0
    %v1387 = vpop.f32.mrf.mxu0
    %v1388 = vadd.f32 %v1272, %v1387
    %v1389 = vpop.f32.mrf.mxu0
    %1390 = vmatprep.mubr.bf16.mxu0 0
    %1391 = vmatmul.mubr.bf16.gmra.mxu0 %v1296
    %v1392 = vpop.f32.mrf.mxu0
    %v1393 = vadd.f32 %v1272, %v1392
    %v1394 = vpop.f32.mrf.mxu0
    %v1395 = vpop.f32.mrf.mxu0
    %v1396 = vadd.f32 %v1272, %v1395
    %v1397 = vpop.f32.mrf.mxu0
    %1398 = vmatprep.mubr.bf16.mxu0 0
    %1399 = vmatmul.mubr.bf16.gmra.mxu0 %v1299
    %v1400 = vpop.f32.mrf.mxu0
    %v1401 = vadd.f32 %v1272, %v1400
    %v1402 = vpop.f32.mrf.mxu0
    %v1403 = vpop.f32.mrf.mxu0
    %v1404 = vadd.f32 %v1272, %v1403
    %v1405 = vpop.f32.mrf.mxu0
    %1406 = vmatprep.mubr.bf16.mxu0 0
    %1407 = vmatmul.mubr.bf16.gmra.mxu0 %v1302
    %v1408 = vpop.f32.mrf.mxu0
    %v1409 = vadd.f32 %v1272, %v1408
    %v1410 = vpop.f32.mrf.mxu0
    %v1411 = vpop.f32.mrf.mxu0
    %v1412 = vadd.f32 %v1272, %v1411
    %v1413 = vpop.f32.mrf.mxu0
    %1414 = vmatprep.mubr.bf16.mxu0 0
    %1415 = vmatmul.mubr.bf16.gmra.mxu0 %v1305
    %v1416 = vpop.f32.mrf.mxu0
    %v1417 = vadd.f32 %v1272, %v1416
    %v1418 = vpop.f32.mrf.mxu0
    %v1419 = vpop.f32.mrf.mxu0
    %v1420 = vadd.f32 %v1272, %v1419
    %v1421 = vpop.f32.mrf.mxu0
    %1422 = vmatprep.mubr.bf16.mxu0 0
    %1423 = vmatmul.mubr.bf16.gmra.mxu0 %v1308
    %v1424 = vpop.f32.mrf.mxu0
    %v1425 = vadd.f32 %v1272, %v1424
    %v1426 = vpop.f32.mrf.mxu0
    %v1427 = vpop.f32.mrf.mxu0
    %v1428 = vadd.f32 %v1272, %v1427
    %v1429 = vpop.f32.mrf.mxu0
    %1430 = vmatprep.mubr.bf16.mxu0 0
    %1431 = vmatmul.mubr.bf16.gmra.mxu0 %v1311
    %v1432 = vpop.f32.mrf.mxu0
    %v1433 = vadd.f32 %v1272, %v1432
    %v1434 = vpop.f32.mrf.mxu0
    %v1435 = vpop.f32.mrf.mxu0
    %v1436 = vadd.f32 %v1272, %v1435
    %v1437 = vpop.f32.mrf.mxu0
    %1438 = vmatprep.mubr.bf16.mxu0 0
    %1439 = vmatmul.mubr.bf16.gmra.mxu0 %v1314
    %v1440 = vpop.f32.mrf.mxu0
    %v1441 = vadd.f32 %v1272, %v1440
    %v1442 = vpop.f32.mrf.mxu0
    %v1443 = vpop.f32.mrf.mxu0
    %v1444 = vadd.f32 %v1272, %v1443
    %v1445 = vpop.f32.mrf.mxu0
    %1446 = vmatprep.mubr.bf16.mxu0 0
    %1447 = vmatmul.mubr.bf16.gmra.mxu0 %v1317
    %v1448 = vpop.f32.mrf.mxu0
    %v1449 = vadd.f32 %v1272, %v1448
    %v1450 = vpop.f32.mrf.mxu0
    %v1451 = vpop.f32.mrf.mxu0
    %v1452 = vadd.f32 %v1272, %v1451
    %v1453 = vpop.f32.mrf.mxu0
    %1454 = vmatprep.mubr.bf16.mxu0 0
    %1455 = vmatmul.mubr.bf16.gmra.mxu0 %v1320
    %v1456 = vpop.f32.mrf.mxu0
    %v1457 = vadd.f32 %v1272, %v1456
    %v1458 = vpop.f32.mrf.mxu0
    %v1459 = vpop.f32.mrf.mxu0
    %v1460 = vadd.f32 %v1272, %v1459
    %v1461 = vpop.f32.mrf.mxu0
    %1462 = vmatprep.mubr.bf16.mxu0 0
    %1463 = vmatmul.mubr.bf16.gmra.mxu0 %v1323
    %v1464 = vpop.f32.mrf.mxu0
    %v1465 = vadd.f32 %v1272, %v1464
    %v1466 = vpop.f32.mrf.mxu0
    %v1467 = vpop.f32.mrf.mxu0
    %v1468 = vadd.f32 %v1272, %v1467
    %v1469 = vpop.f32.mrf.mxu0
    %1470 = vmatprep.mubr.bf16.mxu0 0
    %1471 = vmatmul.mubr.bf16.gmra.mxu0 %v1326
    %v1472 = vpop.f32.mrf.mxu0
    %v1473 = vadd.f32 %v1272, %v1472
    %v1474 = vpop.f32.mrf.mxu0
    %v1475 = vpop.f32.mrf.mxu0
    %v1476 = vadd.f32 %v1272, %v1475
    %v1477 = vpop.f32.mrf.mxu0
    %1478 = vmatprep.mubr.bf16.mxu0 0
    %1479 = vmatmul.mubr.bf16.gmra.mxu0 %v1329
    %v1480 = vpop.f32.mrf.mxu0
    %v1481 = vadd.f32 %v1272, %v1480
    %v1482 = vpop.f32.mrf.mxu0
    %v1483 = vpop.f32.mrf.mxu0
    %v1484 = vadd.f32 %v1272, %v1483
    %v1485 = vpop.f32.mrf.mxu0
    %1486 = vmatprep.mubr.bf16.mxu0 0
    %1487 = vmatmul.mubr.bf16.gmra.mxu0 %v1332
    %v1488 = vpop.f32.mrf.mxu0
    %v1489 = vadd.f32 %v1272, %v1488
    %v1490 = vpop.f32.mrf.mxu0
    %v1491 = vpop.f32.mrf.mxu0
    %v1492 = vadd.f32 %v1272, %v1491
    %v1493 = vpop.f32.mrf.mxu0
    %1494 = vdwg.mxu0
    %v1495 = vadd.s32 %v446, 4294967295
    %v1496 = vadd.s32 %v447, 4294967295
    %v1497 = vadd.s32 %v448, 4294967295
    %v1498 = vadd.s32 %v449, 4294967295
    %v1499 = vadd.s32 %v450, 4294967295
    %v1500 = vadd.s32 %v451, 4294967295
    %v1501 = vadd.s32 %v452, 4294967295
    %v1502 = vadd.s32 %v453, 4294967295
    %v1503 = vadd.s32 %v454, 4294967295
    %v1504 = vadd.s32 %v455, 4294967295
    %v1505 = vadd.s32 %v456, 4294967295
    %v1506 = vadd.s32 %v457, 4294967295
    %v1507 = vadd.s32 %v458, 4294967295
    %v1508 = vadd.s32 %v459, 4294967295
    %v1509 = vadd.s32 %v460, 4294967295
    %v1510 = vadd.s32 %v461, 4294967295
    %v1511 = vadd.s32 %v462, 4294967295
    %v1512 = vadd.s32 %v463, 4294967295
    %v1513 = vadd.s32 %v464, 4294967295
    %v1514 = vadd.s32 %v465, 4294967295
    %v1515 = vadd.s32 %v466, 4294967295
    %v1516 = vadd.s32 %v467, 4294967295
    %v1517 = vadd.s32 %v468, 4294967295
    %v1518 = vadd.s32 %v469, 4294967295
    %v1519 = vadd.s32 %v470, 4294967295
    %v1520 = vadd.s32 %v471, 4294967295
    %v1521 = vadd.s32 %v472, 4294967295
    %v1522 = vadd.s32 %v473, 4294967295
    %v1523 = vadd.s32 %v474, 4294967295
    %v1524 = vadd.s32 %v475, 4294967295
    %v1525 = vadd.s32 %v476, 4294967295
    %v1526 = vadd.s32 %v477, 4294967295
    %vm1527 = vcmp.ge.s32.totalorder %v1495, 0
    %vm1528 = vcmp.ge.s32.totalorder %v1496, 0
    %vm1529 = vcmp.ge.s32.totalorder %v1497, 0
    %vm1530 = vcmp.ge.s32.totalorder %v1498, 0
    %vm1531 = vcmp.ge.s32.totalorder %v1499, 0
    %vm1532 = vcmp.ge.s32.totalorder %v1500, 0
    %vm1533 = vcmp.ge.s32.totalorder %v1501, 0
    %vm1534 = vcmp.ge.s32.totalorder %v1502, 0
    %vm1535 = vcmp.ge.s32.totalorder %v1503, 0
    %vm1536 = vcmp.ge.s32.totalorder %v1504, 0
    %vm1537 = vcmp.ge.s32.totalorder %v1505, 0
    %vm1538 = vcmp.ge.s32.totalorder %v1506, 0
    %vm1539 = vcmp.ge.s32.totalorder %v1507, 0
    %vm1540 = vcmp.ge.s32.totalorder %v1508, 0
    %vm1541 = vcmp.ge.s32.totalorder %v1509, 0
    %vm1542 = vcmp.ge.s32.totalorder %v1510, 0
    %vm1543 = vcmp.ge.s32.totalorder %v1511, 0
    %vm1544 = vcmp.ge.s32.totalorder %v1512, 0
    %vm1545 = vcmp.ge.s32.totalorder %v1513, 0
    %vm1546 = vcmp.ge.s32.totalorder %v1514, 0
    %vm1547 = vcmp.ge.s32.totalorder %v1515, 0
    %vm1548 = vcmp.ge.s32.totalorder %v1516, 0
    %vm1549 = vcmp.ge.s32.totalorder %v1517, 0
    %vm1550 = vcmp.ge.s32.totalorder %v1518, 0
    %vm1551 = vcmp.ge.s32.totalorder %v1519, 0
    %vm1552 = vcmp.ge.s32.totalorder %v1520, 0
    %vm1553 = vcmp.ge.s32.totalorder %v1521, 0
    %vm1554 = vcmp.ge.s32.totalorder %v1522, 0
    %vm1555 = vcmp.ge.s32.totalorder %v1523, 0
    %vm1556 = vcmp.ge.s32.totalorder %v1524, 0
    %vm1557 = vcmp.ge.s32.totalorder %v1525, 0
    %vm1558 = vcmp.ge.s32.totalorder %v1526, 0
    %vm1559 = vcmp.lt.s32.totalorder %v1495, 64
    %vm1560 = vcmp.lt.s32.totalorder %v1496, 64
    %vm1561 = vcmp.lt.s32.totalorder %v1497, 64
    %vm1562 = vcmp.lt.s32.totalorder %v1498, 64
    %vm1563 = vcmp.lt.s32.totalorder %v1499, 64
    %vm1564 = vcmp.lt.s32.totalorder %v1500, 64
    %vm1565 = vcmp.lt.s32.totalorder %v1501, 64
    %vm1566 = vcmp.lt.s32.totalorder %v1502, 64
    %vm1567 = vcmp.lt.s32.totalorder %v1503, 64
    %vm1568 = vcmp.lt.s32.totalorder %v1504, 64
    %vm1569 = vcmp.lt.s32.totalorder %v1505, 64
    %vm1570 = vcmp.lt.s32.totalorder %v1506, 64
    %vm1571 = vcmp.lt.s32.totalorder %v1507, 64
    %vm1572 = vcmp.lt.s32.totalorder %v1508, 64
    %vm1573 = vcmp.lt.s32.totalorder %v1509, 64
    %vm1574 = vcmp.lt.s32.totalorder %v1510, 64
    %vm1575 = vcmp.lt.s32.totalorder %v1511, 64
    %vm1576 = vcmp.lt.s32.totalorder %v1512, 64
    %vm1577 = vcmp.lt.s32.totalorder %v1513, 64
    %vm1578 = vcmp.lt.s32.totalorder %v1514, 64
    %vm1579 = vcmp.lt.s32.totalorder %v1515, 64
    %vm1580 = vcmp.lt.s32.totalorder %v1516, 64
    %vm1581 = vcmp.lt.s32.totalorder %v1517, 64
    %vm1582 = vcmp.lt.s32.totalorder %v1518, 64
    %vm1583 = vcmp.lt.s32.totalorder %v1519, 64
    %vm1584 = vcmp.lt.s32.totalorder %v1520, 64
    %vm1585 = vcmp.lt.s32.totalorder %v1521, 64
    %vm1586 = vcmp.lt.s32.totalorder %v1522, 64
    %vm1587 = vcmp.lt.s32.totalorder %v1523, 64
    %vm1588 = vcmp.lt.s32.totalorder %v1524, 64
    %vm1589 = vcmp.lt.s32.totalorder %v1525, 64
    %vm1590 = vcmp.lt.s32.totalorder %v1526, 64
    %vm1591 = vmand %vm1527, %vm1559
    %vm1592 = vmand %vm1528, %vm1560
    %vm1593 = vmand %vm1529, %vm1561
    %vm1594 = vmand %vm1530, %vm1562
    %vm1595 = vmand %vm1531, %vm1563
    %vm1596 = vmand %vm1532, %vm1564
    %vm1597 = vmand %vm1533, %vm1565
    %vm1598 = vmand %vm1534, %vm1566
    %vm1599 = vmand %vm1535, %vm1567
    %vm1600 = vmand %vm1536, %vm1568
    %vm1601 = vmand %vm1537, %vm1569
    %vm1602 = vmand %vm1538, %vm1570
    %vm1603 = vmand %vm1539, %vm1571
    %vm1604 = vmand %vm1540, %vm1572
    %vm1605 = vmand %vm1541, %vm1573
    %vm1606 = vmand %vm1542, %vm1574
    %vm1607 = vmand %vm1543, %vm1575
    %vm1608 = vmand %vm1544, %vm1576
    %vm1609 = vmand %vm1545, %vm1577
    %vm1610 = vmand %vm1546, %vm1578
    %vm1611 = vmand %vm1547, %vm1579
    %vm1612 = vmand %vm1548, %vm1580
    %vm1613 = vmand %vm1549, %vm1581
    %vm1614 = vmand %vm1550, %vm1582
    %vm1615 = vmand %vm1551, %vm1583
    %vm1616 = vmand %vm1552, %vm1584
    %vm1617 = vmand %vm1553, %vm1585
    %vm1618 = vmand %vm1554, %vm1586
    %vm1619 = vmand %vm1555, %vm1587
    %vm1620 = vmand %vm1556, %vm1588
    %vm1621 = vmand %vm1557, %vm1589
    %vm1622 = vmand %vm1558, %vm1590
    %v1623 = vadd.s32 %v446, 1
    %v1624 = vadd.s32 %v447, 1
    %v1625 = vadd.s32 %v448, 1
    %v1626 = vadd.s32 %v449, 1
    %v1627 = vadd.s32 %v450, 1
    %v1628 = vadd.s32 %v451, 1
    %v1629 = vadd.s32 %v452, 1
    %v1630 = vadd.s32 %v453, 1
    %v1631 = vadd.s32 %v454, 1
    %v1632 = vadd.s32 %v455, 1
    %v1633 = vadd.s32 %v456, 1
    %v1634 = vadd.s32 %v457, 1
    %v1635 = vadd.s32 %v458, 1
    %v1636 = vadd.s32 %v459, 1
    %v1637 = vadd.s32 %v460, 1
    %v1638 = vadd.s32 %v461, 1
    %v1639 = vadd.s32 %v462, 1
    %v1640 = vadd.s32 %v463, 1
    %v1641 = vadd.s32 %v464, 1
    %v1642 = vadd.s32 %v465, 1
    %v1643 = vadd.s32 %v466, 1
    %v1644 = vadd.s32 %v467, 1
    %v1645 = vadd.s32 %v468, 1
    %v1646 = vadd.s32 %v469, 1
    %v1647 = vadd.s32 %v470, 1
    %v1648 = vadd.s32 %v471, 1
    %v1649 = vadd.s32 %v472, 1
    %v1650 = vadd.s32 %v473, 1
    %v1651 = vadd.s32 %v474, 1
    %v1652 = vadd.s32 %v475, 1
    %v1653 = vadd.s32 %v476, 1
    %v1654 = vadd.s32 %v477, 1
    %vm1655 = vcmp.ge.s32.totalorder %v1623, 0
    %vm1656 = vcmp.ge.s32.totalorder %v1624, 0
    %vm1657 = vcmp.ge.s32.totalorder %v1625, 0
    %vm1658 = vcmp.ge.s32.totalorder %v1626, 0
    %vm1659 = vcmp.ge.s32.totalorder %v1627, 0
    %vm1660 = vcmp.ge.s32.totalorder %v1628, 0
    %vm1661 = vcmp.ge.s32.totalorder %v1629, 0
    %vm1662 = vcmp.ge.s32.totalorder %v1630, 0
    %vm1663 = vcmp.ge.s32.totalorder %v1631, 0
    %vm1664 = vcmp.ge.s32.totalorder %v1632, 0
    %vm1665 = vcmp.ge.s32.totalorder %v1633, 0
    %vm1666 = vcmp.ge.s32.totalorder %v1634, 0
    %vm1667 = vcmp.ge.s32.totalorder %v1635, 0
    %vm1668 = vcmp.ge.s32.totalorder %v1636, 0
    %vm1669 = vcmp.ge.s32.totalorder %v1637, 0
    %vm1670 = vcmp.ge.s32.totalorder %v1638, 0
    %vm1671 = vcmp.ge.s32.totalorder %v1639, 0
    %vm1672 = vcmp.ge.s32.totalorder %v1640, 0
    %vm1673 = vcmp.ge.s32.totalorder %v1641, 0
    %vm1674 = vcmp.ge.s32.totalorder %v1642, 0
    %vm1675 = vcmp.ge.s32.totalorder %v1643, 0
    %vm1676 = vcmp.ge.s32.totalorder %v1644, 0
    %vm1677 = vcmp.ge.s32.totalorder %v1645, 0
    %vm1678 = vcmp.ge.s32.totalorder %v1646, 0
    %vm1679 = vcmp.ge.s32.totalorder %v1647, 0
    %vm1680 = vcmp.ge.s32.totalorder %v1648, 0
    %vm1681 = vcmp.ge.s32.totalorder %v1649, 0
    %vm1682 = vcmp.ge.s32.totalorder %v1650, 0
    %vm1683 = vcmp.ge.s32.totalorder %v1651, 0
    %vm1684 = vcmp.ge.s32.totalorder %v1652, 0
    %vm1685 = vcmp.ge.s32.totalorder %v1653, 0
    %vm1686 = vcmp.ge.s32.totalorder %v1654, 0
    %vm1687 = vcmp.lt.s32.totalorder %v1623, 64
    %vm1688 = vcmp.lt.s32.totalorder %v1624, 64
    %vm1689 = vcmp.lt.s32.totalorder %v1625, 64
    %vm1690 = vcmp.lt.s32.totalorder %v1626, 64
    %vm1691 = vcmp.lt.s32.totalorder %v1627, 64
    %vm1692 = vcmp.lt.s32.totalorder %v1628, 64
    %vm1693 = vcmp.lt.s32.totalorder %v1629, 64
    %vm1694 = vcmp.lt.s32.totalorder %v1630, 64
    %vm1695 = vcmp.lt.s32.totalorder %v1631, 64
    %vm1696 = vcmp.lt.s32.totalorder %v1632, 64
    %vm1697 = vcmp.lt.s32.totalorder %v1633, 64
    %vm1698 = vcmp.lt.s32.totalorder %v1634, 64
    %vm1699 = vcmp.lt.s32.totalorder %v1635, 64
    %vm1700 = vcmp.lt.s32.totalorder %v1636, 64
    %vm1701 = vcmp.lt.s32.totalorder %v1637, 64
    %vm1702 = vcmp.lt.s32.totalorder %v1638, 64
    %vm1703 = vcmp.lt.s32.totalorder %v1639, 64
    %vm1704 = vcmp.lt.s32.totalorder %v1640, 64
    %vm1705 = vcmp.lt.s32.totalorder %v1641, 64
    %vm1706 = vcmp.lt.s32.totalorder %v1642, 64
    %vm1707 = vcmp.lt.s32.totalorder %v1643, 64
    %vm1708 = vcmp.lt.s32.totalorder %v1644, 64
    %vm1709 = vcmp.lt.s32.totalorder %v1645, 64
    %vm1710 = vcmp.lt.s32.totalorder %v1646, 64
    %vm1711 = vcmp.lt.s32.totalorder %v1647, 64
    %vm1712 = vcmp.lt.s32.totalorder %v1648, 64
    %vm1713 = vcmp.lt.s32.totalorder %v1649, 64
    %vm1714 = vcmp.lt.s32.totalorder %v1650, 64
    %vm1715 = vcmp.lt.s32.totalorder %v1651, 64
    %vm1716 = vcmp.lt.s32.totalorder %v1652, 64
    %vm1717 = vcmp.lt.s32.totalorder %v1653, 64
    %vm1718 = vcmp.lt.s32.totalorder %v1654, 64
    %vm1719 = vmand %vm1655, %vm1687
    %vm1720 = vmand %vm1656, %vm1688
    %vm1721 = vmand %vm1657, %vm1689
    %vm1722 = vmand %vm1658, %vm1690
    %vm1723 = vmand %vm1659, %vm1691
    %vm1724 = vmand %vm1660, %vm1692
    %vm1725 = vmand %vm1661, %vm1693
    %vm1726 = vmand %vm1662, %vm1694
    %vm1727 = vmand %vm1663, %vm1695
    %vm1728 = vmand %vm1664, %vm1696
    %vm1729 = vmand %vm1665, %vm1697
    %vm1730 = vmand %vm1666, %vm1698
    %vm1731 = vmand %vm1667, %vm1699
    %vm1732 = vmand %vm1668, %vm1700
    %vm1733 = vmand %vm1669, %vm1701
    %vm1734 = vmand %vm1670, %vm1702
    %vm1735 = vmand %vm1671, %vm1703
    %vm1736 = vmand %vm1672, %vm1704
    %vm1737 = vmand %vm1673, %vm1705
    %vm1738 = vmand %vm1674, %vm1706
    %vm1739 = vmand %vm1675, %vm1707
    %vm1740 = vmand %vm1676, %vm1708
    %vm1741 = vmand %vm1677, %vm1709
    %vm1742 = vmand %vm1678, %vm1710
    %vm1743 = vmand %vm1679, %vm1711
    %vm1744 = vmand %vm1680, %vm1712
    %vm1745 = vmand %vm1681, %vm1713
    %vm1746 = vmand %vm1682, %vm1714
    %vm1747 = vmand %vm1683, %vm1715
    %vm1748 = vmand %vm1684, %vm1716
    %vm1749 = vmand %vm1685, %vm1717
    %vm1750 = vmand %vm1686, %vm1718
    %v1751 = vpack.c.bf16 %v1372, %v1369
    %v1752 = vpack.c.bf16 %v1380, %v1377
    %v1753 = vpack.c.bf16 %v1388, %v1385
    %v1754 = vpack.c.bf16 %v1396, %v1393
    %v1755 = vpack.c.bf16 %v1404, %v1401
    %v1756 = vpack.c.bf16 %v1412, %v1409
    %v1757 = vpack.c.bf16 %v1420, %v1417
    %v1758 = vpack.c.bf16 %v1428, %v1425
    %v1759 = vpack.c.bf16 %v1436, %v1433
    %v1760 = vpack.c.bf16 %v1444, %v1441
    %v1761 = vpack.c.bf16 %v1452, %v1449
    %v1762 = vpack.c.bf16 %v1460, %v1457
    %v1763 = vpack.c.bf16 %v1468, %v1465
    %v1764 = vpack.c.bf16 %v1476, %v1473
    %v1765 = vpack.c.bf16 %v1484, %v1481
    %v1766 = vpack.c.bf16 %v1492, %v1489
    %v1767 = vrot.slane %v1369, 7
    %v1768 = vrot.slane %v1372, 7
    %v1769 = vrot.slane %v1377, 7
    %v1770 = vrot.slane %v1380, 7
    %v1771 = vrot.slane %v1385, 7
    %v1772 = vrot.slane %v1388, 7
    %v1773 = vrot.slane %v1393, 7
    %v1774 = vrot.slane %v1396, 7
    %v1775 = vrot.slane %v1401, 7
    %v1776 = vrot.slane %v1404, 7
    %v1777 = vrot.slane %v1409, 7
    %v1778 = vrot.slane %v1412, 7
    %v1779 = vrot.slane %v1417, 7
    %v1780 = vrot.slane %v1420, 7
    %v1781 = vrot.slane %v1425, 7
    %v1782 = vrot.slane %v1428, 7
    %v1783 = vrot.slane %v1433, 7
    %v1784 = vrot.slane %v1436, 7
    %v1785 = vrot.slane %v1441, 7
    %v1786 = vrot.slane %v1444, 7
    %v1787 = vrot.slane %v1449, 7
    %v1788 = vrot.slane %v1452, 7
    %v1789 = vrot.slane %v1457, 7
    %v1790 = vrot.slane %v1460, 7
    %v1791 = vrot.slane %v1465, 7
    %v1792 = vrot.slane %v1468, 7
    %v1793 = vrot.slane %v1473, 7
    %v1794 = vrot.slane %v1476, 7
    %v1795 = vrot.slane %v1481, 7
    %v1796 = vrot.slane %v1484, 7
    %v1797 = vrot.slane %v1489, 7
    %v1798 = vrot.slane %v1492, 7
    %vm1799 = vcmp.lt.s32.totalorder %v59, 1
    %v1800 = vsel %vm1799, %v1797, %v1798
    %v1801 = vsel %vm1799, %v1796, %v1797
    %v1802 = vsel %vm1799, %v1795, %v1796
    %v1803 = vsel %vm1799, %v1794, %v1795
    %v1804 = vsel %vm1799, %v1793, %v1794
    %v1805 = vsel %vm1799, %v1792, %v1793
    %v1806 = vsel %vm1799, %v1791, %v1792
    %v1807 = vsel %vm1799, %v1790, %v1791
    %v1808 = vsel %vm1799, %v1789, %v1790
    %v1809 = vsel %vm1799, %v1788, %v1789
    %v1810 = vsel %vm1799, %v1787, %v1788
    %v1811 = vsel %vm1799, %v1786, %v1787
    %v1812 = vsel %vm1799, %v1785, %v1786
    %v1813 = vsel %vm1799, %v1784, %v1785
    %v1814 = vsel %vm1799, %v1783, %v1784
    %v1815 = vsel %vm1799, %v1782, %v1783
    %v1816 = vsel %vm1799, %v1781, %v1782
    %v1817 = vsel %vm1799, %v1780, %v1781
    %v1818 = vsel %vm1799, %v1779, %v1780
    %v1819 = vsel %vm1799, %v1778, %v1779
    %v1820 = vsel %vm1799, %v1777, %v1778
    %v1821 = vsel %vm1799, %v1776, %v1777
    %v1822 = vsel %vm1799, %v1775, %v1776
    %v1823 = vsel %vm1799, %v1774, %v1775
    %v1824 = vsel %vm1799, %v1773, %v1774
    %v1825 = vsel %vm1799, %v1772, %v1773
    %v1826 = vsel %vm1799, %v1771, %v1772
    %v1827 = vsel %vm1799, %v1770, %v1771
    %v1828 = vsel %vm1799, %v1769, %v1770
    %v1829 = vsel %vm1799, %v1768, %v1769
    %v1830 = vsel %vm1799, %v1767, %v1768
    %v1831 = vsel %vm1799, %v1798, %v1767
    %v1832 = vsel %vm1591, %v1831, 0.0
    %v1833 = vsel %vm1592, %v1830, 0.0
    %v1834 = vsel %vm1593, %v1829, 0.0
    %v1835 = vsel %vm1594, %v1828, 0.0
    %v1836 = vsel %vm1595, %v1827, 0.0
    %v1837 = vsel %vm1596, %v1826, 0.0
    %v1838 = vsel %vm1597, %v1825, 0.0
    %v1839 = vsel %vm1598, %v1824, 0.0
    %v1840 = vsel %vm1599, %v1823, 0.0
    %v1841 = vsel %vm1600, %v1822, 0.0
    %v1842 = vsel %vm1601, %v1821, 0.0
    %v1843 = vsel %vm1602, %v1820, 0.0
    %v1844 = vsel %vm1603, %v1819, 0.0
    %v1845 = vsel %vm1604, %v1818, 0.0
    %v1846 = vsel %vm1605, %v1817, 0.0
    %v1847 = vsel %vm1606, %v1816, 0.0
    %v1848 = vsel %vm1607, %v1815, 0.0
    %v1849 = vsel %vm1608, %v1814, 0.0
    %v1850 = vsel %vm1609, %v1813, 0.0
    %v1851 = vsel %vm1610, %v1812, 0.0
    %v1852 = vsel %vm1611, %v1811, 0.0
    %v1853 = vsel %vm1612, %v1810, 0.0
    %v1854 = vsel %vm1613, %v1809, 0.0
    %v1855 = vsel %vm1614, %v1808, 0.0
    %v1856 = vsel %vm1615, %v1807, 0.0
    %v1857 = vsel %vm1616, %v1806, 0.0
    %v1858 = vsel %vm1617, %v1805, 0.0
    %v1859 = vsel %vm1618, %v1804, 0.0
    %v1860 = vsel %vm1619, %v1803, 0.0
    %v1861 = vsel %vm1620, %v1802, 0.0
    %v1862 = vsel %vm1621, %v1801, 0.0
    %v1863 = vsel %vm1622, %v1800, 0.0
    %v1864 = vpack.c.bf16 %v1833, %v1832
    %v1865 = vpack.c.bf16 %v1835, %v1834
    %v1866 = vpack.c.bf16 %v1837, %v1836
    %v1867 = vpack.c.bf16 %v1839, %v1838
    %v1868 = vpack.c.bf16 %v1841, %v1840
    %v1869 = vpack.c.bf16 %v1843, %v1842
    %v1870 = vpack.c.bf16 %v1845, %v1844
    %v1871 = vpack.c.bf16 %v1847, %v1846
    %v1872 = vpack.c.bf16 %v1849, %v1848
    %v1873 = vpack.c.bf16 %v1851, %v1850
    %v1874 = vpack.c.bf16 %v1853, %v1852
    %v1875 = vpack.c.bf16 %v1855, %v1854
    %v1876 = vpack.c.bf16 %v1857, %v1856
    %v1877 = vpack.c.bf16 %v1859, %v1858
    %v1878 = vpack.c.bf16 %v1861, %v1860
    %v1879 = vpack.c.bf16 %v1863, %v1862
    %v1880 = vld [vmem:[#allocation2 + $0x94] sm:$0xf]
    %v1881 = vld [vmem:[#allocation2 + $0x98] sm:$0xf]
    %v1882 = vld [vmem:[#allocation2 + $0x9c] sm:$0xf]
    %v1883 = vld [vmem:[#allocation2 + $0xa0] sm:$0xf]
    %v1884 = vld [vmem:[#allocation2 + $0xc4] sm:$0xf]
    %v1885 = vld [vmem:[#allocation2 + $0xc8] sm:$0xf]
    %v1886 = vld [vmem:[#allocation2 + $0xcc] sm:$0xf]
    %v1887 = vld [vmem:[#allocation2 + $0xd0] sm:$0xf]
    %v1888 = vld [vmem:[#allocation2 + $0xa4] sm:$0xf]
    %v1889 = vld [vmem:[#allocation2 + $0xa8] sm:$0xf]
    %v1890 = vld [vmem:[#allocation2 + $0xac] sm:$0xf]
    %v1891 = vld [vmem:[#allocation2 + $0xb0] sm:$0xf]
    %v1896 = vunpack.c.l.b16 %v1888
    %v1897 = vunpack.c.l.b16 %v1889
    %v1898 = vunpack.c.l.b16 %v1890
    %v1899 = vunpack.c.l.b16 %v1891
    %v1900 = vpack.c.b16 %v1897, %v1896
    %v1901 = vpack.c.b16 %v1899, %v1898
    %v1905 = vsel %vm1285, %v1751, 0
    %v1908 = vsel %vm1285, %v1752, 0
    %v1911 = vsel %vm1285, %v1753, 0
    %v1914 = vsel %vm1285, %v1754, 0
    %v1917 = vsel %vm1285, %v1755, 0
    %v1920 = vsel %vm1285, %v1756, 0
    %v1923 = vsel %vm1285, %v1757, 0
    %v1926 = vsel %vm1285, %v1758, 0
    %v1929 = vsel %vm1285, %v1759, 0
    %v1932 = vsel %vm1285, %v1760, 0
    %v1935 = vsel %vm1285, %v1761, 0
    %v1938 = vsel %vm1285, %v1762, 0
    %v1941 = vsel %vm1285, %v1763, 0
    %v1944 = vsel %vm1285, %v1764, 0
    %v1947 = vsel %vm1285, %v1765, 0
    %v1950 = vsel %vm1285, %v1766, 0
    %1952 = vmatprep.subr.bf16.mxu0 0
    %1953 = vmatpush1.bf16.msra.mxu0 0
    %1954 = vmatprep.subr.bf16.mxu0 0
    %1955 = vmatpush1.bf16.msra.mxu0 0
    %1956 = vmatprep.subr.bf16.mxu0 0
    %1957 = vmatpush1.bf16.msra.mxu0 0
    %1958 = vmatprep.subr.bf16.mxu0 0
    %1959 = vmatpush1.bf16.msra.mxu0 0
    %1960 = vmatprep.subr.bf16.mxu0 0
    %1961 = vmatpush1.bf16.msra.mxu0 0
    %1962 = vmatprep.subr.bf16.mxu0 0
    %1963 = vmatpush1.bf16.msra.mxu0 0
    %1964 = vmatprep.subr.bf16.mxu0 0
    %1965 = vmatpush1.bf16.msra.mxu0 %v1901
    %1966 = vmatprep.subr.bf16.mxu0 0
    %1967 = vmatpush1.bf16.msra.mxu0 %v1900
    %1968 = vmatprep.subr.bf16.mxu0 0
    %1969 = vmatpush2.bf16.msra.mxu0 0
    %1970 = vmatprep.subr.bf16.mxu0 0
    %1971 = vmatpush2.bf16.msra.mxu0 0
    %1972 = vmatprep.subr.bf16.mxu0 0
    %1973 = vmatpush2.bf16.msra.mxu0 0
    %1974 = vmatprep.subr.bf16.mxu0 0
    %1975 = vmatpush2.bf16.msra.mxu0 0
    %1976 = vmatprep.subr.bf16.mxu0 0
    %1977 = vmatpush2.bf16.msra.mxu0 0
    %1978 = vmatprep.subr.bf16.mxu0 0
    %1979 = vmatpush2.bf16.msra.mxu0 0
    %1980 = vmatprep.subr.bf16.mxu0 0
    %1981 = vmatpush2.bf16.msra.mxu0 0
    %1982 = vmatprep.subr.bf16.mxu0 0
    %1983 = vmatpush2.bf16.msra.mxu0 0
    %1984 = vmatprep.mubr.bf16.mxu0 0
    %1985 = vmatmul.mubr.bf16.gmra.mxu0 %v1905
    %v1986 = vpop.f32.mrf.mxu0
    %v1987 = vadd.f32 0.0, %v1986
    %v1988 = vpop.f32.mrf.mxu0
    %v1989 = vpop.f32.mrf.mxu0
    %v1990 = vadd.f32 0.0, %v1989
    %v1991 = vpop.f32.mrf.mxu0
    %1992 = vmatprep.mubr.bf16.mxu0 0
    %1993 = vmatmul.mubr.bf16.gmra.mxu0 %v1908
    %v1994 = vpop.f32.mrf.mxu0
    %v1995 = vadd.f32 0.0, %v1994
    %v1996 = vpop.f32.mrf.mxu0
    %v1997 = vpop.f32.mrf.mxu0
    %v1998 = vadd.f32 0.0, %v1997
    %v1999 = vpop.f32.mrf.mxu0
    %2000 = vmatprep.mubr.bf16.mxu0 0
    %2001 = vmatmul.mubr.bf16.gmra.mxu0 %v1911
    %v2002 = vpop.f32.mrf.mxu0
    %v2003 = vadd.f32 0.0, %v2002
    %v2004 = vpop.f32.mrf.mxu0
    %v2005 = vpop.f32.mrf.mxu0
    %v2006 = vadd.f32 0.0, %v2005
    %v2007 = vpop.f32.mrf.mxu0
    %2008 = vmatprep.mubr.bf16.mxu0 0
    %2009 = vmatmul.mubr.bf16.gmra.mxu0 %v1914
    %v2010 = vpop.f32.mrf.mxu0
    %v2011 = vadd.f32 0.0, %v2010
    %v2012 = vpop.f32.mrf.mxu0
    %v2013 = vpop.f32.mrf.mxu0
    %v2014 = vadd.f32 0.0, %v2013
    %v2015 = vpop.f32.mrf.mxu0
    %2016 = vmatprep.mubr.bf16.mxu0 0
    %2017 = vmatmul.mubr.bf16.gmra.mxu0 %v1917
    %v2018 = vpop.f32.mrf.mxu0
    %v2019 = vadd.f32 0.0, %v2018
    %v2020 = vpop.f32.mrf.mxu0
    %v2021 = vpop.f32.mrf.mxu0
    %v2022 = vadd.f32 0.0, %v2021
    %v2023 = vpop.f32.mrf.mxu0
    %2024 = vmatprep.mubr.bf16.mxu0 0
    %2025 = vmatmul.mubr.bf16.gmra.mxu0 %v1920
    %v2026 = vpop.f32.mrf.mxu0
    %v2027 = vadd.f32 0.0, %v2026
    %v2028 = vpop.f32.mrf.mxu0
    %v2029 = vpop.f32.mrf.mxu0
    %v2030 = vadd.f32 0.0, %v2029
    %v2031 = vpop.f32.mrf.mxu0
    %2032 = vmatprep.mubr.bf16.mxu0 0
    %2033 = vmatmul.mubr.bf16.gmra.mxu0 %v1923
    %v2034 = vpop.f32.mrf.mxu0
    %v2035 = vadd.f32 0.0, %v2034
    %v2036 = vpop.f32.mrf.mxu0
    %v2037 = vpop.f32.mrf.mxu0
    %v2038 = vadd.f32 0.0, %v2037
    %v2039 = vpop.f32.mrf.mxu0
    %2040 = vmatprep.mubr.bf16.mxu0 0
    %2041 = vmatmul.mubr.bf16.gmra.mxu0 %v1926
    %v2042 = vpop.f32.mrf.mxu0
    %v2043 = vadd.f32 0.0, %v2042
    %v2044 = vpop.f32.mrf.mxu0
    %v2045 = vpop.f32.mrf.mxu0
    %v2046 = vadd.f32 0.0, %v2045
    %v2047 = vpop.f32.mrf.mxu0
    %2048 = vmatprep.mubr.bf16.mxu0 0
    %2049 = vmatmul.mubr.bf16.gmra.mxu0 %v1929
    %v2050 = vpop.f32.mrf.mxu0
    %v2051 = vadd.f32 0.0, %v2050
    %v2052 = vpop.f32.mrf.mxu0
    %v2053 = vpop.f32.mrf.mxu0
    %v2054 = vadd.f32 0.0, %v2053
    %v2055 = vpop.f32.mrf.mxu0
    %2056 = vmatprep.mubr.bf16.mxu0 0
    %2057 = vmatmul.mubr.bf16.gmra.mxu0 %v1932
    %v2058 = vpop.f32.mrf.mxu0
    %v2059 = vadd.f32 0.0, %v2058
    %v2060 = vpop.f32.mrf.mxu0
    %v2061 = vpop.f32.mrf.mxu0
    %v2062 = vadd.f32 0.0, %v2061
    %v2063 = vpop.f32.mrf.mxu0
    %2064 = vmatprep.mubr.bf16.mxu0 0
    %2065 = vmatmul.mubr.bf16.gmra.mxu0 %v1935
    %v2066 = vpop.f32.mrf.mxu0
    %v2067 = vadd.f32 0.0, %v2066
    %v2068 = vpop.f32.mrf.mxu0
    %v2069 = vpop.f32.mrf.mxu0
    %v2070 = vadd.f32 0.0, %v2069
    %v2071 = vpop.f32.mrf.mxu0
    %2072 = vmatprep.mubr.bf16.mxu0 0
    %2073 = vmatmul.mubr.bf16.gmra.mxu0 %v1938
    %v2074 = vpop.f32.mrf.mxu0
    %v2075 = vadd.f32 0.0, %v2074
    %v2076 = vpop.f32.mrf.mxu0
    %v2077 = vpop.f32.mrf.mxu0
    %v2078 = vadd.f32 0.0, %v2077
    %v2079 = vpop.f32.mrf.mxu0
    %2080 = vmatprep.mubr.bf16.mxu0 0
    %2081 = vmatmul.mubr.bf16.gmra.mxu0 %v1941
    %v2082 = vpop.f32.mrf.mxu0
    %v2083 = vadd.f32 0.0, %v2082
    %v2084 = vpop.f32.mrf.mxu0
    %v2085 = vpop.f32.mrf.mxu0
    %v2086 = vadd.f32 0.0, %v2085
    %v2087 = vpop.f32.mrf.mxu0
    %2088 = vmatprep.mubr.bf16.mxu0 0
    %2089 = vmatmul.mubr.bf16.gmra.mxu0 %v1944
    %v2090 = vpop.f32.mrf.mxu0
    %v2091 = vadd.f32 0.0, %v2090
    %v2092 = vpop.f32.mrf.mxu0
    %v2093 = vpop.f32.mrf.mxu0
    %v2094 = vadd.f32 0.0, %v2093
    %v2095 = vpop.f32.mrf.mxu0
    %2096 = vmatprep.mubr.bf16.mxu0 0
    %2097 = vmatmul.mubr.bf16.gmra.mxu0 %v1947
    %v2098 = vpop.f32.mrf.mxu0
    %v2099 = vadd.f32 0.0, %v2098
    %v2100 = vpop.f32.mrf.mxu0
    %v2101 = vpop.f32.mrf.mxu0
    %v2102 = vadd.f32 0.0, %v2101
    %v2103 = vpop.f32.mrf.mxu0
    %2104 = vmatprep.mubr.bf16.mxu0 0
    %2105 = vmatmul.mubr.bf16.gmra.mxu0 %v1950
    %v2106 = vpop.f32.mrf.mxu0
    %v2107 = vadd.f32 0.0, %v2106
    %v2108 = vpop.f32.mrf.mxu0
    %v2109 = vpop.f32.mrf.mxu0
    %v2110 = vadd.f32 0.0, %v2109
    %v2111 = vpop.f32.mrf.mxu0
    %2112 = vdwg.mxu0
    %v2117 = vunpack.c.l.b16 %v1880
    %v2118 = vunpack.c.l.b16 %v1881
    %v2119 = vunpack.c.l.b16 %v1882
    %v2120 = vunpack.c.l.b16 %v1883
    %v2121 = vpack.c.b16 %v2118, %v2117
    %v2122 = vpack.c.b16 %v2120, %v2119
    %v2126 = vsel %vm1285, %v1864, 0
    %v2129 = vsel %vm1285, %v1865, 0
    %v2132 = vsel %vm1285, %v1866, 0
    %v2135 = vsel %vm1285, %v1867, 0
    %v2138 = vsel %vm1285, %v1868, 0
    %v2141 = vsel %vm1285, %v1869, 0
    %v2144 = vsel %vm1285, %v1870, 0
    %v2147 = vsel %vm1285, %v1871, 0
    %v2150 = vsel %vm1285, %v1872, 0
    %v2153 = vsel %vm1285, %v1873, 0
    %v2156 = vsel %vm1285, %v1874, 0
    %v2159 = vsel %vm1285, %v1875, 0
    %v2162 = vsel %vm1285, %v1876, 0
    %v2165 = vsel %vm1285, %v1877, 0
    %v2168 = vsel %vm1285, %v1878, 0
    %v2171 = vsel %vm1285, %v1879, 0
    %2173 = vmatprep.subr.bf16.mxu0 0
    %2174 = vmatpush1.bf16.msra.mxu0 0
    %2175 = vmatprep.subr.bf16.mxu0 0
    %2176 = vmatpush1.bf16.msra.mxu0 0
    %2177 = vmatprep.subr.bf16.mxu0 0
    %2178 = vmatpush1.bf16.msra.mxu0 0
    %2179 = vmatprep.subr.bf16.mxu0 0
    %2180 = vmatpush1.bf16.msra.mxu0 0
    %2181 = vmatprep.subr.bf16.mxu0 0
    %2182 = vmatpush1.bf16.msra.mxu0 0
    %2183 = vmatprep.subr.bf16.mxu0 0
    %2184 = vmatpush1.bf16.msra.mxu0 0
    %2185 = vmatprep.subr.bf16.mxu0 0
    %2186 = vmatpush1.bf16.msra.mxu0 %v2122
    %2187 = vmatprep.subr.bf16.mxu0 0
    %2188 = vmatpush1.bf16.msra.mxu0 %v2121
    %2189 = vmatprep.subr.bf16.mxu0 0
    %2190 = vmatpush2.bf16.msra.mxu0 0
    %2191 = vmatprep.subr.bf16.mxu0 0
    %2192 = vmatpush2.bf16.msra.mxu0 0
    %2193 = vmatprep.subr.bf16.mxu0 0
    %2194 = vmatpush2.bf16.msra.mxu0 0
    %2195 = vmatprep.subr.bf16.mxu0 0
    %2196 = vmatpush2.bf16.msra.mxu0 0
    %2197 = vmatprep.subr.bf16.mxu0 0
    %2198 = vmatpush2.bf16.msra.mxu0 0
    %2199 = vmatprep.subr.bf16.mxu0 0
    %2200 = vmatpush2.bf16.msra.mxu0 0
    %2201 = vmatprep.subr.bf16.mxu0 0
    %2202 = vmatpush2.bf16.msra.mxu0 0
    %2203 = vmatprep.subr.bf16.mxu0 0
    %2204 = vmatpush2.bf16.msra.mxu0 0
    %2205 = vmatprep.mubr.bf16.mxu0 0
    %2206 = vmatmul.mubr.bf16.gmra.mxu0 %v2126
    %v2207 = vpop.f32.mrf.mxu0
    %v2208 = vadd.f32 %v1987, %v2207
    %v2209 = vpop.f32.mrf.mxu0
    %v2210 = vpop.f32.mrf.mxu0
    %v2211 = vadd.f32 %v1990, %v2210
    %v2212 = vpop.f32.mrf.mxu0
    %2213 = vmatprep.mubr.bf16.mxu0 0
    %2214 = vmatmul.mubr.bf16.gmra.mxu0 %v2129
    %v2215 = vpop.f32.mrf.mxu0
    %v2216 = vadd.f32 %v1995, %v2215
    %v2217 = vpop.f32.mrf.mxu0
    %v2218 = vpop.f32.mrf.mxu0
    %v2219 = vadd.f32 %v1998, %v2218
    %v2220 = vpop.f32.mrf.mxu0
    %2221 = vmatprep.mubr.bf16.mxu0 0
    %2222 = vmatmul.mubr.bf16.gmra.mxu0 %v2132
    %v2223 = vpop.f32.mrf.mxu0
    %v2224 = vadd.f32 %v2003, %v2223
    %v2225 = vpop.f32.mrf.mxu0
    %v2226 = vpop.f32.mrf.mxu0
    %v2227 = vadd.f32 %v2006, %v2226
    %v2228 = vpop.f32.mrf.mxu0
    %2229 = vmatprep.mubr.bf16.mxu0 0
    %2230 = vmatmul.mubr.bf16.gmra.mxu0 %v2135
    %v2231 = vpop.f32.mrf.mxu0
    %v2232 = vadd.f32 %v2011, %v2231
    %v2233 = vpop.f32.mrf.mxu0
    %v2234 = vpop.f32.mrf.mxu0
    %v2235 = vadd.f32 %v2014, %v2234
    %v2236 = vpop.f32.mrf.mxu0
    %2237 = vmatprep.mubr.bf16.mxu0 0
    %2238 = vmatmul.mubr.bf16.gmra.mxu0 %v2138
    %v2239 = vpop.f32.mrf.mxu0
    %v2240 = vadd.f32 %v2019, %v2239
    %v2241 = vpop.f32.mrf.mxu0
    %v2242 = vpop.f32.mrf.mxu0
    %v2243 = vadd.f32 %v2022, %v2242
    %v2244 = vpop.f32.mrf.mxu0
    %2245 = vmatprep.mubr.bf16.mxu0 0
    %2246 = vmatmul.mubr.bf16.gmra.mxu0 %v2141
    %v2247 = vpop.f32.mrf.mxu0
    %v2248 = vadd.f32 %v2027, %v2247
    %v2249 = vpop.f32.mrf.mxu0
    %v2250 = vpop.f32.mrf.mxu0
    %v2251 = vadd.f32 %v2030, %v2250
    %v2252 = vpop.f32.mrf.mxu0
    %2253 = vmatprep.mubr.bf16.mxu0 0
    %2254 = vmatmul.mubr.bf16.gmra.mxu0 %v2144
    %v2255 = vpop.f32.mrf.mxu0
    %v2256 = vadd.f32 %v2035, %v2255
    %v2257 = vpop.f32.mrf.mxu0
    %v2258 = vpop.f32.mrf.mxu0
    %v2259 = vadd.f32 %v2038, %v2258
    %v2260 = vpop.f32.mrf.mxu0
    %2261 = vmatprep.mubr.bf16.mxu0 0
    %2262 = vmatmul.mubr.bf16.gmra.mxu0 %v2147
    %v2263 = vpop.f32.mrf.mxu0
    %v2264 = vadd.f32 %v2043, %v2263
    %v2265 = vpop.f32.mrf.mxu0
    %v2266 = vpop.f32.mrf.mxu0
    %v2267 = vadd.f32 %v2046, %v2266
    %v2268 = vpop.f32.mrf.mxu0
    %2269 = vmatprep.mubr.bf16.mxu0 0
    %2270 = vmatmul.mubr.bf16.gmra.mxu0 %v2150
    %v2271 = vpop.f32.mrf.mxu0
    %v2272 = vadd.f32 %v2051, %v2271
    %v2273 = vpop.f32.mrf.mxu0
    %v2274 = vpop.f32.mrf.mxu0
    %v2275 = vadd.f32 %v2054, %v2274
    %v2276 = vpop.f32.mrf.mxu0
    %2277 = vmatprep.mubr.bf16.mxu0 0
    %2278 = vmatmul.mubr.bf16.gmra.mxu0 %v2153
    %v2279 = vpop.f32.mrf.mxu0
    %v2280 = vadd.f32 %v2059, %v2279
    %v2281 = vpop.f32.mrf.mxu0
    %v2282 = vpop.f32.mrf.mxu0
    %v2283 = vadd.f32 %v2062, %v2282
    %v2284 = vpop.f32.mrf.mxu0
    %2285 = vmatprep.mubr.bf16.mxu0 0
    %2286 = vmatmul.mubr.bf16.gmra.mxu0 %v2156
    %v2287 = vpop.f32.mrf.mxu0
    %v2288 = vadd.f32 %v2067, %v2287
    %v2289 = vpop.f32.mrf.mxu0
    %v2290 = vpop.f32.mrf.mxu0
    %v2291 = vadd.f32 %v2070, %v2290
    %v2292 = vpop.f32.mrf.mxu0
    %2293 = vmatprep.mubr.bf16.mxu0 0
    %2294 = vmatmul.mubr.bf16.gmra.mxu0 %v2159
    %v2295 = vpop.f32.mrf.mxu0
    %v2296 = vadd.f32 %v2075, %v2295
    %v2297 = vpop.f32.mrf.mxu0
    %v2298 = vpop.f32.mrf.mxu0
    %v2299 = vadd.f32 %v2078, %v2298
    %v2300 = vpop.f32.mrf.mxu0
    %2301 = vmatprep.mubr.bf16.mxu0 0
    %2302 = vmatmul.mubr.bf16.gmra.mxu0 %v2162
    %v2303 = vpop.f32.mrf.mxu0
    %v2304 = vadd.f32 %v2083, %v2303
    %v2305 = vpop.f32.mrf.mxu0
    %v2306 = vpop.f32.mrf.mxu0
    %v2307 = vadd.f32 %v2086, %v2306
    %v2308 = vpop.f32.mrf.mxu0
    %2309 = vmatprep.mubr.bf16.mxu0 0
    %2310 = vmatmul.mubr.bf16.gmra.mxu0 %v2165
    %v2311 = vpop.f32.mrf.mxu0
    %v2312 = vadd.f32 %v2091, %v2311
    %v2313 = vpop.f32.mrf.mxu0
    %v2314 = vpop.f32.mrf.mxu0
    %v2315 = vadd.f32 %v2094, %v2314
    %v2316 = vpop.f32.mrf.mxu0
    %2317 = vmatprep.mubr.bf16.mxu0 0
    %2318 = vmatmul.mubr.bf16.gmra.mxu0 %v2168
    %v2319 = vpop.f32.mrf.mxu0
    %v2320 = vadd.f32 %v2099, %v2319
    %v2321 = vpop.f32.mrf.mxu0
    %v2322 = vpop.f32.mrf.mxu0
    %v2323 = vadd.f32 %v2102, %v2322
    %v2324 = vpop.f32.mrf.mxu0
    %2325 = vmatprep.mubr.bf16.mxu0 0
    %2326 = vmatmul.mubr.bf16.gmra.mxu0 %v2171
    %v2327 = vpop.f32.mrf.mxu0
    %v2328 = vadd.f32 %v2107, %v2327
    %v2329 = vpop.f32.mrf.mxu0
    %v2330 = vpop.f32.mrf.mxu0
    %v2331 = vadd.f32 %v2110, %v2330
    %v2332 = vpop.f32.mrf.mxu0
    %2333 = vdwg.mxu0
    %v2334 = vld [vmem:[#allocation2 + $0xd4] sm:$0xf]
    %v2335 = vld [vmem:[#allocation2 + $0xd8] sm:$0xf]
    %v2336 = vld [vmem:[#allocation2 + $0xdc] sm:$0xf]
    %v2337 = vld [vmem:[#allocation2 + $0xe0] sm:$0xf]
    %v2342 = vunpack.c.l.b16 %v2334
    %v2343 = vunpack.c.l.b16 %v2335
    %v2344 = vunpack.c.l.b16 %v2336
    %v2345 = vunpack.c.l.b16 %v2337
    %v2346 = vpack.c.b16 %v2343, %v2342
    %v2347 = vpack.c.b16 %v2345, %v2344
    %2350 = vmatprep.subr.bf16.mxu0 0
    %2351 = vmatpush1.bf16.msra.mxu0 0
    %2352 = vmatprep.subr.bf16.mxu0 0
    %2353 = vmatpush1.bf16.msra.mxu0 0
    %2354 = vmatprep.subr.bf16.mxu0 0
    %2355 = vmatpush1.bf16.msra.mxu0 0
    %2356 = vmatprep.subr.bf16.mxu0 0
    %2357 = vmatpush1.bf16.msra.mxu0 0
    %2358 = vmatprep.subr.bf16.mxu0 0
    %2359 = vmatpush1.bf16.msra.mxu0 0
    %2360 = vmatprep.subr.bf16.mxu0 0
    %2361 = vmatpush1.bf16.msra.mxu0 0
    %2362 = vmatprep.subr.bf16.mxu0 0
    %2363 = vmatpush1.bf16.msra.mxu0 %v2347
    %2364 = vmatprep.subr.bf16.mxu0 0
    %2365 = vmatpush1.bf16.msra.mxu0 %v2346
    %2366 = vmatprep.subr.bf16.mxu0 0
    %2367 = vmatpush2.bf16.msra.mxu0 0
    %2368 = vmatprep.subr.bf16.mxu0 0
    %2369 = vmatpush2.bf16.msra.mxu0 0
    %2370 = vmatprep.subr.bf16.mxu0 0
    %2371 = vmatpush2.bf16.msra.mxu0 0
    %2372 = vmatprep.subr.bf16.mxu0 0
    %2373 = vmatpush2.bf16.msra.mxu0 0
    %2374 = vmatprep.subr.bf16.mxu0 0
    %2375 = vmatpush2.bf16.msra.mxu0 0
    %2376 = vmatprep.subr.bf16.mxu0 0
    %2377 = vmatpush2.bf16.msra.mxu0 0
    %2378 = vmatprep.subr.bf16.mxu0 0
    %2379 = vmatpush2.bf16.msra.mxu0 0
    %2380 = vmatprep.subr.bf16.mxu0 0
    %2381 = vmatpush2.bf16.msra.mxu0 0
    %2382 = vmatprep.mubr.bf16.mxu0 0
    %2383 = vmatmul.mubr.bf16.gmra.mxu0 %v1905
    %v2384 = vpop.f32.mrf.mxu0
    %v2385 = vadd.f32 0.0, %v2384
    %v2386 = vpop.f32.mrf.mxu0
    %v2387 = vpop.f32.mrf.mxu0
    %v2388 = vadd.f32 0.0, %v2387
    %v2389 = vpop.f32.mrf.mxu0
    %2390 = vmatprep.mubr.bf16.mxu0 0
    %2391 = vmatmul.mubr.bf16.gmra.mxu0 %v1908
    %v2392 = vpop.f32.mrf.mxu0
    %v2393 = vadd.f32 0.0, %v2392
    %v2394 = vpop.f32.mrf.mxu0
    %v2395 = vpop.f32.mrf.mxu0
    %v2396 = vadd.f32 0.0, %v2395
    %v2397 = vpop.f32.mrf.mxu0
    %2398 = vmatprep.mubr.bf16.mxu0 0
    %2399 = vmatmul.mubr.bf16.gmra.mxu0 %v1911
    %v2400 = vpop.f32.mrf.mxu0
    %v2401 = vadd.f32 0.0, %v2400
    %v2402 = vpop.f32.mrf.mxu0
    %v2403 = vpop.f32.mrf.mxu0
    %v2404 = vadd.f32 0.0, %v2403
    %v2405 = vpop.f32.mrf.mxu0
    %2406 = vmatprep.mubr.bf16.mxu0 0
    %2407 = vmatmul.mubr.bf16.gmra.mxu0 %v1914
    %v2408 = vpop.f32.mrf.mxu0
    %v2409 = vadd.f32 0.0, %v2408
    %v2410 = vpop.f32.mrf.mxu0
    %v2411 = vpop.f32.mrf.mxu0
    %v2412 = vadd.f32 0.0, %v2411
    %v2413 = vpop.f32.mrf.mxu0
    %2414 = vmatprep.mubr.bf16.mxu0 0
    %2415 = vmatmul.mubr.bf16.gmra.mxu0 %v1917
    %v2416 = vpop.f32.mrf.mxu0
    %v2417 = vadd.f32 0.0, %v2416
    %v2418 = vpop.f32.mrf.mxu0
    %v2419 = vpop.f32.mrf.mxu0
    %v2420 = vadd.f32 0.0, %v2419
    %v2421 = vpop.f32.mrf.mxu0
    %2422 = vmatprep.mubr.bf16.mxu0 0
    %2423 = vmatmul.mubr.bf16.gmra.mxu0 %v1920
    %v2424 = vpop.f32.mrf.mxu0
    %v2425 = vadd.f32 0.0, %v2424
    %v2426 = vpop.f32.mrf.mxu0
    %v2427 = vpop.f32.mrf.mxu0
    %v2428 = vadd.f32 0.0, %v2427
    %v2429 = vpop.f32.mrf.mxu0
    %2430 = vmatprep.mubr.bf16.mxu0 0
    %2431 = vmatmul.mubr.bf16.gmra.mxu0 %v1923
    %v2432 = vpop.f32.mrf.mxu0
    %v2433 = vadd.f32 0.0, %v2432
    %v2434 = vpop.f32.mrf.mxu0
    %v2435 = vpop.f32.mrf.mxu0
    %v2436 = vadd.f32 0.0, %v2435
    %v2437 = vpop.f32.mrf.mxu0
    %2438 = vmatprep.mubr.bf16.mxu0 0
    %2439 = vmatmul.mubr.bf16.gmra.mxu0 %v1926
    %v2440 = vpop.f32.mrf.mxu0
    %v2441 = vadd.f32 0.0, %v2440
    %v2442 = vpop.f32.mrf.mxu0
    %v2443 = vpop.f32.mrf.mxu0
    %v2444 = vadd.f32 0.0, %v2443
    %v2445 = vpop.f32.mrf.mxu0
    %2446 = vmatprep.mubr.bf16.mxu0 0
    %2447 = vmatmul.mubr.bf16.gmra.mxu0 %v1929
    %v2448 = vpop.f32.mrf.mxu0
    %v2449 = vadd.f32 0.0, %v2448
    %v2450 = vpop.f32.mrf.mxu0
    %v2451 = vpop.f32.mrf.mxu0
    %v2452 = vadd.f32 0.0, %v2451
    %v2453 = vpop.f32.mrf.mxu0
    %2454 = vmatprep.mubr.bf16.mxu0 0
    %2455 = vmatmul.mubr.bf16.gmra.mxu0 %v1932
    %v2456 = vpop.f32.mrf.mxu0
    %v2457 = vadd.f32 0.0, %v2456
    %v2458 = vpop.f32.mrf.mxu0
    %v2459 = vpop.f32.mrf.mxu0
    %v2460 = vadd.f32 0.0, %v2459
    %v2461 = vpop.f32.mrf.mxu0
    %2462 = vmatprep.mubr.bf16.mxu0 0
    %2463 = vmatmul.mubr.bf16.gmra.mxu0 %v1935
    %v2464 = vpop.f32.mrf.mxu0
    %v2465 = vadd.f32 0.0, %v2464
    %v2466 = vpop.f32.mrf.mxu0
    %v2467 = vpop.f32.mrf.mxu0
    %v2468 = vadd.f32 0.0, %v2467
    %v2469 = vpop.f32.mrf.mxu0
    %2470 = vmatprep.mubr.bf16.mxu0 0
    %2471 = vmatmul.mubr.bf16.gmra.mxu0 %v1938
    %v2472 = vpop.f32.mrf.mxu0
    %v2473 = vadd.f32 0.0, %v2472
    %v2474 = vpop.f32.mrf.mxu0
    %v2475 = vpop.f32.mrf.mxu0
    %v2476 = vadd.f32 0.0, %v2475
    %v2477 = vpop.f32.mrf.mxu0
    %2478 = vmatprep.mubr.bf16.mxu0 0
    %2479 = vmatmul.mubr.bf16.gmra.mxu0 %v1941
    %v2480 = vpop.f32.mrf.mxu0
    %v2481 = vadd.f32 0.0, %v2480
    %v2482 = vpop.f32.mrf.mxu0
    %v2483 = vpop.f32.mrf.mxu0
    %v2484 = vadd.f32 0.0, %v2483
    %v2485 = vpop.f32.mrf.mxu0
    %2486 = vmatprep.mubr.bf16.mxu0 0
    %2487 = vmatmul.mubr.bf16.gmra.mxu0 %v1944
    %v2488 = vpop.f32.mrf.mxu0
    %v2489 = vadd.f32 0.0, %v2488
    %v2490 = vpop.f32.mrf.mxu0
    %v2491 = vpop.f32.mrf.mxu0
    %v2492 = vadd.f32 0.0, %v2491
    %v2493 = vpop.f32.mrf.mxu0
    %2494 = vmatprep.mubr.bf16.mxu0 0
    %2495 = vmatmul.mubr.bf16.gmra.mxu0 %v1947
    %v2496 = vpop.f32.mrf.mxu0
    %v2497 = vadd.f32 0.0, %v2496
    %v2498 = vpop.f32.mrf.mxu0
    %v2499 = vpop.f32.mrf.mxu0
    %v2500 = vadd.f32 0.0, %v2499
    %v2501 = vpop.f32.mrf.mxu0
    %2502 = vmatprep.mubr.bf16.mxu0 0
    %2503 = vmatmul.mubr.bf16.gmra.mxu0 %v1950
    %v2504 = vpop.f32.mrf.mxu0
    %v2505 = vadd.f32 0.0, %v2504
    %v2506 = vpop.f32.mrf.mxu0
    %v2507 = vpop.f32.mrf.mxu0
    %v2508 = vadd.f32 0.0, %v2507
    %v2509 = vpop.f32.mrf.mxu0
    %2510 = vdwg.mxu0
    %v2515 = vunpack.c.l.b16 %v1884
    %v2516 = vunpack.c.l.b16 %v1885
    %v2517 = vunpack.c.l.b16 %v1886
    %v2518 = vunpack.c.l.b16 %v1887
    %v2519 = vpack.c.b16 %v2516, %v2515
    %v2520 = vpack.c.b16 %v2518, %v2517
    %2523 = vmatprep.subr.bf16.mxu0 0
    %2524 = vmatpush1.bf16.msra.mxu0 0
    %2525 = vmatprep.subr.bf16.mxu0 0
    %2526 = vmatpush1.bf16.msra.mxu0 0
    %2527 = vmatprep.subr.bf16.mxu0 0
    %2528 = vmatpush1.bf16.msra.mxu0 0
    %2529 = vmatprep.subr.bf16.mxu0 0
    %2530 = vmatpush1.bf16.msra.mxu0 0
    %2531 = vmatprep.subr.bf16.mxu0 0
    %2532 = vmatpush1.bf16.msra.mxu0 0
    %2533 = vmatprep.subr.bf16.mxu0 0
    %2534 = vmatpush1.bf16.msra.mxu0 0
    %2535 = vmatprep.subr.bf16.mxu0 0
    %2536 = vmatpush1.bf16.msra.mxu0 %v2520
    %2537 = vmatprep.subr.bf16.mxu0 0
    %2538 = vmatpush1.bf16.msra.mxu0 %v2519
    %2539 = vmatprep.subr.bf16.mxu0 0
    %2540 = vmatpush2.bf16.msra.mxu0 0
    %2541 = vmatprep.subr.bf16.mxu0 0
    %2542 = vmatpush2.bf16.msra.mxu0 0
    %2543 = vmatprep.subr.bf16.mxu0 0
    %2544 = vmatpush2.bf16.msra.mxu0 0
    %2545 = vmatprep.subr.bf16.mxu0 0
    %2546 = vmatpush2.bf16.msra.mxu0 0
    %2547 = vmatprep.subr.bf16.mxu0 0
    %2548 = vmatpush2.bf16.msra.mxu0 0
    %2549 = vmatprep.subr.bf16.mxu0 0
    %2550 = vmatpush2.bf16.msra.mxu0 0
    %2551 = vmatprep.subr.bf16.mxu0 0
    %2552 = vmatpush2.bf16.msra.mxu0 0
    %2553 = vmatprep.subr.bf16.mxu0 0
    %2554 = vmatpush2.bf16.msra.mxu0 0
    %2555 = vmatprep.mubr.bf16.mxu0 0
    %2556 = vmatmul.mubr.bf16.gmra.mxu0 %v2126
    %v2557 = vpop.f32.mrf.mxu0
    %v2558 = vadd.f32 %v2385, %v2557
    %v2559 = vpop.f32.mrf.mxu0
    %v2560 = vpop.f32.mrf.mxu0
    %v2561 = vadd.f32 %v2388, %v2560
    %v2562 = vpop.f32.mrf.mxu0
    %2563 = vmatprep.mubr.bf16.mxu0 0
    %2564 = vmatmul.mubr.bf16.gmra.mxu0 %v2129
    %v2565 = vpop.f32.mrf.mxu0
    %v2566 = vadd.f32 %v2393, %v2565
    %v2567 = vpop.f32.mrf.mxu0
    %v2568 = vpop.f32.mrf.mxu0
    %v2569 = vadd.f32 %v2396, %v2568
    %v2570 = vpop.f32.mrf.mxu0
    %2571 = vmatprep.mubr.bf16.mxu0 0
    %2572 = vmatmul.mubr.bf16.gmra.mxu0 %v2132
    %v2573 = vpop.f32.mrf.mxu0
    %v2574 = vadd.f32 %v2401, %v2573
    %v2575 = vpop.f32.mrf.mxu0
    %v2576 = vpop.f32.mrf.mxu0
    %v2577 = vadd.f32 %v2404, %v2576
    %v2578 = vpop.f32.mrf.mxu0
    %2579 = vmatprep.mubr.bf16.mxu0 0
    %2580 = vmatmul.mubr.bf16.gmra.mxu0 %v2135
    %v2581 = vpop.f32.mrf.mxu0
    %v2582 = vadd.f32 %v2409, %v2581
    %v2583 = vpop.f32.mrf.mxu0
    %v2584 = vpop.f32.mrf.mxu0
    %v2585 = vadd.f32 %v2412, %v2584
    %v2586 = vpop.f32.mrf.mxu0
    %2587 = vmatprep.mubr.bf16.mxu0 0
    %2588 = vmatmul.mubr.bf16.gmra.mxu0 %v2138
    %v2589 = vpop.f32.mrf.mxu0
    %v2590 = vadd.f32 %v2417, %v2589
    %v2591 = vpop.f32.mrf.mxu0
    %v2592 = vpop.f32.mrf.mxu0
    %v2593 = vadd.f32 %v2420, %v2592
    %v2594 = vpop.f32.mrf.mxu0
    %2595 = vmatprep.mubr.bf16.mxu0 0
    %2596 = vmatmul.mubr.bf16.gmra.mxu0 %v2141
    %v2597 = vpop.f32.mrf.mxu0
    %v2598 = vadd.f32 %v2425, %v2597
    %v2599 = vpop.f32.mrf.mxu0
    %v2600 = vpop.f32.mrf.mxu0
    %v2601 = vadd.f32 %v2428, %v2600
    %v2602 = vpop.f32.mrf.mxu0
    %2603 = vmatprep.mubr.bf16.mxu0 0
    %2604 = vmatmul.mubr.bf16.gmra.mxu0 %v2144
    %v2605 = vpop.f32.mrf.mxu0
    %v2606 = vadd.f32 %v2433, %v2605
    %v2607 = vpop.f32.mrf.mxu0
    %v2608 = vpop.f32.mrf.mxu0
    %v2609 = vadd.f32 %v2436, %v2608
    %v2610 = vpop.f32.mrf.mxu0
    %2611 = vmatprep.mubr.bf16.mxu0 0
    %2612 = vmatmul.mubr.bf16.gmra.mxu0 %v2147
    %v2613 = vpop.f32.mrf.mxu0
    %v2614 = vadd.f32 %v2441, %v2613
    %v2615 = vpop.f32.mrf.mxu0
    %v2616 = vpop.f32.mrf.mxu0
    %v2617 = vadd.f32 %v2444, %v2616
    %v2618 = vpop.f32.mrf.mxu0
    %2619 = vmatprep.mubr.bf16.mxu0 0
    %2620 = vmatmul.mubr.bf16.gmra.mxu0 %v2150
    %v2621 = vpop.f32.mrf.mxu0
    %v2622 = vadd.f32 %v2449, %v2621
    %v2623 = vpop.f32.mrf.mxu0
    %v2624 = vpop.f32.mrf.mxu0
    %v2625 = vadd.f32 %v2452, %v2624
    %v2626 = vpop.f32.mrf.mxu0
    %2627 = vmatprep.mubr.bf16.mxu0 0
    %2628 = vmatmul.mubr.bf16.gmra.mxu0 %v2153
    %v2629 = vpop.f32.mrf.mxu0
    %v2630 = vadd.f32 %v2457, %v2629
    %v2631 = vpop.f32.mrf.mxu0
    %v2632 = vpop.f32.mrf.mxu0
    %v2633 = vadd.f32 %v2460, %v2632
    %v2634 = vpop.f32.mrf.mxu0
    %2635 = vmatprep.mubr.bf16.mxu0 0
    %2636 = vmatmul.mubr.bf16.gmra.mxu0 %v2156
    %v2637 = vpop.f32.mrf.mxu0
    %v2638 = vadd.f32 %v2465, %v2637
    %v2639 = vpop.f32.mrf.mxu0
    %v2640 = vpop.f32.mrf.mxu0
    %v2641 = vadd.f32 %v2468, %v2640
    %v2642 = vpop.f32.mrf.mxu0
    %2643 = vmatprep.mubr.bf16.mxu0 0
    %2644 = vmatmul.mubr.bf16.gmra.mxu0 %v2159
    %v2645 = vpop.f32.mrf.mxu0
    %v2646 = vadd.f32 %v2473, %v2645
    %v2647 = vpop.f32.mrf.mxu0
    %v2648 = vpop.f32.mrf.mxu0
    %v2649 = vadd.f32 %v2476, %v2648
    %v2650 = vpop.f32.mrf.mxu0
    %2651 = vmatprep.mubr.bf16.mxu0 0
    %2652 = vmatmul.mubr.bf16.gmra.mxu0 %v2162
    %v2653 = vpop.f32.mrf.mxu0
    %v2654 = vadd.f32 %v2481, %v2653
    %v2655 = vpop.f32.mrf.mxu0
    %v2656 = vpop.f32.mrf.mxu0
    %v2657 = vadd.f32 %v2484, %v2656
    %v2658 = vpop.f32.mrf.mxu0
    %2659 = vmatprep.mubr.bf16.mxu0 0
    %2660 = vmatmul.mubr.bf16.gmra.mxu0 %v2165
    %v2661 = vpop.f32.mrf.mxu0
    %v2662 = vadd.f32 %v2489, %v2661
    %v2663 = vpop.f32.mrf.mxu0
    %v2664 = vpop.f32.mrf.mxu0
    %v2665 = vadd.f32 %v2492, %v2664
    %v2666 = vpop.f32.mrf.mxu0
    %2667 = vmatprep.mubr.bf16.mxu0 0
    %2668 = vmatmul.mubr.bf16.gmra.mxu0 %v2168
    %v2669 = vpop.f32.mrf.mxu0
    %v2670 = vadd.f32 %v2497, %v2669
    %v2671 = vpop.f32.mrf.mxu0
    %v2672 = vpop.f32.mrf.mxu0
    %v2673 = vadd.f32 %v2500, %v2672
    %v2674 = vpop.f32.mrf.mxu0
    %2675 = vmatprep.mubr.bf16.mxu0 0
    %2676 = vmatmul.mubr.bf16.gmra.mxu0 %v2171
    %v2677 = vpop.f32.mrf.mxu0
    %v2678 = vadd.f32 %v2505, %v2677
    %v2679 = vpop.f32.mrf.mxu0
    %v2680 = vpop.f32.mrf.mxu0
    %v2681 = vadd.f32 %v2508, %v2680
    %v2682 = vpop.f32.mrf.mxu0
    %2683 = vdwg.mxu0
    %v2684 = vrot.slane %v1369, 1
    %v2685 = vrot.slane %v1372, 1
    %v2686 = vrot.slane %v1377, 1
    %v2687 = vrot.slane %v1380, 1
    %v2688 = vrot.slane %v1385, 1
    %v2689 = vrot.slane %v1388, 1
    %v2690 = vrot.slane %v1393, 1
    %v2691 = vrot.slane %v1396, 1
    %v2692 = vrot.slane %v1401, 1
    %v2693 = vrot.slane %v1404, 1
    %v2694 = vrot.slane %v1409, 1
    %v2695 = vrot.slane %v1412, 1
    %v2696 = vrot.slane %v1417, 1
    %v2697 = vrot.slane %v1420, 1
    %v2698 = vrot.slane %v1425, 1
    %v2699 = vrot.slane %v1428, 1
    %v2700 = vrot.slane %v1433, 1
    %v2701 = vrot.slane %v1436, 1
    %v2702 = vrot.slane %v1441, 1
    %v2703 = vrot.slane %v1444, 1
    %v2704 = vrot.slane %v1449, 1
    %v2705 = vrot.slane %v1452, 1
    %v2706 = vrot.slane %v1457, 1
    %v2707 = vrot.slane %v1460, 1
    %v2708 = vrot.slane %v1465, 1
    %v2709 = vrot.slane %v1468, 1
    %v2710 = vrot.slane %v1473, 1
    %v2711 = vrot.slane %v1476, 1
    %v2712 = vrot.slane %v1481, 1
    %v2713 = vrot.slane %v1484, 1
    %v2714 = vrot.slane %v1489, 1
    %v2715 = vrot.slane %v1492, 1
    %vm2716 = vcmp.lt.s32.totalorder %v59, 7
    %v2717 = vsel %vm2716, %v2714, %v2715
    %v2718 = vsel %vm2716, %v2713, %v2714
    %v2719 = vsel %vm2716, %v2712, %v2713
    %v2720 = vsel %vm2716, %v2711, %v2712
    %v2721 = vsel %vm2716, %v2710, %v2711
    %v2722 = vsel %vm2716, %v2709, %v2710
    %v2723 = vsel %vm2716, %v2708, %v2709
    %v2724 = vsel %vm2716, %v2707, %v2708
    %v2725 = vsel %vm2716, %v2706, %v2707
    %v2726 = vsel %vm2716, %v2705, %v2706
    %v2727 = vsel %vm2716, %v2704, %v2705
    %v2728 = vsel %vm2716, %v2703, %v2704
    %v2729 = vsel %vm2716, %v2702, %v2703
    %v2730 = vsel %vm2716, %v2701, %v2702
    %v2731 = vsel %vm2716, %v2700, %v2701
    %v2732 = vsel %vm2716, %v2699, %v2700
    %v2733 = vsel %vm2716, %v2698, %v2699
    %v2734 = vsel %vm2716, %v2697, %v2698
    %v2735 = vsel %vm2716, %v2696, %v2697
    %v2736 = vsel %vm2716, %v2695, %v2696
    %v2737 = vsel %vm2716, %v2694, %v2695
    %v2738 = vsel %vm2716, %v2693, %v2694
    %v2739 = vsel %vm2716, %v2692, %v2693
    %v2740 = vsel %vm2716, %v2691, %v2692
    %v2741 = vsel %vm2716, %v2690, %v2691
    %v2742 = vsel %vm2716, %v2689, %v2690
    %v2743 = vsel %vm2716, %v2688, %v2689
    %v2744 = vsel %vm2716, %v2687, %v2688
    %v2745 = vsel %vm2716, %v2686, %v2687
    %v2746 = vsel %vm2716, %v2685, %v2686
    %v2747 = vsel %vm2716, %v2684, %v2685
    %v2748 = vsel %vm2716, %v2715, %v2684
    %v2749 = vsel %vm1719, %v2747, 0.0
    %v2750 = vsel %vm1720, %v2746, 0.0
    %v2751 = vsel %vm1721, %v2745, 0.0
    %v2752 = vsel %vm1722, %v2744, 0.0
    %v2753 = vsel %vm1723, %v2743, 0.0
    %v2754 = vsel %vm1724, %v2742, 0.0
    %v2755 = vsel %vm1725, %v2741, 0.0
    %v2756 = vsel %vm1726, %v2740, 0.0
    %v2757 = vsel %vm1727, %v2739, 0.0
    %v2758 = vsel %vm1728, %v2738, 0.0
    %v2759 = vsel %vm1729, %v2737, 0.0
    %v2760 = vsel %vm1730, %v2736, 0.0
    %v2761 = vsel %vm1731, %v2735, 0.0
    %v2762 = vsel %vm1732, %v2734, 0.0
    %v2763 = vsel %vm1733, %v2733, 0.0
    %v2764 = vsel %vm1734, %v2732, 0.0
    %v2765 = vsel %vm1735, %v2731, 0.0
    %v2766 = vsel %vm1736, %v2730, 0.0
    %v2767 = vsel %vm1737, %v2729, 0.0
    %v2768 = vsel %vm1738, %v2728, 0.0
    %v2769 = vsel %vm1739, %v2727, 0.0
    %v2770 = vsel %vm1740, %v2726, 0.0
    %v2771 = vsel %vm1741, %v2725, 0.0
    %v2772 = vsel %vm1742, %v2724, 0.0
    %v2773 = vsel %vm1743, %v2723, 0.0
    %v2774 = vsel %vm1744, %v2722, 0.0
    %v2775 = vsel %vm1745, %v2721, 0.0
    %v2776 = vsel %vm1746, %v2720, 0.0
    %v2777 = vsel %vm1747, %v2719, 0.0
    %v2778 = vsel %vm1748, %v2718, 0.0
    %v2779 = vsel %vm1749, %v2717, 0.0
    %v2780 = vsel %vm1750, %v2748, 0.0
    %v2781 = vpack.c.bf16 %v2750, %v2749
    %v2782 = vpack.c.bf16 %v2752, %v2751
    %v2783 = vpack.c.bf16 %v2754, %v2753
    %v2784 = vpack.c.bf16 %v2756, %v2755
    %v2785 = vpack.c.bf16 %v2758, %v2757
    %v2786 = vpack.c.bf16 %v2760, %v2759
    %v2787 = vpack.c.bf16 %v2762, %v2761
    %v2788 = vpack.c.bf16 %v2764, %v2763
    %v2789 = vpack.c.bf16 %v2766, %v2765
    %v2790 = vpack.c.bf16 %v2768, %v2767
    %v2791 = vpack.c.bf16 %v2770, %v2769
    %v2792 = vpack.c.bf16 %v2772, %v2771
    %v2793 = vpack.c.bf16 %v2774, %v2773
    %v2794 = vpack.c.bf16 %v2776, %v2775
    %v2795 = vpack.c.bf16 %v2778, %v2777
    %v2796 = vpack.c.bf16 %v2780, %v2779
    %v2797 = vld [vmem:[#allocation2 + $0xb4] sm:$0xf]
    %v2798 = vld [vmem:[#allocation2 + $0xb8] sm:$0xf]
    %v2799 = vld [vmem:[#allocation2 + $0xbc] sm:$0xf]
    %v2800 = vld [vmem:[#allocation2 + $0xc0] sm:$0xf]
    %v2805 = vunpack.c.l.b16 %v2797
    %v2806 = vunpack.c.l.b16 %v2798
    %v2807 = vunpack.c.l.b16 %v2799
    %v2808 = vunpack.c.l.b16 %v2800
    %v2809 = vpack.c.b16 %v2806, %v2805
    %v2810 = vpack.c.b16 %v2808, %v2807
    %v2814 = vsel %vm1285, %v2781, 0
    %v2817 = vsel %vm1285, %v2782, 0
    %v2820 = vsel %vm1285, %v2783, 0
    %v2823 = vsel %vm1285, %v2784, 0
    %v2826 = vsel %vm1285, %v2785, 0
    %v2829 = vsel %vm1285, %v2786, 0
    %v2832 = vsel %vm1285, %v2787, 0
    %v2835 = vsel %vm1285, %v2788, 0
    %v2838 = vsel %vm1285, %v2789, 0
    %v2841 = vsel %vm1285, %v2790, 0
    %v2844 = vsel %vm1285, %v2791, 0
    %v2847 = vsel %vm1285, %v2792, 0
    %v2850 = vsel %vm1285, %v2793, 0
    %v2853 = vsel %vm1285, %v2794, 0
    %v2856 = vsel %vm1285, %v2795, 0
    %v2859 = vsel %vm1285, %v2796, 0
    %2861 = vmatprep.subr.bf16.mxu0 0
    %2862 = vmatpush1.bf16.msra.mxu0 0
    %2863 = vmatprep.subr.bf16.mxu0 0
    %2864 = vmatpush1.bf16.msra.mxu0 0
    %2865 = vmatprep.subr.bf16.mxu0 0
    %2866 = vmatpush1.bf16.msra.mxu0 0
    %2867 = vmatprep.subr.bf16.mxu0 0
    %2868 = vmatpush1.bf16.msra.mxu0 0
    %2869 = vmatprep.subr.bf16.mxu0 0
    %2870 = vmatpush1.bf16.msra.mxu0 0
    %2871 = vmatprep.subr.bf16.mxu0 0
    %2872 = vmatpush1.bf16.msra.mxu0 0
    %2873 = vmatprep.subr.bf16.mxu0 0
    %2874 = vmatpush1.bf16.msra.mxu0 %v2810
    %2875 = vmatprep.subr.bf16.mxu0 0
    %2876 = vmatpush1.bf16.msra.mxu0 %v2809
    %2877 = vmatprep.subr.bf16.mxu0 0
    %2878 = vmatpush2.bf16.msra.mxu0 0
    %2879 = vmatprep.subr.bf16.mxu0 0
    %2880 = vmatpush2.bf16.msra.mxu0 0
    %2881 = vmatprep.subr.bf16.mxu0 0
    %2882 = vmatpush2.bf16.msra.mxu0 0
    %2883 = vmatprep.subr.bf16.mxu0 0
    %2884 = vmatpush2.bf16.msra.mxu0 0
    %2885 = vmatprep.subr.bf16.mxu0 0
    %2886 = vmatpush2.bf16.msra.mxu0 0
    %2887 = vmatprep.subr.bf16.mxu0 0
    %2888 = vmatpush2.bf16.msra.mxu0 0
    %2889 = vmatprep.subr.bf16.mxu0 0
    %2890 = vmatpush2.bf16.msra.mxu0 0
    %2891 = vmatprep.subr.bf16.mxu0 0
    %2892 = vmatpush2.bf16.msra.mxu0 0
    %2893 = vmatprep.mubr.bf16.mxu0 0
    %2894 = vmatmul.mubr.bf16.gmra.mxu0 %v2814
    %v2895 = vpop.f32.mrf.mxu0
    %v2896 = vadd.f32 0.0, %v2895
    %v2897 = vpop.f32.mrf.mxu0
    %v2898 = vpop.f32.mrf.mxu0
    %v2899 = vadd.f32 0.0, %v2898
    %v2900 = vpop.f32.mrf.mxu0
    %2901 = vmatprep.mubr.bf16.mxu0 0
    %2902 = vmatmul.mubr.bf16.gmra.mxu0 %v2817
    %v2903 = vpop.f32.mrf.mxu0
    %v2904 = vadd.f32 0.0, %v2903
    %v2905 = vpop.f32.mrf.mxu0
    %v2906 = vpop.f32.mrf.mxu0
    %v2907 = vadd.f32 0.0, %v2906
    %v2908 = vpop.f32.mrf.mxu0
    %2909 = vmatprep.mubr.bf16.mxu0 0
    %2910 = vmatmul.mubr.bf16.gmra.mxu0 %v2820
    %v2911 = vpop.f32.mrf.mxu0
    %v2912 = vadd.f32 0.0, %v2911
    %v2913 = vpop.f32.mrf.mxu0
    %v2914 = vpop.f32.mrf.mxu0
    %v2915 = vadd.f32 0.0, %v2914
    %v2916 = vpop.f32.mrf.mxu0
    %2917 = vmatprep.mubr.bf16.mxu0 0
    %2918 = vmatmul.mubr.bf16.gmra.mxu0 %v2823
    %v2919 = vpop.f32.mrf.mxu0
    %v2920 = vadd.f32 0.0, %v2919
    %v2921 = vpop.f32.mrf.mxu0
    %v2922 = vpop.f32.mrf.mxu0
    %v2923 = vadd.f32 0.0, %v2922
    %v2924 = vpop.f32.mrf.mxu0
    %2925 = vmatprep.mubr.bf16.mxu0 0
    %2926 = vmatmul.mubr.bf16.gmra.mxu0 %v2826
    %v2927 = vpop.f32.mrf.mxu0
    %v2928 = vadd.f32 0.0, %v2927
    %v2929 = vpop.f32.mrf.mxu0
    %v2930 = vpop.f32.mrf.mxu0
    %v2931 = vadd.f32 0.0, %v2930
    %v2932 = vpop.f32.mrf.mxu0
    %2933 = vmatprep.mubr.bf16.mxu0 0
    %2934 = vmatmul.mubr.bf16.gmra.mxu0 %v2829
    %v2935 = vpop.f32.mrf.mxu0
    %v2936 = vadd.f32 0.0, %v2935
    %v2937 = vpop.f32.mrf.mxu0
    %v2938 = vpop.f32.mrf.mxu0
    %v2939 = vadd.f32 0.0, %v2938
    %v2940 = vpop.f32.mrf.mxu0
    %2941 = vmatprep.mubr.bf16.mxu0 0
    %2942 = vmatmul.mubr.bf16.gmra.mxu0 %v2832
    %v2943 = vpop.f32.mrf.mxu0
    %v2944 = vadd.f32 0.0, %v2943
    %v2945 = vpop.f32.mrf.mxu0
    %v2946 = vpop.f32.mrf.mxu0
    %v2947 = vadd.f32 0.0, %v2946
    %v2948 = vpop.f32.mrf.mxu0
    %2949 = vmatprep.mubr.bf16.mxu0 0
    %2950 = vmatmul.mubr.bf16.gmra.mxu0 %v2835
    %v2951 = vpop.f32.mrf.mxu0
    %v2952 = vadd.f32 0.0, %v2951
    %v2953 = vpop.f32.mrf.mxu0
    %v2954 = vpop.f32.mrf.mxu0
    %v2955 = vadd.f32 0.0, %v2954
    %v2956 = vpop.f32.mrf.mxu0
    %2957 = vmatprep.mubr.bf16.mxu0 0
    %2958 = vmatmul.mubr.bf16.gmra.mxu0 %v2838
    %v2959 = vpop.f32.mrf.mxu0
    %v2960 = vadd.f32 0.0, %v2959
    %v2961 = vpop.f32.mrf.mxu0
    %v2962 = vpop.f32.mrf.mxu0
    %v2963 = vadd.f32 0.0, %v2962
    %v2964 = vpop.f32.mrf.mxu0
    %2965 = vmatprep.mubr.bf16.mxu0 0
    %2966 = vmatmul.mubr.bf16.gmra.mxu0 %v2841
    %v2967 = vpop.f32.mrf.mxu0
    %v2968 = vadd.f32 0.0, %v2967
    %v2969 = vpop.f32.mrf.mxu0
    %v2970 = vpop.f32.mrf.mxu0
    %v2971 = vadd.f32 0.0, %v2970
    %v2972 = vpop.f32.mrf.mxu0
    %2973 = vmatprep.mubr.bf16.mxu0 0
    %2974 = vmatmul.mubr.bf16.gmra.mxu0 %v2844
    %v2975 = vpop.f32.mrf.mxu0
    %v2976 = vadd.f32 0.0, %v2975
    %v2977 = vpop.f32.mrf.mxu0
    %v2978 = vpop.f32.mrf.mxu0
    %v2979 = vadd.f32 0.0, %v2978
    %v2980 = vpop.f32.mrf.mxu0
    %2981 = vmatprep.mubr.bf16.mxu0 0
    %2982 = vmatmul.mubr.bf16.gmra.mxu0 %v2847
    %v2983 = vpop.f32.mrf.mxu0
    %v2984 = vadd.f32 0.0, %v2983
    %v2985 = vpop.f32.mrf.mxu0
    %v2986 = vpop.f32.mrf.mxu0
    %v2987 = vadd.f32 0.0, %v2986
    %v2988 = vpop.f32.mrf.mxu0
    %2989 = vmatprep.mubr.bf16.mxu0 0
    %2990 = vmatmul.mubr.bf16.gmra.mxu0 %v2850
    %v2991 = vpop.f32.mrf.mxu0
    %v2992 = vadd.f32 0.0, %v2991
    %v2993 = vpop.f32.mrf.mxu0
    %v2994 = vpop.f32.mrf.mxu0
    %v2995 = vadd.f32 0.0, %v2994
    %v2996 = vpop.f32.mrf.mxu0
    %2997 = vmatprep.mubr.bf16.mxu0 0
    %2998 = vmatmul.mubr.bf16.gmra.mxu0 %v2853
    %v2999 = vpop.f32.mrf.mxu0
    %v3000 = vadd.f32 0.0, %v2999
    %v3001 = vpop.f32.mrf.mxu0
    %v3002 = vpop.f32.mrf.mxu0
    %v3003 = vadd.f32 0.0, %v3002
    %v3004 = vpop.f32.mrf.mxu0
    %3005 = vmatprep.mubr.bf16.mxu0 0
    %3006 = vmatmul.mubr.bf16.gmra.mxu0 %v2856
    %v3007 = vpop.f32.mrf.mxu0
    %v3008 = vadd.f32 0.0, %v3007
    %v3009 = vpop.f32.mrf.mxu0
    %v3010 = vpop.f32.mrf.mxu0
    %v3011 = vadd.f32 0.0, %v3010
    %v3012 = vpop.f32.mrf.mxu0
    %3013 = vmatprep.mubr.bf16.mxu0 0
    %3014 = vmatmul.mubr.bf16.gmra.mxu0 %v2859
    %v3015 = vpop.f32.mrf.mxu0
    %v3016 = vadd.f32 0.0, %v3015
    %v3017 = vpop.f32.mrf.mxu0
    %v3018 = vpop.f32.mrf.mxu0
    %v3019 = vadd.f32 0.0, %v3018
    %v3020 = vpop.f32.mrf.mxu0
    %3021 = vdwg.mxu0
    %v3022 = vadd.f32 %v2208, %v2896
    %v3023 = vadd.f32 %v2211, %v2899
    %v3024 = vadd.f32 %v2216, %v2904
    %v3025 = vadd.f32 %v2219, %v2907
    %v3026 = vadd.f32 %v2224, %v2912
    %v3027 = vadd.f32 %v2227, %v2915
    %v3028 = vadd.f32 %v2232, %v2920
    %v3029 = vadd.f32 %v2235, %v2923
    %v3030 = vadd.f32 %v2240, %v2928
    %v3031 = vadd.f32 %v2243, %v2931
    %v3032 = vadd.f32 %v2248, %v2936
    %v3033 = vadd.f32 %v2251, %v2939
    %v3034 = vadd.f32 %v2256, %v2944
    %v3035 = vadd.f32 %v2259, %v2947
    %v3036 = vadd.f32 %v2264, %v2952
    %v3037 = vadd.f32 %v2267, %v2955
    %v3038 = vadd.f32 %v2272, %v2960
    %v3039 = vadd.f32 %v2275, %v2963
    %v3040 = vadd.f32 %v2280, %v2968
    %v3041 = vadd.f32 %v2283, %v2971
    %v3042 = vadd.f32 %v2288, %v2976
    %v3043 = vadd.f32 %v2291, %v2979
    %v3044 = vadd.f32 %v2296, %v2984
    %v3045 = vadd.f32 %v2299, %v2987
    %v3046 = vadd.f32 %v2304, %v2992
    %v3047 = vadd.f32 %v2307, %v2995
    %v3048 = vadd.f32 %v2312, %v3000
    %v3049 = vadd.f32 %v2315, %v3003
    %v3050 = vadd.f32 %v2320, %v3008
    %v3051 = vadd.f32 %v2323, %v3011
    %v3052 = vadd.f32 %v2328, %v3016
    %v3053 = vadd.f32 %v2331, %v3019
    %v3054 = vld [vmem:[#allocation2 + $0xe4] sm:$0xf]
    %v3055 = vld [vmem:[#allocation2 + $0xe8] sm:$0xf]
    %v3056 = vld [vmem:[#allocation2 + $0xec] sm:$0xf]
    %v3057 = vld [vmem:[#allocation2 + $0xf0] sm:$0xf]
    %v3062 = vunpack.c.l.b16 %v3054
    %v3063 = vunpack.c.l.b16 %v3055
    %v3064 = vunpack.c.l.b16 %v3056
    %v3065 = vunpack.c.l.b16 %v3057
    %v3066 = vpack.c.b16 %v3063, %v3062
    %v3067 = vpack.c.b16 %v3065, %v3064
    %3070 = vmatprep.subr.bf16.mxu0 0
    %3071 = vmatpush1.bf16.msra.mxu0 0
    %3072 = vmatprep.subr.bf16.mxu0 0
    %3073 = vmatpush1.bf16.msra.mxu0 0
    %3074 = vmatprep.subr.bf16.mxu0 0
    %3075 = vmatpush1.bf16.msra.mxu0 0
    %3076 = vmatprep.subr.bf16.mxu0 0
    %3077 = vmatpush1.bf16.msra.mxu0 0
    %3078 = vmatprep.subr.bf16.mxu0 0
    %3079 = vmatpush1.bf16.msra.mxu0 0
    %3080 = vmatprep.subr.bf16.mxu0 0
    %3081 = vmatpush1.bf16.msra.mxu0 0
    %3082 = vmatprep.subr.bf16.mxu0 0
    %3083 = vmatpush1.bf16.msra.mxu0 %v3067
    %3084 = vmatprep.subr.bf16.mxu0 0
    %3085 = vmatpush1.bf16.msra.mxu0 %v3066
    %3086 = vmatprep.subr.bf16.mxu0 0
    %3087 = vmatpush2.bf16.msra.mxu0 0
    %3088 = vmatprep.subr.bf16.mxu0 0
    %3089 = vmatpush2.bf16.msra.mxu0 0
    %3090 = vmatprep.subr.bf16.mxu0 0
    %3091 = vmatpush2.bf16.msra.mxu0 0
    %3092 = vmatprep.subr.bf16.mxu0 0
    %3093 = vmatpush2.bf16.msra.mxu0 0
    %3094 = vmatprep.subr.bf16.mxu0 0
    %3095 = vmatpush2.bf16.msra.mxu0 0
    %3096 = vmatprep.subr.bf16.mxu0 0
    %3097 = vmatpush2.bf16.msra.mxu0 0
    %3098 = vmatprep.subr.bf16.mxu0 0
    %3099 = vmatpush2.bf16.msra.mxu0 0
    %3100 = vmatprep.subr.bf16.mxu0 0
    %3101 = vmatpush2.bf16.msra.mxu0 0
    %3102 = vmatprep.mubr.bf16.mxu0 0
    %3103 = vmatmul.mubr.bf16.gmra.mxu0 %v2814
    %v3104 = vpop.f32.mrf.mxu0
    %v3105 = vadd.f32 0.0, %v3104
    %v3106 = vpop.f32.mrf.mxu0
    %v3107 = vpop.f32.mrf.mxu0
    %v3108 = vadd.f32 0.0, %v3107
    %v3109 = vpop.f32.mrf.mxu0
    %3110 = vmatprep.mubr.bf16.mxu0 0
    %3111 = vmatmul.mubr.bf16.gmra.mxu0 %v2817
    %v3112 = vpop.f32.mrf.mxu0
    %v3113 = vadd.f32 0.0, %v3112
    %v3114 = vpop.f32.mrf.mxu0
    %v3115 = vpop.f32.mrf.mxu0
    %v3116 = vadd.f32 0.0, %v3115
    %v3117 = vpop.f32.mrf.mxu0
    %3118 = vmatprep.mubr.bf16.mxu0 0
    %3119 = vmatmul.mubr.bf16.gmra.mxu0 %v2820
    %v3120 = vpop.f32.mrf.mxu0
    %v3121 = vadd.f32 0.0, %v3120
    %v3122 = vpop.f32.mrf.mxu0
    %v3123 = vpop.f32.mrf.mxu0
    %v3124 = vadd.f32 0.0, %v3123
    %v3125 = vpop.f32.mrf.mxu0
    %3126 = vmatprep.mubr.bf16.mxu0 0
    %3127 = vmatmul.mubr.bf16.gmra.mxu0 %v2823
    %v3128 = vpop.f32.mrf.mxu0
    %v3129 = vadd.f32 0.0, %v3128
    %v3130 = vpop.f32.mrf.mxu0
    %v3131 = vpop.f32.mrf.mxu0
    %v3132 = vadd.f32 0.0, %v3131
    %v3133 = vpop.f32.mrf.mxu0
    %3134 = vmatprep.mubr.bf16.mxu0 0
    %3135 = vmatmul.mubr.bf16.gmra.mxu0 %v2826
    %v3136 = vpop.f32.mrf.mxu0
    %v3137 = vadd.f32 0.0, %v3136
    %v3138 = vpop.f32.mrf.mxu0
    %v3139 = vpop.f32.mrf.mxu0
    %v3140 = vadd.f32 0.0, %v3139
    %v3141 = vpop.f32.mrf.mxu0
    %3142 = vmatprep.mubr.bf16.mxu0 0
    %3143 = vmatmul.mubr.bf16.gmra.mxu0 %v2829
    %v3144 = vpop.f32.mrf.mxu0
    %v3145 = vadd.f32 0.0, %v3144
    %v3146 = vpop.f32.mrf.mxu0
    %v3147 = vpop.f32.mrf.mxu0
    %v3148 = vadd.f32 0.0, %v3147
    %v3149 = vpop.f32.mrf.mxu0
    %3150 = vmatprep.mubr.bf16.mxu0 0
    %3151 = vmatmul.mubr.bf16.gmra.mxu0 %v2832
    %v3152 = vpop.f32.mrf.mxu0
    %v3153 = vadd.f32 0.0, %v3152
    %v3154 = vpop.f32.mrf.mxu0
    %v3155 = vpop.f32.mrf.mxu0
    %v3156 = vadd.f32 0.0, %v3155
    %v3157 = vpop.f32.mrf.mxu0
    %3158 = vmatprep.mubr.bf16.mxu0 0
    %3159 = vmatmul.mubr.bf16.gmra.mxu0 %v2835
    %v3160 = vpop.f32.mrf.mxu0
    %v3161 = vadd.f32 0.0, %v3160
    %v3162 = vpop.f32.mrf.mxu0
    %v3163 = vpop.f32.mrf.mxu0
    %v3164 = vadd.f32 0.0, %v3163
    %v3165 = vpop.f32.mrf.mxu0
    %3166 = vmatprep.mubr.bf16.mxu0 0
    %3167 = vmatmul.mubr.bf16.gmra.mxu0 %v2838
    %v3168 = vpop.f32.mrf.mxu0
    %v3169 = vadd.f32 0.0, %v3168
    %v3170 = vpop.f32.mrf.mxu0
    %v3171 = vpop.f32.mrf.mxu0
    %v3172 = vadd.f32 0.0, %v3171
    %v3173 = vpop.f32.mrf.mxu0
    %3174 = vmatprep.mubr.bf16.mxu0 0
    %3175 = vmatmul.mubr.bf16.gmra.mxu0 %v2841
    %v3176 = vpop.f32.mrf.mxu0
    %v3177 = vadd.f32 0.0, %v3176
    %v3178 = vpop.f32.mrf.mxu0
    %v3179 = vpop.f32.mrf.mxu0
    %v3180 = vadd.f32 0.0, %v3179
    %v3181 = vpop.f32.mrf.mxu0
    %3182 = vmatprep.mubr.bf16.mxu0 0
    %3183 = vmatmul.mubr.bf16.gmra.mxu0 %v2844
    %v3184 = vpop.f32.mrf.mxu0
    %v3185 = vadd.f32 0.0, %v3184
    %v3186 = vpop.f32.mrf.mxu0
    %v3187 = vpop.f32.mrf.mxu0
    %v3188 = vadd.f32 0.0, %v3187
    %v3189 = vpop.f32.mrf.mxu0
    %3190 = vmatprep.mubr.bf16.mxu0 0
    %3191 = vmatmul.mubr.bf16.gmra.mxu0 %v2847
    %v3192 = vpop.f32.mrf.mxu0
    %v3193 = vadd.f32 0.0, %v3192
    %v3194 = vpop.f32.mrf.mxu0
    %v3195 = vpop.f32.mrf.mxu0
    %v3196 = vadd.f32 0.0, %v3195
    %v3197 = vpop.f32.mrf.mxu0
    %3198 = vmatprep.mubr.bf16.mxu0 0
    %3199 = vmatmul.mubr.bf16.gmra.mxu0 %v2850
    %v3200 = vpop.f32.mrf.mxu0
    %v3201 = vadd.f32 0.0, %v3200
    %v3202 = vpop.f32.mrf.mxu0
    %v3203 = vpop.f32.mrf.mxu0
    %v3204 = vadd.f32 0.0, %v3203
    %v3205 = vpop.f32.mrf.mxu0
    %3206 = vmatprep.mubr.bf16.mxu0 0
    %3207 = vmatmul.mubr.bf16.gmra.mxu0 %v2853
    %v3208 = vpop.f32.mrf.mxu0
    %v3209 = vadd.f32 0.0, %v3208
    %v3210 = vpop.f32.mrf.mxu0
    %v3211 = vpop.f32.mrf.mxu0
    %v3212 = vadd.f32 0.0, %v3211
    %v3213 = vpop.f32.mrf.mxu0
    %3214 = vmatprep.mubr.bf16.mxu0 0
    %3215 = vmatmul.mubr.bf16.gmra.mxu0 %v2856
    %v3216 = vpop.f32.mrf.mxu0
    %v3217 = vadd.f32 0.0, %v3216
    %v3218 = vpop.f32.mrf.mxu0
    %v3219 = vpop.f32.mrf.mxu0
    %v3220 = vadd.f32 0.0, %v3219
    %v3221 = vpop.f32.mrf.mxu0
    %3222 = vmatprep.mubr.bf16.mxu0 0
    %3223 = vmatmul.mubr.bf16.gmra.mxu0 %v2859
    %v3224 = vpop.f32.mrf.mxu0
    %v3225 = vadd.f32 0.0, %v3224
    %v3226 = vpop.f32.mrf.mxu0
    %v3227 = vpop.f32.mrf.mxu0
    %v3228 = vadd.f32 0.0, %v3227
    %v3229 = vpop.f32.mrf.mxu0
    %3230 = vdwg.mxu0
    %v3231 = vadd.f32 %v2558, %v3105
    %v3232 = vadd.f32 %v2561, %v3108
    %v3233 = vadd.f32 %v2566, %v3113
    %v3234 = vadd.f32 %v2569, %v3116
    %v3235 = vadd.f32 %v2574, %v3121
    %v3236 = vadd.f32 %v2577, %v3124
    %v3237 = vadd.f32 %v2582, %v3129
    %v3238 = vadd.f32 %v2585, %v3132
    %v3239 = vadd.f32 %v2590, %v3137
    %v3240 = vadd.f32 %v2593, %v3140
    %v3241 = vadd.f32 %v2598, %v3145
    %v3242 = vadd.f32 %v2601, %v3148
    %v3243 = vadd.f32 %v2606, %v3153
    %v3244 = vadd.f32 %v2609, %v3156
    %v3245 = vadd.f32 %v2614, %v3161
    %v3246 = vadd.f32 %v2617, %v3164
    %v3247 = vadd.f32 %v2622, %v3169
    %v3248 = vadd.f32 %v2625, %v3172
    %v3249 = vadd.f32 %v2630, %v3177
    %v3250 = vadd.f32 %v2633, %v3180
    %v3251 = vadd.f32 %v2638, %v3185
    %v3252 = vadd.f32 %v2641, %v3188
    %v3253 = vadd.f32 %v2646, %v3193
    %v3254 = vadd.f32 %v2649, %v3196
    %v3255 = vadd.f32 %v2654, %v3201
    %v3256 = vadd.f32 %v2657, %v3204
    %v3257 = vadd.f32 %v2662, %v3209
    %v3258 = vadd.f32 %v2665, %v3212
    %v3259 = vadd.f32 %v2670, %v3217
    %v3260 = vadd.f32 %v2673, %v3220
    %v3261 = vadd.f32 %v2678, %v3225
    %v3262 = vadd.f32 %v2681, %v3228
    %v3263 = vld [vmem:[#allocation2 + $0x154] sm:$0x1]
    %v3264 = vunpack.c.l.bf16 %v3263
    %v3265 = vlaneseq
    %v3266 = vshrl.u32 %v3265, 7
    %v3267 = vsub.s32 0, %v3266
    %v3268 = vrot.slane %v3264, %v3267
    %v3269 = vadd.f32 %v3022, %v3268
    %v3270 = vadd.f32 %v3023, %v3268
    %v3271 = vadd.f32 %v3024, %v3268
    %v3272 = vadd.f32 %v3025, %v3268
    %v3273 = vadd.f32 %v3026, %v3268
    %v3274 = vadd.f32 %v3027, %v3268
    %v3275 = vadd.f32 %v3028, %v3268
    %v3276 = vadd.f32 %v3029, %v3268
    %v3277 = vadd.f32 %v3030, %v3268
    %v3278 = vadd.f32 %v3031, %v3268
    %v3279 = vadd.f32 %v3032, %v3268
    %v3280 = vadd.f32 %v3033, %v3268
    %v3281 = vadd.f32 %v3034, %v3268
    %v3282 = vadd.f32 %v3035, %v3268
    %v3283 = vadd.f32 %v3036, %v3268
    %v3284 = vadd.f32 %v3037, %v3268
    %v3285 = vadd.f32 %v3038, %v3268
    %v3286 = vadd.f32 %v3039, %v3268
    %v3287 = vadd.f32 %v3040, %v3268
    %v3288 = vadd.f32 %v3041, %v3268
    %v3289 = vadd.f32 %v3042, %v3268
    %v3290 = vadd.f32 %v3043, %v3268
    %v3291 = vadd.f32 %v3044, %v3268
    %v3292 = vadd.f32 %v3045, %v3268
    %v3293 = vadd.f32 %v3046, %v3268
    %v3294 = vadd.f32 %v3047, %v3268
    %v3295 = vadd.f32 %v3048, %v3268
    %v3296 = vadd.f32 %v3049, %v3268
    %v3297 = vadd.f32 %v3050, %v3268
    %v3298 = vadd.f32 %v3051, %v3268
    %v3299 = vadd.f32 %v3052, %v3268
    %v3300 = vadd.f32 %v3053, %v3268
    %v3301 = vld [vmem:[#allocation2 + $0x158] sm:$0x1]
    %v3302 = vunpack.c.l.bf16 %v3301
    %v3303 = vlaneseq
    %v3304 = vshrl.u32 %v3303, 7
    %v3305 = vsub.s32 0, %v3304
    %v3306 = vrot.slane %v3302, %v3305
    %v3307 = vadd.f32 %v3231, %v3306
    %v3308 = vadd.f32 %v3232, %v3306
    %v3309 = vadd.f32 %v3233, %v3306
    %v3310 = vadd.f32 %v3234, %v3306
    %v3311 = vadd.f32 %v3235, %v3306
    %v3312 = vadd.f32 %v3236, %v3306
    %v3313 = vadd.f32 %v3237, %v3306
    %v3314 = vadd.f32 %v3238, %v3306
    %v3315 = vadd.f32 %v3239, %v3306
    %v3316 = vadd.f32 %v3240, %v3306
    %v3317 = vadd.f32 %v3241, %v3306
    %v3318 = vadd.f32 %v3242, %v3306
    %v3319 = vadd.f32 %v3243, %v3306
    %v3320 = vadd.f32 %v3244, %v3306
    %v3321 = vadd.f32 %v3245, %v3306
    %v3322 = vadd.f32 %v3246, %v3306
    %v3323 = vadd.f32 %v3247, %v3306
    %v3324 = vadd.f32 %v3248, %v3306
    %v3325 = vadd.f32 %v3249, %v3306
    %v3326 = vadd.f32 %v3250, %v3306
    %v3327 = vadd.f32 %v3251, %v3306
    %v3328 = vadd.f32 %v3252, %v3306
    %v3329 = vadd.f32 %v3253, %v3306
    %v3330 = vadd.f32 %v3254, %v3306
    %v3331 = vadd.f32 %v3255, %v3306
    %v3332 = vadd.f32 %v3256, %v3306
    %v3333 = vadd.f32 %v3257, %v3306
    %v3334 = vadd.f32 %v3258, %v3306
    %v3335 = vadd.f32 %v3259, %v3306
    %v3336 = vadd.f32 %v3260, %v3306
    %v3337 = vadd.f32 %v3261, %v3306
    %v3338 = vadd.f32 %v3262, %v3306
    %v3339 = vxor.u32 %v3307, 2147483648
    %v3340 = vxor.u32 %v3308, 2147483648
    %v3341 = vxor.u32 %v3309, 2147483648
    %v3342 = vxor.u32 %v3310, 2147483648
    %v3343 = vxor.u32 %v3311, 2147483648
    %v3344 = vxor.u32 %v3312, 2147483648
    %v3345 = vxor.u32 %v3313, 2147483648
    %v3346 = vxor.u32 %v3314, 2147483648
    %v3347 = vxor.u32 %v3315, 2147483648
    %v3348 = vxor.u32 %v3316, 2147483648
    %v3349 = vxor.u32 %v3317, 2147483648
    %v3350 = vxor.u32 %v3318, 2147483648
    %v3351 = vxor.u32 %v3319, 2147483648
    %v3352 = vxor.u32 %v3320, 2147483648
    %v3353 = vxor.u32 %v3321, 2147483648
    %v3354 = vxor.u32 %v3322, 2147483648
    %v3355 = vxor.u32 %v3323, 2147483648
    %v3356 = vxor.u32 %v3324, 2147483648
    %v3357 = vxor.u32 %v3325, 2147483648
    %v3358 = vxor.u32 %v3326, 2147483648
    %v3359 = vxor.u32 %v3327, 2147483648
    %v3360 = vxor.u32 %v3328, 2147483648
    %v3361 = vxor.u32 %v3329, 2147483648
    %v3362 = vxor.u32 %v3330, 2147483648
    %v3363 = vxor.u32 %v3331, 2147483648
    %v3364 = vxor.u32 %v3332, 2147483648
    %v3365 = vxor.u32 %v3333, 2147483648
    %v3366 = vxor.u32 %v3334, 2147483648
    %v3367 = vxor.u32 %v3335, 2147483648
    %v3368 = vxor.u32 %v3336, 2147483648
    %v3369 = vxor.u32 %v3337, 2147483648
    %v3370 = vxor.u32 %v3338, 2147483648
    %v3371 = vmul.f32 %v3339, 1.442695
    %v3372 = vpow.pop %v3371
    %v3373 = vmul.f32 %v3340, 1.442695
    %v3374 = vpow.pop %v3373
    %v3375 = vmul.f32 %v3341, 1.442695
    %v3376 = vpow.pop %v3375
    %v3377 = vmul.f32 %v3342, 1.442695
    %v3378 = vpow.pop %v3377
    %v3379 = vmul.f32 %v3343, 1.442695
    %v3380 = vpow.pop %v3379
    %v3381 = vmul.f32 %v3344, 1.442695
    %v3382 = vpow.pop %v3381
    %v3383 = vmul.f32 %v3345, 1.442695
    %v3384 = vpow.pop %v3383
    %v3385 = vmul.f32 %v3346, 1.442695
    %v3386 = vpow.pop %v3385
    %v3387 = vmul.f32 %v3347, 1.442695
    %v3388 = vpow.pop %v3387
    %v3389 = vmul.f32 %v3348, 1.442695
    %v3390 = vpow.pop %v3389
    %v3391 = vmul.f32 %v3349, 1.442695
    %v3392 = vpow.pop %v3391
    %v3393 = vmul.f32 %v3350, 1.442695
    %v3394 = vpow.pop %v3393
    %v3395 = vmul.f32 %v3351, 1.442695
    %v3396 = vpow.pop %v3395
    %v3397 = vmul.f32 %v3352, 1.442695
    %v3398 = vpow.pop %v3397
    %v3399 = vmul.f32 %v3353, 1.442695
    %v3400 = vpow.pop %v3399
    %v3401 = vmul.f32 %v3354, 1.442695
    %v3402 = vpow.pop %v3401
    %v3403 = vmul.f32 %v3355, 1.442695
    %v3404 = vpow.pop %v3403
    %v3405 = vmul.f32 %v3356, 1.442695
    %v3406 = vpow.pop %v3405
    %v3407 = vmul.f32 %v3357, 1.442695
    %v3408 = vpow.pop %v3407
    %v3409 = vmul.f32 %v3358, 1.442695
    %v3410 = vpow.pop %v3409
    %v3411 = vmul.f32 %v3359, 1.442695
    %v3412 = vpow.pop %v3411
    %v3413 = vmul.f32 %v3360, 1.442695
    %v3414 = vpow.pop %v3413
    %v3415 = vmul.f32 %v3361, 1.442695
    %v3416 = vpow.pop %v3415
    %v3417 = vmul.f32 %v3362, 1.442695
    %v3418 = vpow.pop %v3417
    %v3419 = vmul.f32 %v3363, 1.442695
    %v3420 = vpow.pop %v3419
    %v3421 = vmul.f32 %v3364, 1.442695
    %v3422 = vpow.pop %v3421
    %v3423 = vmul.f32 %v3365, 1.442695
    %v3424 = vpow.pop %v3423
    %v3425 = vmul.f32 %v3366, 1.442695
    %v3426 = vpow.pop %v3425
    %v3427 = vmul.f32 %v3367, 1.442695
    %v3428 = vpow.pop %v3427
    %v3429 = vmul.f32 %v3368, 1.442695
    %v3430 = vpow.pop %v3429
    %v3431 = vmul.f32 %v3369, 1.442695
    %v3432 = vpow.pop %v3431
    %v3433 = vmul.f32 %v3370, 1.442695
    %v3434 = vpow.pop %v3433
    %v3435 = vadd.f32 %v3372, 1.0
    %v3436 = vadd.f32 %v3374, 1.0
    %v3437 = vadd.f32 %v3376, 1.0
    %v3438 = vadd.f32 %v3378, 1.0
    %v3439 = vadd.f32 %v3380, 1.0
    %v3440 = vadd.f32 %v3382, 1.0
    %v3441 = vadd.f32 %v3384, 1.0
    %v3442 = vadd.f32 %v3386, 1.0
    %v3443 = vadd.f32 %v3388, 1.0
    %v3444 = vadd.f32 %v3390, 1.0
    %v3445 = vadd.f32 %v3392, 1.0
    %v3446 = vadd.f32 %v3394, 1.0
    %v3447 = vadd.f32 %v3396, 1.0
    %v3448 = vadd.f32 %v3398, 1.0
    %v3449 = vadd.f32 %v3400, 1.0
    %v3450 = vadd.f32 %v3402, 1.0
    %v3451 = vadd.f32 %v3404, 1.0
    %v3452 = vadd.f32 %v3406, 1.0
    %v3453 = vadd.f32 %v3408, 1.0
    %v3454 = vadd.f32 %v3410, 1.0
    %v3455 = vadd.f32 %v3412, 1.0
    %v3456 = vadd.f32 %v3414, 1.0
    %v3457 = vadd.f32 %v3416, 1.0
    %v3458 = vadd.f32 %v3418, 1.0
    %v3459 = vadd.f32 %v3420, 1.0
    %v3460 = vadd.f32 %v3422, 1.0
    %v3461 = vadd.f32 %v3424, 1.0
    %v3462 = vadd.f32 %v3426, 1.0
    %v3463 = vadd.f32 %v3428, 1.0
    %v3464 = vadd.f32 %v3430, 1.0
    %v3465 = vadd.f32 %v3432, 1.0
    %v3466 = vadd.f32 %v3434, 1.0
    %v3467 = vrcp.pop %v3435
    %v3468 = vmul.f32 1.0, %v3467
    %v3469 = vrcp.pop %v3436
    %v3470 = vmul.f32 1.0, %v3469
    %v3471 = vrcp.pop %v3437
    %v3472 = vmul.f32 1.0, %v3471
    %v3473 = vrcp.pop %v3438
    %v3474 = vmul.f32 1.0, %v3473
    %v3475 = vrcp.pop %v3439
    %v3476 = vmul.f32 1.0, %v3475
    %v3477 = vrcp.pop %v3440
    %v3478 = vmul.f32 1.0, %v3477
    %v3479 = vrcp.pop %v3441
    %v3480 = vmul.f32 1.0, %v3479
    %v3481 = vrcp.pop %v3442
    %v3482 = vmul.f32 1.0, %v3481
    %v3483 = vrcp.pop %v3443
    %v3484 = vmul.f32 1.0, %v3483
    %v3485 = vrcp.pop %v3444
    %v3486 = vmul.f32 1.0, %v3485
    %v3487 = vrcp.pop %v3445
    %v3488 = vmul.f32 1.0, %v3487
    %v3489 = vrcp.pop %v3446
    %v3490 = vmul.f32 1.0, %v3489
    %v3491 = vrcp.pop %v3447
    %v3492 = vmul.f32 1.0, %v3491
    %v3493 = vrcp.pop %v3448
    %v3494 = vmul.f32 1.0, %v3493
    %v3495 = vrcp.pop %v3449
    %v3496 = vmul.f32 1.0, %v3495
    %v3497 = vrcp.pop %v3450
    %v3498 = vmul.f32 1.0, %v3497
    %v3499 = vrcp.pop %v3451
    %v3500 = vmul.f32 1.0, %v3499
    %v3501 = vrcp.pop %v3452
    %v3502 = vmul.f32 1.0, %v3501
    %v3503 = vrcp.pop %v3453
    %v3504 = vmul.f32 1.0, %v3503
    %v3505 = vrcp.pop %v3454
    %v3506 = vmul.f32 1.0, %v3505
    %v3507 = vrcp.pop %v3455
    %v3508 = vmul.f32 1.0, %v3507
    %v3509 = vrcp.pop %v3456
    %v3510 = vmul.f32 1.0, %v3509
    %v3511 = vrcp.pop %v3457
    %v3512 = vmul.f32 1.0, %v3511
    %v3513 = vrcp.pop %v3458
    %v3514 = vmul.f32 1.0, %v3513
    %v3515 = vrcp.pop %v3459
    %v3516 = vmul.f32 1.0, %v3515
    %v3517 = vrcp.pop %v3460
    %v3518 = vmul.f32 1.0, %v3517
    %v3519 = vrcp.pop %v3461
    %v3520 = vmul.f32 1.0, %v3519
    %v3521 = vrcp.pop %v3462
    %v3522 = vmul.f32 1.0, %v3521
    %v3523 = vrcp.pop %v3463
    %v3524 = vmul.f32 1.0, %v3523
    %v3525 = vrcp.pop %v3464
    %v3526 = vmul.f32 1.0, %v3525
    %v3527 = vrcp.pop %v3465
    %v3528 = vmul.f32 1.0, %v3527
    %v3529 = vrcp.pop %v3466
    %v3530 = vmul.f32 1.0, %v3529
    %v3531 = vmul.f32 %v3269, %v3468
    %v3532 = vmul.f32 %v3270, %v3470
    %v3533 = vmul.f32 %v3271, %v3472
    %v3534 = vmul.f32 %v3272, %v3474
    %v3535 = vmul.f32 %v3273, %v3476
    %v3536 = vmul.f32 %v3274, %v3478
    %v3537 = vmul.f32 %v3275, %v3480
    %v3538 = vmul.f32 %v3276, %v3482
    %v3539 = vmul.f32 %v3277, %v3484
    %v3540 = vmul.f32 %v3278, %v3486
    %v3541 = vmul.f32 %v3279, %v3488
    %v3542 = vmul.f32 %v3280, %v3490
    %v3543 = vmul.f32 %v3281, %v3492
    %v3544 = vmul.f32 %v3282, %v3494
    %v3545 = vmul.f32 %v3283, %v3496
    %v3546 = vmul.f32 %v3284, %v3498
    %v3547 = vmul.f32 %v3285, %v3500
    %v3548 = vmul.f32 %v3286, %v3502
    %v3549 = vmul.f32 %v3287, %v3504
    %v3550 = vmul.f32 %v3288, %v3506
    %v3551 = vmul.f32 %v3289, %v3508
    %v3552 = vmul.f32 %v3290, %v3510
    %v3553 = vmul.f32 %v3291, %v3512
    %v3554 = vmul.f32 %v3292, %v3514
    %v3555 = vmul.f32 %v3293, %v3516
    %v3556 = vmul.f32 %v3294, %v3518
    %v3557 = vmul.f32 %v3295, %v3520
    %v3558 = vmul.f32 %v3296, %v3522
    %v3559 = vmul.f32 %v3297, %v3524
    %v3560 = vmul.f32 %v3298, %v3526
    %v3561 = vmul.f32 %v3299, %v3528
    %v3562 = vmul.f32 %v3300, %v3530
    %v3563 = vadd.f32 %v3531, %v1369
    %v3564 = vadd.f32 %v3532, %v1372
    %v3565 = vadd.f32 %v3533, %v1377
    %v3566 = vadd.f32 %v3534, %v1380
    %v3567 = vadd.f32 %v3535, %v1385
    %v3568 = vadd.f32 %v3536, %v1388
    %v3569 = vadd.f32 %v3537, %v1393
    %v3570 = vadd.f32 %v3538, %v1396
    %v3571 = vadd.f32 %v3539, %v1401
    %v3572 = vadd.f32 %v3540, %v1404
    %v3573 = vadd.f32 %v3541, %v1409
    %v3574 = vadd.f32 %v3542, %v1412
    %v3575 = vadd.f32 %v3543, %v1417
    %v3576 = vadd.f32 %v3544, %v1420
    %v3577 = vadd.f32 %v3545, %v1425
    %v3578 = vadd.f32 %v3546, %v1428
    %v3579 = vadd.f32 %v3547, %v1433
    %v3580 = vadd.f32 %v3548, %v1436
    %v3581 = vadd.f32 %v3549, %v1441
    %v3582 = vadd.f32 %v3550, %v1444
    %v3583 = vadd.f32 %v3551, %v1449
    %v3584 = vadd.f32 %v3552, %v1452
    %v3585 = vadd.f32 %v3553, %v1457
    %v3586 = vadd.f32 %v3554, %v1460
    %v3587 = vadd.f32 %v3555, %v1465
    %v3588 = vadd.f32 %v3556, %v1468
    %v3589 = vadd.f32 %v3557, %v1473
    %v3590 = vadd.f32 %v3558, %v1476
    %v3591 = vadd.f32 %v3559, %v1481
    %v3592 = vadd.f32 %v3560, %v1484
    %v3593 = vadd.f32 %v3561, %v1489
    %v3594 = vadd.f32 %v3562, %v1492
    %v3595 = vmul.f32 %v3563, 0.70710677
    %v3596 = vmul.f32 %v3564, 0.70710677
    %v3597 = vmul.f32 %v3565, 0.70710677
    %v3598 = vmul.f32 %v3566, 0.70710677
    %v3599 = vmul.f32 %v3567, 0.70710677
    %v3600 = vmul.f32 %v3568, 0.70710677
    %v3601 = vmul.f32 %v3569, 0.70710677
    %v3602 = vmul.f32 %v3570, 0.70710677
    %v3603 = vmul.f32 %v3571, 0.70710677
    %v3604 = vmul.f32 %v3572, 0.70710677
    %v3605 = vmul.f32 %v3573, 0.70710677
    %v3606 = vmul.f32 %v3574, 0.70710677
    %v3607 = vmul.f32 %v3575, 0.70710677
    %v3608 = vmul.f32 %v3576, 0.70710677
    %v3609 = vmul.f32 %v3577, 0.70710677
    %v3610 = vmul.f32 %v3578, 0.70710677
    %v3611 = vmul.f32 %v3579, 0.70710677
    %v3612 = vmul.f32 %v3580, 0.70710677
    %v3613 = vmul.f32 %v3581, 0.70710677
    %v3614 = vmul.f32 %v3582, 0.70710677
    %v3615 = vmul.f32 %v3583, 0.70710677
    %v3616 = vmul.f32 %v3584, 0.70710677
    %v3617 = vmul.f32 %v3585, 0.70710677
    %v3618 = vmul.f32 %v3586, 0.70710677
    %v3619 = vmul.f32 %v3587, 0.70710677
    %v3620 = vmul.f32 %v3588, 0.70710677
    %v3621 = vmul.f32 %v3589, 0.70710677
    %v3622 = vmul.f32 %v3590, 0.70710677
    %v3623 = vmul.f32 %v3591, 0.70710677
    %v3624 = vmul.f32 %v3592, 0.70710677
    %v3625 = vmul.f32 %v3593, 0.70710677
    %v3626 = vmul.f32 %v3594, 0.70710677
    %v3627 = vpack.c.bf16 %v3596, %v3595
    %v3628 = vpack.c.bf16 %v3598, %v3597
    %v3629 = vpack.c.bf16 %v3600, %v3599
    %v3630 = vpack.c.bf16 %v3602, %v3601
    %v3631 = vpack.c.bf16 %v3604, %v3603
    %v3632 = vpack.c.bf16 %v3606, %v3605
    %v3633 = vpack.c.bf16 %v3608, %v3607
    %v3634 = vpack.c.bf16 %v3610, %v3609
    %v3635 = vpack.c.bf16 %v3612, %v3611
    %v3636 = vpack.c.bf16 %v3614, %v3613
    %v3637 = vpack.c.bf16 %v3616, %v3615
    %v3638 = vpack.c.bf16 %v3618, %v3617
    %v3639 = vpack.c.bf16 %v3620, %v3619
    %v3640 = vpack.c.bf16 %v3622, %v3621
    %v3641 = vpack.c.bf16 %v3624, %v3623
    %v3642 = vpack.c.bf16 %v3626, %v3625
    %v3643 = vrot.slane %v3595, 7
    %v3644 = vrot.slane %v3596, 7
    %v3645 = vrot.slane %v3597, 7
    %v3646 = vrot.slane %v3598, 7
    %v3647 = vrot.slane %v3599, 7
    %v3648 = vrot.slane %v3600, 7
    %v3649 = vrot.slane %v3601, 7
    %v3650 = vrot.slane %v3602, 7
    %v3651 = vrot.slane %v3603, 7
    %v3652 = vrot.slane %v3604, 7
    %v3653 = vrot.slane %v3605, 7
    %v3654 = vrot.slane %v3606, 7
    %v3655 = vrot.slane %v3607, 7
    %v3656 = vrot.slane %v3608, 7
    %v3657 = vrot.slane %v3609, 7
    %v3658 = vrot.slane %v3610, 7
    %v3659 = vrot.slane %v3611, 7
    %v3660 = vrot.slane %v3612, 7
    %v3661 = vrot.slane %v3613, 7
    %v3662 = vrot.slane %v3614, 7
    %v3663 = vrot.slane %v3615, 7
    %v3664 = vrot.slane %v3616, 7
    %v3665 = vrot.slane %v3617, 7
    %v3666 = vrot.slane %v3618, 7
    %v3667 = vrot.slane %v3619, 7
    %v3668 = vrot.slane %v3620, 7
    %v3669 = vrot.slane %v3621, 7
    %v3670 = vrot.slane %v3622, 7
    %v3671 = vrot.slane %v3623, 7
    %v3672 = vrot.slane %v3624, 7
    %v3673 = vrot.slane %v3625, 7
    %v3674 = vrot.slane %v3626, 7
    %v3675 = vsel %vm1799, %v3673, %v3674
    %v3676 = vsel %vm1799, %v3672, %v3673
    %v3677 = vsel %vm1799, %v3671, %v3672
    %v3678 = vsel %vm1799, %v3670, %v3671
    %v3679 = vsel %vm1799, %v3669, %v3670
    %v3680 = vsel %vm1799, %v3668, %v3669
    %v3681 = vsel %vm1799, %v3667, %v3668
    %v3682 = vsel %vm1799, %v3666, %v3667
    %v3683 = vsel %vm1799, %v3665, %v3666
    %v3684 = vsel %vm1799, %v3664, %v3665
    %v3685 = vsel %vm1799, %v3663, %v3664
    %v3686 = vsel %vm1799, %v3662, %v3663
    %v3687 = vsel %vm1799, %v3661, %v3662
    %v3688 = vsel %vm1799, %v3660, %v3661
    %v3689 = vsel %vm1799, %v3659, %v3660
    %v3690 = vsel %vm1799, %v3658, %v3659
    %v3691 = vsel %vm1799, %v3657, %v3658
    %v3692 = vsel %vm1799, %v3656, %v3657
    %v3693 = vsel %vm1799, %v3655, %v3656
    %v3694 = vsel %vm1799, %v3654, %v3655
    %v3695 = vsel %vm1799, %v3653, %v3654
    %v3696 = vsel %vm1799, %v3652, %v3653
    %v3697 = vsel %vm1799, %v3651, %v3652
    %v3698 = vsel %vm1799, %v3650, %v3651
    %v3699 = vsel %vm1799, %v3649, %v3650
    %v3700 = vsel %vm1799, %v3648, %v3649
    %v3701 = vsel %vm1799, %v3647, %v3648
    %v3702 = vsel %vm1799, %v3646, %v3647
    %v3703 = vsel %vm1799, %v3645, %v3646
    %v3704 = vsel %vm1799, %v3644, %v3645
    %v3705 = vsel %vm1799, %v3643, %v3644
    %v3706 = vsel %vm1799, %v3674, %v3643
    %v3707 = vsel %vm1591, %v3706, 0.0
    %v3708 = vsel %vm1592, %v3705, 0.0
    %v3709 = vsel %vm1593, %v3704, 0.0
    %v3710 = vsel %vm1594, %v3703, 0.0
    %v3711 = vsel %vm1595, %v3702, 0.0
    %v3712 = vsel %vm1596, %v3701, 0.0
    %v3713 = vsel %vm1597, %v3700, 0.0
    %v3714 = vsel %vm1598, %v3699, 0.0
    %v3715 = vsel %vm1599, %v3698, 0.0
    %v3716 = vsel %vm1600, %v3697, 0.0
    %v3717 = vsel %vm1601, %v3696, 0.0
    %v3718 = vsel %vm1602, %v3695, 0.0
    %v3719 = vsel %vm1603, %v3694, 0.0
    %v3720 = vsel %vm1604, %v3693, 0.0
    %v3721 = vsel %vm1605, %v3692, 0.0
    %v3722 = vsel %vm1606, %v3691, 0.0
    %v3723 = vsel %vm1607, %v3690, 0.0
    %v3724 = vsel %vm1608, %v3689, 0.0
    %v3725 = vsel %vm1609, %v3688, 0.0
    %v3726 = vsel %vm1610, %v3687, 0.0
    %v3727 = vsel %vm1611, %v3686, 0.0
    %v3728 = vsel %vm1612, %v3685, 0.0
    %v3729 = vsel %vm1613, %v3684, 0.0
    %v3730 = vsel %vm1614, %v3683, 0.0
    %v3731 = vsel %vm1615, %v3682, 0.0
    %v3732 = vsel %vm1616, %v3681, 0.0
    %v3733 = vsel %vm1617, %v3680, 0.0
    %v3734 = vsel %vm1618, %v3679, 0.0
    %v3735 = vsel %vm1619, %v3678, 0.0
    %v3736 = vsel %vm1620, %v3677, 0.0
    %v3737 = vsel %vm1621, %v3676, 0.0
    %v3738 = vsel %vm1622, %v3675, 0.0
    %v3739 = vpack.c.bf16 %v3708, %v3707
    %v3740 = vpack.c.bf16 %v3710, %v3709
    %v3741 = vpack.c.bf16 %v3712, %v3711
    %v3742 = vpack.c.bf16 %v3714, %v3713
    %v3743 = vpack.c.bf16 %v3716, %v3715
    %v3744 = vpack.c.bf16 %v3718, %v3717
    %v3745 = vpack.c.bf16 %v3720, %v3719
    %v3746 = vpack.c.bf16 %v3722, %v3721
    %v3747 = vpack.c.bf16 %v3724, %v3723
    %v3748 = vpack.c.bf16 %v3726, %v3725
    %v3749 = vpack.c.bf16 %v3728, %v3727
    %v3750 = vpack.c.bf16 %v3730, %v3729
    %v3751 = vpack.c.bf16 %v3732, %v3731
    %v3752 = vpack.c.bf16 %v3734, %v3733
    %v3753 = vpack.c.bf16 %v3736, %v3735
    %v3754 = vpack.c.bf16 %v3738, %v3737
    %v3755 = vld [vmem:[#allocation2 + $0xf4] sm:$0xf]
    %v3756 = vld [vmem:[#allocation2 + $0xf8] sm:$0xf]
    %v3757 = vld [vmem:[#allocation2 + $0xfc] sm:$0xf]
    %v3758 = vld [vmem:[#allocation2 + $0x100] sm:$0xf]
    %v3759 = vld [vmem:[#allocation2 + $0x124] sm:$0xf]
    %v3760 = vld [vmem:[#allocation2 + $0x128] sm:$0xf]
    %v3761 = vld [vmem:[#allocation2 + $0x12c] sm:$0xf]
    %v3762 = vld [vmem:[#allocation2 + $0x130] sm:$0xf]
    %v3763 = vld [vmem:[#allocation2 + $0x104] sm:$0xf]
    %v3764 = vld [vmem:[#allocation2 + $0x108] sm:$0xf]
    %v3765 = vld [vmem:[#allocation2 + $0x10c] sm:$0xf]
    %v3766 = vld [vmem:[#allocation2 + $0x110] sm:$0xf]
    %v3771 = vunpack.c.l.b16 %v3763
    %v3772 = vunpack.c.l.b16 %v3764
    %v3773 = vunpack.c.l.b16 %v3765
    %v3774 = vunpack.c.l.b16 %v3766
    %v3775 = vpack.c.b16 %v3772, %v3771
    %v3776 = vpack.c.b16 %v3774, %v3773
    %v3780 = vsel %vm1285, %v3627, 0
    %v3783 = vsel %vm1285, %v3628, 0
    %v3786 = vsel %vm1285, %v3629, 0
    %v3789 = vsel %vm1285, %v3630, 0
    %v3792 = vsel %vm1285, %v3631, 0
    %v3795 = vsel %vm1285, %v3632, 0
    %v3798 = vsel %vm1285, %v3633, 0
    %v3801 = vsel %vm1285, %v3634, 0
    %v3804 = vsel %vm1285, %v3635, 0
    %v3807 = vsel %vm1285, %v3636, 0
    %v3810 = vsel %vm1285, %v3637, 0
    %v3813 = vsel %vm1285, %v3638, 0
    %v3816 = vsel %vm1285, %v3639, 0
    %v3819 = vsel %vm1285, %v3640, 0
    %v3822 = vsel %vm1285, %v3641, 0
    %v3825 = vsel %vm1285, %v3642, 0
    %3827 = vmatprep.subr.bf16.mxu0 0
    %3828 = vmatpush1.bf16.msra.mxu0 0
    %3829 = vmatprep.subr.bf16.mxu0 0
    %3830 = vmatpush1.bf16.msra.mxu0 0
    %3831 = vmatprep.subr.bf16.mxu0 0
    %3832 = vmatpush1.bf16.msra.mxu0 0
    %3833 = vmatprep.subr.bf16.mxu0 0
    %3834 = vmatpush1.bf16.msra.mxu0 0
    %3835 = vmatprep.subr.bf16.mxu0 0
    %3836 = vmatpush1.bf16.msra.mxu0 0
    %3837 = vmatprep.subr.bf16.mxu0 0
    %3838 = vmatpush1.bf16.msra.mxu0 0
    %3839 = vmatprep.subr.bf16.mxu0 0
    %3840 = vmatpush1.bf16.msra.mxu0 %v3776
    %3841 = vmatprep.subr.bf16.mxu0 0
    %3842 = vmatpush1.bf16.msra.mxu0 %v3775
    %3843 = vmatprep.subr.bf16.mxu0 0
    %3844 = vmatpush2.bf16.msra.mxu0 0
    %3845 = vmatprep.subr.bf16.mxu0 0
    %3846 = vmatpush2.bf16.msra.mxu0 0
    %3847 = vmatprep.subr.bf16.mxu0 0
    %3848 = vmatpush2.bf16.msra.mxu0 0
    %3849 = vmatprep.subr.bf16.mxu0 0
    %3850 = vmatpush2.bf16.msra.mxu0 0
    %3851 = vmatprep.subr.bf16.mxu0 0
    %3852 = vmatpush2.bf16.msra.mxu0 0
    %3853 = vmatprep.subr.bf16.mxu0 0
    %3854 = vmatpush2.bf16.msra.mxu0 0
    %3855 = vmatprep.subr.bf16.mxu0 0
    %3856 = vmatpush2.bf16.msra.mxu0 0
    %3857 = vmatprep.subr.bf16.mxu0 0
    %3858 = vmatpush2.bf16.msra.mxu0 0
    %3859 = vmatprep.mubr.bf16.mxu0 0
    %3860 = vmatmul.mubr.bf16.gmra.mxu0 %v3780
    %v3861 = vpop.f32.mrf.mxu0
    %v3862 = vadd.f32 0.0, %v3861
    %v3863 = vpop.f32.mrf.mxu0
    %v3864 = vpop.f32.mrf.mxu0
    %v3865 = vadd.f32 0.0, %v3864
    %v3866 = vpop.f32.mrf.mxu0
    %3867 = vmatprep.mubr.bf16.mxu0 0
    %3868 = vmatmul.mubr.bf16.gmra.mxu0 %v3783
    %v3869 = vpop.f32.mrf.mxu0
    %v3870 = vadd.f32 0.0, %v3869
    %v3871 = vpop.f32.mrf.mxu0
    %v3872 = vpop.f32.mrf.mxu0
    %v3873 = vadd.f32 0.0, %v3872
    %v3874 = vpop.f32.mrf.mxu0
    %3875 = vmatprep.mubr.bf16.mxu0 0
    %3876 = vmatmul.mubr.bf16.gmra.mxu0 %v3786
    %v3877 = vpop.f32.mrf.mxu0
    %v3878 = vadd.f32 0.0, %v3877
    %v3879 = vpop.f32.mrf.mxu0
    %v3880 = vpop.f32.mrf.mxu0
    %v3881 = vadd.f32 0.0, %v3880
    %v3882 = vpop.f32.mrf.mxu0
    %3883 = vmatprep.mubr.bf16.mxu0 0
    %3884 = vmatmul.mubr.bf16.gmra.mxu0 %v3789
    %v3885 = vpop.f32.mrf.mxu0
    %v3886 = vadd.f32 0.0, %v3885
    %v3887 = vpop.f32.mrf.mxu0
    %v3888 = vpop.f32.mrf.mxu0
    %v3889 = vadd.f32 0.0, %v3888
    %v3890 = vpop.f32.mrf.mxu0
    %3891 = vmatprep.mubr.bf16.mxu0 0
    %3892 = vmatmul.mubr.bf16.gmra.mxu0 %v3792
    %v3893 = vpop.f32.mrf.mxu0
    %v3894 = vadd.f32 0.0, %v3893
    %v3895 = vpop.f32.mrf.mxu0
    %v3896 = vpop.f32.mrf.mxu0
    %v3897 = vadd.f32 0.0, %v3896
    %v3898 = vpop.f32.mrf.mxu0
    %3899 = vmatprep.mubr.bf16.mxu0 0
    %3900 = vmatmul.mubr.bf16.gmra.mxu0 %v3795
    %v3901 = vpop.f32.mrf.mxu0
    %v3902 = vadd.f32 0.0, %v3901
    %v3903 = vpop.f32.mrf.mxu0
    %v3904 = vpop.f32.mrf.mxu0
    %v3905 = vadd.f32 0.0, %v3904
    %v3906 = vpop.f32.mrf.mxu0
    %3907 = vmatprep.mubr.bf16.mxu0 0
    %3908 = vmatmul.mubr.bf16.gmra.mxu0 %v3798
    %v3909 = vpop.f32.mrf.mxu0
    %v3910 = vadd.f32 0.0, %v3909
    %v3911 = vpop.f32.mrf.mxu0
    %v3912 = vpop.f32.mrf.mxu0
    %v3913 = vadd.f32 0.0, %v3912
    %v3914 = vpop.f32.mrf.mxu0
    %3915 = vmatprep.mubr.bf16.mxu0 0
    %3916 = vmatmul.mubr.bf16.gmra.mxu0 %v3801
    %v3917 = vpop.f32.mrf.mxu0
    %v3918 = vadd.f32 0.0, %v3917
    %v3919 = vpop.f32.mrf.mxu0
    %v3920 = vpop.f32.mrf.mxu0
    %v3921 = vadd.f32 0.0, %v3920
    %v3922 = vpop.f32.mrf.mxu0
    %3923 = vmatprep.mubr.bf16.mxu0 0
    %3924 = vmatmul.mubr.bf16.gmra.mxu0 %v3804
    %v3925 = vpop.f32.mrf.mxu0
    %v3926 = vadd.f32 0.0, %v3925
    %v3927 = vpop.f32.mrf.mxu0
    %v3928 = vpop.f32.mrf.mxu0
    %v3929 = vadd.f32 0.0, %v3928
    %v3930 = vpop.f32.mrf.mxu0
    %3931 = vmatprep.mubr.bf16.mxu0 0
    %3932 = vmatmul.mubr.bf16.gmra.mxu0 %v3807
    %v3933 = vpop.f32.mrf.mxu0
    %v3934 = vadd.f32 0.0, %v3933
    %v3935 = vpop.f32.mrf.mxu0
    %v3936 = vpop.f32.mrf.mxu0
    %v3937 = vadd.f32 0.0, %v3936
    %v3938 = vpop.f32.mrf.mxu0
    %3939 = vmatprep.mubr.bf16.mxu0 0
    %3940 = vmatmul.mubr.bf16.gmra.mxu0 %v3810
    %v3941 = vpop.f32.mrf.mxu0
    %v3942 = vadd.f32 0.0, %v3941
    %v3943 = vpop.f32.mrf.mxu0
    %v3944 = vpop.f32.mrf.mxu0
    %v3945 = vadd.f32 0.0, %v3944
    %v3946 = vpop.f32.mrf.mxu0
    %3947 = vmatprep.mubr.bf16.mxu0 0
    %3948 = vmatmul.mubr.bf16.gmra.mxu0 %v3813
    %v3949 = vpop.f32.mrf.mxu0
    %v3950 = vadd.f32 0.0, %v3949
    %v3951 = vpop.f32.mrf.mxu0
    %v3952 = vpop.f32.mrf.mxu0
    %v3953 = vadd.f32 0.0, %v3952
    %v3954 = vpop.f32.mrf.mxu0
    %3955 = vmatprep.mubr.bf16.mxu0 0
    %3956 = vmatmul.mubr.bf16.gmra.mxu0 %v3816
    %v3957 = vpop.f32.mrf.mxu0
    %v3958 = vadd.f32 0.0, %v3957
    %v3959 = vpop.f32.mrf.mxu0
    %v3960 = vpop.f32.mrf.mxu0
    %v3961 = vadd.f32 0.0, %v3960
    %v3962 = vpop.f32.mrf.mxu0
    %3963 = vmatprep.mubr.bf16.mxu0 0
    %3964 = vmatmul.mubr.bf16.gmra.mxu0 %v3819
    %v3965 = vpop.f32.mrf.mxu0
    %v3966 = vadd.f32 0.0, %v3965
    %v3967 = vpop.f32.mrf.mxu0
    %v3968 = vpop.f32.mrf.mxu0
    %v3969 = vadd.f32 0.0, %v3968
    %v3970 = vpop.f32.mrf.mxu0
    %3971 = vmatprep.mubr.bf16.mxu0 0
    %3972 = vmatmul.mubr.bf16.gmra.mxu0 %v3822
    %v3973 = vpop.f32.mrf.mxu0
    %v3974 = vadd.f32 0.0, %v3973
    %v3975 = vpop.f32.mrf.mxu0
    %v3976 = vpop.f32.mrf.mxu0
    %v3977 = vadd.f32 0.0, %v3976
    %v3978 = vpop.f32.mrf.mxu0
    %3979 = vmatprep.mubr.bf16.mxu0 0
    %3980 = vmatmul.mubr.bf16.gmra.mxu0 %v3825
    %v3981 = vpop.f32.mrf.mxu0
    %v3982 = vadd.f32 0.0, %v3981
    %v3983 = vpop.f32.mrf.mxu0
    %v3984 = vpop.f32.mrf.mxu0
    %v3985 = vadd.f32 0.0, %v3984
    %v3986 = vpop.f32.mrf.mxu0
    %3987 = vdwg.mxu0
    %v3992 = vunpack.c.l.b16 %v3755
    %v3993 = vunpack.c.l.b16 %v3756
    %v3994 = vunpack.c.l.b16 %v3757
    %v3995 = vunpack.c.l.b16 %v3758
    %v3996 = vpack.c.b16 %v3993, %v3992
    %v3997 = vpack.c.b16 %v3995, %v3994
    %v4001 = vsel %vm1285, %v3739, 0
    %v4004 = vsel %vm1285, %v3740, 0
    %v4007 = vsel %vm1285, %v3741, 0
    %v4010 = vsel %vm1285, %v3742, 0
    %v4013 = vsel %vm1285, %v3743, 0
    %v4016 = vsel %vm1285, %v3744, 0
    %v4019 = vsel %vm1285, %v3745, 0
    %v4022 = vsel %vm1285, %v3746, 0
    %v4025 = vsel %vm1285, %v3747, 0
    %v4028 = vsel %vm1285, %v3748, 0
    %v4031 = vsel %vm1285, %v3749, 0
    %v4034 = vsel %vm1285, %v3750, 0
    %v4037 = vsel %vm1285, %v3751, 0
    %v4040 = vsel %vm1285, %v3752, 0
    %v4043 = vsel %vm1285, %v3753, 0
    %v4046 = vsel %vm1285, %v3754, 0
    %4048 = vmatprep.subr.bf16.mxu0 0
    %4049 = vmatpush1.bf16.msra.mxu0 0
    %4050 = vmatprep.subr.bf16.mxu0 0
    %4051 = vmatpush1.bf16.msra.mxu0 0
    %4052 = vmatprep.subr.bf16.mxu0 0
    %4053 = vmatpush1.bf16.msra.mxu0 0
    %4054 = vmatprep.subr.bf16.mxu0 0
    %4055 = vmatpush1.bf16.msra.mxu0 0
    %4056 = vmatprep.subr.bf16.mxu0 0
    %4057 = vmatpush1.bf16.msra.mxu0 0
    %4058 = vmatprep.subr.bf16.mxu0 0
    %4059 = vmatpush1.bf16.msra.mxu0 0
    %4060 = vmatprep.subr.bf16.mxu0 0
    %4061 = vmatpush1.bf16.msra.mxu0 %v3997
    %4062 = vmatprep.subr.bf16.mxu0 0
    %4063 = vmatpush1.bf16.msra.mxu0 %v3996
    %4064 = vmatprep.subr.bf16.mxu0 0
    %4065 = vmatpush2.bf16.msra.mxu0 0
    %4066 = vmatprep.subr.bf16.mxu0 0
    %4067 = vmatpush2.bf16.msra.mxu0 0
    %4068 = vmatprep.subr.bf16.mxu0 0
    %4069 = vmatpush2.bf16.msra.mxu0 0
    %4070 = vmatprep.subr.bf16.mxu0 0
    %4071 = vmatpush2.bf16.msra.mxu0 0
    %4072 = vmatprep.subr.bf16.mxu0 0
    %4073 = vmatpush2.bf16.msra.mxu0 0
    %4074 = vmatprep.subr.bf16.mxu0 0
    %4075 = vmatpush2.bf16.msra.mxu0 0
    %4076 = vmatprep.subr.bf16.mxu0 0
    %4077 = vmatpush2.bf16.msra.mxu0 0
    %4078 = vmatprep.subr.bf16.mxu0 0
    %4079 = vmatpush2.bf16.msra.mxu0 0
    %4080 = vmatprep.mubr.bf16.mxu0 0
    %4081 = vmatmul.mubr.bf16.gmra.mxu0 %v4001
    %v4082 = vpop.f32.mrf.mxu0
    %v4083 = vadd.f32 %v3862, %v4082
    %v4084 = vpop.f32.mrf.mxu0
    %v4085 = vpop.f32.mrf.mxu0
    %v4086 = vadd.f32 %v3865, %v4085
    %v4087 = vpop.f32.mrf.mxu0
    %4088 = vmatprep.mubr.bf16.mxu0 0
    %4089 = vmatmul.mubr.bf16.gmra.mxu0 %v4004
    %v4090 = vpop.f32.mrf.mxu0
    %v4091 = vadd.f32 %v3870, %v4090
    %v4092 = vpop.f32.mrf.mxu0
    %v4093 = vpop.f32.mrf.mxu0
    %v4094 = vadd.f32 %v3873, %v4093
    %v4095 = vpop.f32.mrf.mxu0
    %4096 = vmatprep.mubr.bf16.mxu0 0
    %4097 = vmatmul.mubr.bf16.gmra.mxu0 %v4007
    %v4098 = vpop.f32.mrf.mxu0
    %v4099 = vadd.f32 %v3878, %v4098
    %v4100 = vpop.f32.mrf.mxu0
    %v4101 = vpop.f32.mrf.mxu0
    %v4102 = vadd.f32 %v3881, %v4101
    %v4103 = vpop.f32.mrf.mxu0
    %4104 = vmatprep.mubr.bf16.mxu0 0
    %4105 = vmatmul.mubr.bf16.gmra.mxu0 %v4010
    %v4106 = vpop.f32.mrf.mxu0
    %v4107 = vadd.f32 %v3886, %v4106
    %v4108 = vpop.f32.mrf.mxu0
    %v4109 = vpop.f32.mrf.mxu0
    %v4110 = vadd.f32 %v3889, %v4109
    %v4111 = vpop.f32.mrf.mxu0
    %4112 = vmatprep.mubr.bf16.mxu0 0
    %4113 = vmatmul.mubr.bf16.gmra.mxu0 %v4013
    %v4114 = vpop.f32.mrf.mxu0
    %v4115 = vadd.f32 %v3894, %v4114
    %v4116 = vpop.f32.mrf.mxu0
    %v4117 = vpop.f32.mrf.mxu0
    %v4118 = vadd.f32 %v3897, %v4117
    %v4119 = vpop.f32.mrf.mxu0
    %4120 = vmatprep.mubr.bf16.mxu0 0
    %4121 = vmatmul.mubr.bf16.gmra.mxu0 %v4016
    %v4122 = vpop.f32.mrf.mxu0
    %v4123 = vadd.f32 %v3902, %v4122
    %v4124 = vpop.f32.mrf.mxu0
    %v4125 = vpop.f32.mrf.mxu0
    %v4126 = vadd.f32 %v3905, %v4125
    %v4127 = vpop.f32.mrf.mxu0
    %4128 = vmatprep.mubr.bf16.mxu0 0
    %4129 = vmatmul.mubr.bf16.gmra.mxu0 %v4019
    %v4130 = vpop.f32.mrf.mxu0
    %v4131 = vadd.f32 %v3910, %v4130
    %v4132 = vpop.f32.mrf.mxu0
    %v4133 = vpop.f32.mrf.mxu0
    %v4134 = vadd.f32 %v3913, %v4133
    %v4135 = vpop.f32.mrf.mxu0
    %4136 = vmatprep.mubr.bf16.mxu0 0
    %4137 = vmatmul.mubr.bf16.gmra.mxu0 %v4022
    %v4138 = vpop.f32.mrf.mxu0
    %v4139 = vadd.f32 %v3918, %v4138
    %v4140 = vpop.f32.mrf.mxu0
    %v4141 = vpop.f32.mrf.mxu0
    %v4142 = vadd.f32 %v3921, %v4141
    %v4143 = vpop.f32.mrf.mxu0
    %4144 = vmatprep.mubr.bf16.mxu0 0
    %4145 = vmatmul.mubr.bf16.gmra.mxu0 %v4025
    %v4146 = vpop.f32.mrf.mxu0
    %v4147 = vadd.f32 %v3926, %v4146
    %v4148 = vpop.f32.mrf.mxu0
    %v4149 = vpop.f32.mrf.mxu0
    %v4150 = vadd.f32 %v3929, %v4149
    %v4151 = vpop.f32.mrf.mxu0
    %4152 = vmatprep.mubr.bf16.mxu0 0
    %4153 = vmatmul.mubr.bf16.gmra.mxu0 %v4028
    %v4154 = vpop.f32.mrf.mxu0
    %v4155 = vadd.f32 %v3934, %v4154
    %v4156 = vpop.f32.mrf.mxu0
    %v4157 = vpop.f32.mrf.mxu0
    %v4158 = vadd.f32 %v3937, %v4157
    %v4159 = vpop.f32.mrf.mxu0
    %4160 = vmatprep.mubr.bf16.mxu0 0
    %4161 = vmatmul.mubr.bf16.gmra.mxu0 %v4031
    %v4162 = vpop.f32.mrf.mxu0
    %v4163 = vadd.f32 %v3942, %v4162
    %v4164 = vpop.f32.mrf.mxu0
    %v4165 = vpop.f32.mrf.mxu0
    %v4166 = vadd.f32 %v3945, %v4165
    %v4167 = vpop.f32.mrf.mxu0
    %4168 = vmatprep.mubr.bf16.mxu0 0
    %4169 = vmatmul.mubr.bf16.gmra.mxu0 %v4034
    %v4170 = vpop.f32.mrf.mxu0
    %v4171 = vadd.f32 %v3950, %v4170
    %v4172 = vpop.f32.mrf.mxu0
    %v4173 = vpop.f32.mrf.mxu0
    %v4174 = vadd.f32 %v3953, %v4173
    %v4175 = vpop.f32.mrf.mxu0
    %4176 = vmatprep.mubr.bf16.mxu0 0
    %4177 = vmatmul.mubr.bf16.gmra.mxu0 %v4037
    %v4178 = vpop.f32.mrf.mxu0
    %v4179 = vadd.f32 %v3958, %v4178
    %v4180 = vpop.f32.mrf.mxu0
    %v4181 = vpop.f32.mrf.mxu0
    %v4182 = vadd.f32 %v3961, %v4181
    %v4183 = vpop.f32.mrf.mxu0
    %4184 = vmatprep.mubr.bf16.mxu0 0
    %4185 = vmatmul.mubr.bf16.gmra.mxu0 %v4040
    %v4186 = vpop.f32.mrf.mxu0
    %v4187 = vadd.f32 %v3966, %v4186
    %v4188 = vpop.f32.mrf.mxu0
    %v4189 = vpop.f32.mrf.mxu0
    %v4190 = vadd.f32 %v3969, %v4189
    %v4191 = vpop.f32.mrf.mxu0
    %4192 = vmatprep.mubr.bf16.mxu0 0
    %4193 = vmatmul.mubr.bf16.gmra.mxu0 %v4043
    %v4194 = vpop.f32.mrf.mxu0
    %v4195 = vadd.f32 %v3974, %v4194
    %v4196 = vpop.f32.mrf.mxu0
    %v4197 = vpop.f32.mrf.mxu0
    %v4198 = vadd.f32 %v3977, %v4197
    %v4199 = vpop.f32.mrf.mxu0
    %4200 = vmatprep.mubr.bf16.mxu0 0
    %4201 = vmatmul.mubr.bf16.gmra.mxu0 %v4046
    %v4202 = vpop.f32.mrf.mxu0
    %v4203 = vadd.f32 %v3982, %v4202
    %v4204 = vpop.f32.mrf.mxu0
    %v4205 = vpop.f32.mrf.mxu0
    %v4206 = vadd.f32 %v3985, %v4205
    %v4207 = vpop.f32.mrf.mxu0
    %4208 = vdwg.mxu0
    %v4209 = vld [vmem:[#allocation2 + $0x134] sm:$0xf]
    %v4210 = vld [vmem:[#allocation2 + $0x138] sm:$0xf]
    %v4211 = vld [vmem:[#allocation2 + $0x13c] sm:$0xf]
    %v4212 = vld [vmem:[#allocation2 + $0x140] sm:$0xf]
    %v4217 = vunpack.c.l.b16 %v4209
    %v4218 = vunpack.c.l.b16 %v4210
    %v4219 = vunpack.c.l.b16 %v4211
    %v4220 = vunpack.c.l.b16 %v4212
    %v4221 = vpack.c.b16 %v4218, %v4217
    %v4222 = vpack.c.b16 %v4220, %v4219
    %4225 = vmatprep.subr.bf16.mxu0 0
    %4226 = vmatpush1.bf16.msra.mxu0 0
    %4227 = vmatprep.subr.bf16.mxu0 0
    %4228 = vmatpush1.bf16.msra.mxu0 0
    %4229 = vmatprep.subr.bf16.mxu0 0
    %4230 = vmatpush1.bf16.msra.mxu0 0
    %4231 = vmatprep.subr.bf16.mxu0 0
    %4232 = vmatpush1.bf16.msra.mxu0 0
    %4233 = vmatprep.subr.bf16.mxu0 0
    %4234 = vmatpush1.bf16.msra.mxu0 0
    %4235 = vmatprep.subr.bf16.mxu0 0
    %4236 = vmatpush1.bf16.msra.mxu0 0
    %4237 = vmatprep.subr.bf16.mxu0 0
    %4238 = vmatpush1.bf16.msra.mxu0 %v4222
    %4239 = vmatprep.subr.bf16.mxu0 0
    %4240 = vmatpush1.bf16.msra.mxu0 %v4221
    %4241 = vmatprep.subr.bf16.mxu0 0
    %4242 = vmatpush2.bf16.msra.mxu0 0
    %4243 = vmatprep.subr.bf16.mxu0 0
    %4244 = vmatpush2.bf16.msra.mxu0 0
    %4245 = vmatprep.subr.bf16.mxu0 0
    %4246 = vmatpush2.bf16.msra.mxu0 0
    %4247 = vmatprep.subr.bf16.mxu0 0
    %4248 = vmatpush2.bf16.msra.mxu0 0
    %4249 = vmatprep.subr.bf16.mxu0 0
    %4250 = vmatpush2.bf16.msra.mxu0 0
    %4251 = vmatprep.subr.bf16.mxu0 0
    %4252 = vmatpush2.bf16.msra.mxu0 0
    %4253 = vmatprep.subr.bf16.mxu0 0
    %4254 = vmatpush2.bf16.msra.mxu0 0
    %4255 = vmatprep.subr.bf16.mxu0 0
    %4256 = vmatpush2.bf16.msra.mxu0 0
    %4257 = vmatprep.mubr.bf16.mxu0 0
    %4258 = vmatmul.mubr.bf16.gmra.mxu0 %v3780
    %v4259 = vpop.f32.mrf.mxu0
    %v4260 = vadd.f32 0.0, %v4259
    %v4261 = vpop.f32.mrf.mxu0
    %v4262 = vpop.f32.mrf.mxu0
    %v4263 = vadd.f32 0.0, %v4262
    %v4264 = vpop.f32.mrf.mxu0
    %4265 = vmatprep.mubr.bf16.mxu0 0
    %4266 = vmatmul.mubr.bf16.gmra.mxu0 %v3783
    %v4267 = vpop.f32.mrf.mxu0
    %v4268 = vadd.f32 0.0, %v4267
    %v4269 = vpop.f32.mrf.mxu0
    %v4270 = vpop.f32.mrf.mxu0
    %v4271 = vadd.f32 0.0, %v4270
    %v4272 = vpop.f32.mrf.mxu0
    %4273 = vmatprep.mubr.bf16.mxu0 0
    %4274 = vmatmul.mubr.bf16.gmra.mxu0 %v3786
    %v4275 = vpop.f32.mrf.mxu0
    %v4276 = vadd.f32 0.0, %v4275
    %v4277 = vpop.f32.mrf.mxu0
    %v4278 = vpop.f32.mrf.mxu0
    %v4279 = vadd.f32 0.0, %v4278
    %v4280 = vpop.f32.mrf.mxu0
    %4281 = vmatprep.mubr.bf16.mxu0 0
    %4282 = vmatmul.mubr.bf16.gmra.mxu0 %v3789
    %v4283 = vpop.f32.mrf.mxu0
    %v4284 = vadd.f32 0.0, %v4283
    %v4285 = vpop.f32.mrf.mxu0
    %v4286 = vpop.f32.mrf.mxu0
    %v4287 = vadd.f32 0.0, %v4286
    %v4288 = vpop.f32.mrf.mxu0
    %4289 = vmatprep.mubr.bf16.mxu0 0
    %4290 = vmatmul.mubr.bf16.gmra.mxu0 %v3792
    %v4291 = vpop.f32.mrf.mxu0
    %v4292 = vadd.f32 0.0, %v4291
    %v4293 = vpop.f32.mrf.mxu0
    %v4294 = vpop.f32.mrf.mxu0
    %v4295 = vadd.f32 0.0, %v4294
    %v4296 = vpop.f32.mrf.mxu0
    %4297 = vmatprep.mubr.bf16.mxu0 0
    %4298 = vmatmul.mubr.bf16.gmra.mxu0 %v3795
    %v4299 = vpop.f32.mrf.mxu0
    %v4300 = vadd.f32 0.0, %v4299
    %v4301 = vpop.f32.mrf.mxu0
    %v4302 = vpop.f32.mrf.mxu0
    %v4303 = vadd.f32 0.0, %v4302
    %v4304 = vpop.f32.mrf.mxu0
    %4305 = vmatprep.mubr.bf16.mxu0 0
    %4306 = vmatmul.mubr.bf16.gmra.mxu0 %v3798
    %v4307 = vpop.f32.mrf.mxu0
    %v4308 = vadd.f32 0.0, %v4307
    %v4309 = vpop.f32.mrf.mxu0
    %v4310 = vpop.f32.mrf.mxu0
    %v4311 = vadd.f32 0.0, %v4310
    %v4312 = vpop.f32.mrf.mxu0
    %4313 = vmatprep.mubr.bf16.mxu0 0
    %4314 = vmatmul.mubr.bf16.gmra.mxu0 %v3801
    %v4315 = vpop.f32.mrf.mxu0
    %v4316 = vadd.f32 0.0, %v4315
    %v4317 = vpop.f32.mrf.mxu0
    %v4318 = vpop.f32.mrf.mxu0
    %v4319 = vadd.f32 0.0, %v4318
    %v4320 = vpop.f32.mrf.mxu0
    %4321 = vmatprep.mubr.bf16.mxu0 0
    %4322 = vmatmul.mubr.bf16.gmra.mxu0 %v3804
    %v4323 = vpop.f32.mrf.mxu0
    %v4324 = vadd.f32 0.0, %v4323
    %v4325 = vpop.f32.mrf.mxu0
    %v4326 = vpop.f32.mrf.mxu0
    %v4327 = vadd.f32 0.0, %v4326
    %v4328 = vpop.f32.mrf.mxu0
    %4329 = vmatprep.mubr.bf16.mxu0 0
    %4330 = vmatmul.mubr.bf16.gmra.mxu0 %v3807
    %v4331 = vpop.f32.mrf.mxu0
    %v4332 = vadd.f32 0.0, %v4331
    %v4333 = vpop.f32.mrf.mxu0
    %v4334 = vpop.f32.mrf.mxu0
    %v4335 = vadd.f32 0.0, %v4334
    %v4336 = vpop.f32.mrf.mxu0
    %4337 = vmatprep.mubr.bf16.mxu0 0
    %4338 = vmatmul.mubr.bf16.gmra.mxu0 %v3810
    %v4339 = vpop.f32.mrf.mxu0
    %v4340 = vadd.f32 0.0, %v4339
    %v4341 = vpop.f32.mrf.mxu0
    %v4342 = vpop.f32.mrf.mxu0
    %v4343 = vadd.f32 0.0, %v4342
    %v4344 = vpop.f32.mrf.mxu0
    %4345 = vmatprep.mubr.bf16.mxu0 0
    %4346 = vmatmul.mubr.bf16.gmra.mxu0 %v3813
    %v4347 = vpop.f32.mrf.mxu0
    %v4348 = vadd.f32 0.0, %v4347
    %v4349 = vpop.f32.mrf.mxu0
    %v4350 = vpop.f32.mrf.mxu0
    %v4351 = vadd.f32 0.0, %v4350
    %v4352 = vpop.f32.mrf.mxu0
    %4353 = vmatprep.mubr.bf16.mxu0 0
    %4354 = vmatmul.mubr.bf16.gmra.mxu0 %v3816
    %v4355 = vpop.f32.mrf.mxu0
    %v4356 = vadd.f32 0.0, %v4355
    %v4357 = vpop.f32.mrf.mxu0
    %v4358 = vpop.f32.mrf.mxu0
    %v4359 = vadd.f32 0.0, %v4358
    %v4360 = vpop.f32.mrf.mxu0
    %4361 = vmatprep.mubr.bf16.mxu0 0
    %4362 = vmatmul.mubr.bf16.gmra.mxu0 %v3819
    %v4363 = vpop.f32.mrf.mxu0
    %v4364 = vadd.f32 0.0, %v4363
    %v4365 = vpop.f32.mrf.mxu0
    %v4366 = vpop.f32.mrf.mxu0
    %v4367 = vadd.f32 0.0, %v4366
    %v4368 = vpop.f32.mrf.mxu0
    %4369 = vmatprep.mubr.bf16.mxu0 0
    %4370 = vmatmul.mubr.bf16.gmra.mxu0 %v3822
    %v4371 = vpop.f32.mrf.mxu0
    %v4372 = vadd.f32 0.0, %v4371
    %v4373 = vpop.f32.mrf.mxu0
    %v4374 = vpop.f32.mrf.mxu0
    %v4375 = vadd.f32 0.0, %v4374
    %v4376 = vpop.f32.mrf.mxu0
    %4377 = vmatprep.mubr.bf16.mxu0 0
    %4378 = vmatmul.mubr.bf16.gmra.mxu0 %v3825
    %v4379 = vpop.f32.mrf.mxu0
    %v4380 = vadd.f32 0.0, %v4379
    %v4381 = vpop.f32.mrf.mxu0
    %v4382 = vpop.f32.mrf.mxu0
    %v4383 = vadd.f32 0.0, %v4382
    %v4384 = vpop.f32.mrf.mxu0
    %4385 = vdwg.mxu0
    %v4390 = vunpack.c.l.b16 %v3759
    %v4391 = vunpack.c.l.b16 %v3760
    %v4392 = vunpack.c.l.b16 %v3761
    %v4393 = vunpack.c.l.b16 %v3762
    %v4394 = vpack.c.b16 %v4391, %v4390
    %v4395 = vpack.c.b16 %v4393, %v4392
    %4398 = vmatprep.subr.bf16.mxu0 0
    %4399 = vmatpush1.bf16.msra.mxu0 0
    %4400 = vmatprep.subr.bf16.mxu0 0
    %4401 = vmatpush1.bf16.msra.mxu0 0
    %4402 = vmatprep.subr.bf16.mxu0 0
    %4403 = vmatpush1.bf16.msra.mxu0 0
    %4404 = vmatprep.subr.bf16.mxu0 0
    %4405 = vmatpush1.bf16.msra.mxu0 0
    %4406 = vmatprep.subr.bf16.mxu0 0
    %4407 = vmatpush1.bf16.msra.mxu0 0
    %4408 = vmatprep.subr.bf16.mxu0 0
    %4409 = vmatpush1.bf16.msra.mxu0 0
    %4410 = vmatprep.subr.bf16.mxu0 0
    %4411 = vmatpush1.bf16.msra.mxu0 %v4395
    %4412 = vmatprep.subr.bf16.mxu0 0
    %4413 = vmatpush1.bf16.msra.mxu0 %v4394
    %4414 = vmatprep.subr.bf16.mxu0 0
    %4415 = vmatpush2.bf16.msra.mxu0 0
    %4416 = vmatprep.subr.bf16.mxu0 0
    %4417 = vmatpush2.bf16.msra.mxu0 0
    %4418 = vmatprep.subr.bf16.mxu0 0
    %4419 = vmatpush2.bf16.msra.mxu0 0
    %4420 = vmatprep.subr.bf16.mxu0 0
    %4421 = vmatpush2.bf16.msra.mxu0 0
    %4422 = vmatprep.subr.bf16.mxu0 0
    %4423 = vmatpush2.bf16.msra.mxu0 0
    %4424 = vmatprep.subr.bf16.mxu0 0
    %4425 = vmatpush2.bf16.msra.mxu0 0
    %4426 = vmatprep.subr.bf16.mxu0 0
    %4427 = vmatpush2.bf16.msra.mxu0 0
    %4428 = vmatprep.subr.bf16.mxu0 0
    %4429 = vmatpush2.bf16.msra.mxu0 0
    %4430 = vmatprep.mubr.bf16.mxu0 0
    %4431 = vmatmul.mubr.bf16.gmra.mxu0 %v4001
    %v4432 = vpop.f32.mrf.mxu0
    %v4433 = vadd.f32 %v4260, %v4432
    %v4434 = vpop.f32.mrf.mxu0
    %v4435 = vpop.f32.mrf.mxu0
    %v4436 = vadd.f32 %v4263, %v4435
    %v4437 = vpop.f32.mrf.mxu0
    %4438 = vmatprep.mubr.bf16.mxu0 0
    %4439 = vmatmul.mubr.bf16.gmra.mxu0 %v4004
    %v4440 = vpop.f32.mrf.mxu0
    %v4441 = vadd.f32 %v4268, %v4440
    %v4442 = vpop.f32.mrf.mxu0
    %v4443 = vpop.f32.mrf.mxu0
    %v4444 = vadd.f32 %v4271, %v4443
    %v4445 = vpop.f32.mrf.mxu0
    %4446 = vmatprep.mubr.bf16.mxu0 0
    %4447 = vmatmul.mubr.bf16.gmra.mxu0 %v4007
    %v4448 = vpop.f32.mrf.mxu0
    %v4449 = vadd.f32 %v4276, %v4448
    %v4450 = vpop.f32.mrf.mxu0
    %v4451 = vpop.f32.mrf.mxu0
    %v4452 = vadd.f32 %v4279, %v4451
    %v4453 = vpop.f32.mrf.mxu0
    %4454 = vmatprep.mubr.bf16.mxu0 0
    %4455 = vmatmul.mubr.bf16.gmra.mxu0 %v4010
    %v4456 = vpop.f32.mrf.mxu0
    %v4457 = vadd.f32 %v4284, %v4456
    %v4458 = vpop.f32.mrf.mxu0
    %v4459 = vpop.f32.mrf.mxu0
    %v4460 = vadd.f32 %v4287, %v4459
    %v4461 = vpop.f32.mrf.mxu0
    %4462 = vmatprep.mubr.bf16.mxu0 0
    %4463 = vmatmul.mubr.bf16.gmra.mxu0 %v4013
    %v4464 = vpop.f32.mrf.mxu0
    %v4465 = vadd.f32 %v4292, %v4464
    %v4466 = vpop.f32.mrf.mxu0
    %v4467 = vpop.f32.mrf.mxu0
    %v4468 = vadd.f32 %v4295, %v4467
    %v4469 = vpop.f32.mrf.mxu0
    %4470 = vmatprep.mubr.bf16.mxu0 0
    %4471 = vmatmul.mubr.bf16.gmra.mxu0 %v4016
    %v4472 = vpop.f32.mrf.mxu0
    %v4473 = vadd.f32 %v4300, %v4472
    %v4474 = vpop.f32.mrf.mxu0
    %v4475 = vpop.f32.mrf.mxu0
    %v4476 = vadd.f32 %v4303, %v4475
    %v4477 = vpop.f32.mrf.mxu0
    %4478 = vmatprep.mubr.bf16.mxu0 0
    %4479 = vmatmul.mubr.bf16.gmra.mxu0 %v4019
    %v4480 = vpop.f32.mrf.mxu0
    %v4481 = vadd.f32 %v4308, %v4480
    %v4482 = vpop.f32.mrf.mxu0
    %v4483 = vpop.f32.mrf.mxu0
    %v4484 = vadd.f32 %v4311, %v4483
    %v4485 = vpop.f32.mrf.mxu0
    %4486 = vmatprep.mubr.bf16.mxu0 0
    %4487 = vmatmul.mubr.bf16.gmra.mxu0 %v4022
    %v4488 = vpop.f32.mrf.mxu0
    %v4489 = vadd.f32 %v4316, %v4488
    %v4490 = vpop.f32.mrf.mxu0
    %v4491 = vpop.f32.mrf.mxu0
    %v4492 = vadd.f32 %v4319, %v4491
    %v4493 = vpop.f32.mrf.mxu0
    %4494 = vmatprep.mubr.bf16.mxu0 0
    %4495 = vmatmul.mubr.bf16.gmra.mxu0 %v4025
    %v4496 = vpop.f32.mrf.mxu0
    %v4497 = vadd.f32 %v4324, %v4496
    %v4498 = vpop.f32.mrf.mxu0
    %v4499 = vpop.f32.mrf.mxu0
    %v4500 = vadd.f32 %v4327, %v4499
    %v4501 = vpop.f32.mrf.mxu0
    %4502 = vmatprep.mubr.bf16.mxu0 0
    %4503 = vmatmul.mubr.bf16.gmra.mxu0 %v4028
    %v4504 = vpop.f32.mrf.mxu0
    %v4505 = vadd.f32 %v4332, %v4504
    %v4506 = vpop.f32.mrf.mxu0
    %v4507 = vpop.f32.mrf.mxu0
    %v4508 = vadd.f32 %v4335, %v4507
    %v4509 = vpop.f32.mrf.mxu0
    %4510 = vmatprep.mubr.bf16.mxu0 0
    %4511 = vmatmul.mubr.bf16.gmra.mxu0 %v4031
    %v4512 = vpop.f32.mrf.mxu0
    %v4513 = vadd.f32 %v4340, %v4512
    %v4514 = vpop.f32.mrf.mxu0
    %v4515 = vpop.f32.mrf.mxu0
    %v4516 = vadd.f32 %v4343, %v4515
    %v4517 = vpop.f32.mrf.mxu0
    %4518 = vmatprep.mubr.bf16.mxu0 0
    %4519 = vmatmul.mubr.bf16.gmra.mxu0 %v4034
    %v4520 = vpop.f32.mrf.mxu0
    %v4521 = vadd.f32 %v4348, %v4520
    %v4522 = vpop.f32.mrf.mxu0
    %v4523 = vpop.f32.mrf.mxu0
    %v4524 = vadd.f32 %v4351, %v4523
    %v4525 = vpop.f32.mrf.mxu0
    %4526 = vmatprep.mubr.bf16.mxu0 0
    %4527 = vmatmul.mubr.bf16.gmra.mxu0 %v4037
    %v4528 = vpop.f32.mrf.mxu0
    %v4529 = vadd.f32 %v4356, %v4528
    %v4530 = vpop.f32.mrf.mxu0
    %v4531 = vpop.f32.mrf.mxu0
    %v4532 = vadd.f32 %v4359, %v4531
    %v4533 = vpop.f32.mrf.mxu0
    %4534 = vmatprep.mubr.bf16.mxu0 0
    %4535 = vmatmul.mubr.bf16.gmra.mxu0 %v4040
    %v4536 = vpop.f32.mrf.mxu0
    %v4537 = vadd.f32 %v4364, %v4536
    %v4538 = vpop.f32.mrf.mxu0
    %v4539 = vpop.f32.mrf.mxu0
    %v4540 = vadd.f32 %v4367, %v4539
    %v4541 = vpop.f32.mrf.mxu0
    %4542 = vmatprep.mubr.bf16.mxu0 0
    %4543 = vmatmul.mubr.bf16.gmra.mxu0 %v4043
    %v4544 = vpop.f32.mrf.mxu0
    %v4545 = vadd.f32 %v4372, %v4544
    %v4546 = vpop.f32.mrf.mxu0
    %v4547 = vpop.f32.mrf.mxu0
    %v4548 = vadd.f32 %v4375, %v4547
    %v4549 = vpop.f32.mrf.mxu0
    %4550 = vmatprep.mubr.bf16.mxu0 0
    %4551 = vmatmul.mubr.bf16.gmra.mxu0 %v4046
    %v4552 = vpop.f32.mrf.mxu0
    %v4553 = vadd.f32 %v4380, %v4552
    %v4554 = vpop.f32.mrf.mxu0
    %v4555 = vpop.f32.mrf.mxu0
    %v4556 = vadd.f32 %v4383, %v4555
    %v4557 = vpop.f32.mrf.mxu0
    %4558 = vdwg.mxu0
    %v4559 = vrot.slane %v3595, 1
    %v4560 = vrot.slane %v3596, 1
    %v4561 = vrot.slane %v3597, 1
    %v4562 = vrot.slane %v3598, 1
    %v4563 = vrot.slane %v3599, 1
    %v4564 = vrot.slane %v3600, 1
    %v4565 = vrot.slane %v3601, 1
    %v4566 = vrot.slane %v3602, 1
    %v4567 = vrot.slane %v3603, 1
    %v4568 = vrot.slane %v3604, 1
    %v4569 = vrot.slane %v3605, 1
    %v4570 = vrot.slane %v3606, 1
    %v4571 = vrot.slane %v3607, 1
    %v4572 = vrot.slane %v3608, 1
    %v4573 = vrot.slane %v3609, 1
    %v4574 = vrot.slane %v3610, 1
    %v4575 = vrot.slane %v3611, 1
    %v4576 = vrot.slane %v3612, 1
    %v4577 = vrot.slane %v3613, 1
    %v4578 = vrot.slane %v3614, 1
    %v4579 = vrot.slane %v3615, 1
    %v4580 = vrot.slane %v3616, 1
    %v4581 = vrot.slane %v3617, 1
    %v4582 = vrot.slane %v3618, 1
    %v4583 = vrot.slane %v3619, 1
    %v4584 = vrot.slane %v3620, 1
    %v4585 = vrot.slane %v3621, 1
    %v4586 = vrot.slane %v3622, 1
    %v4587 = vrot.slane %v3623, 1
    %v4588 = vrot.slane %v3624, 1
    %v4589 = vrot.slane %v3625, 1
    %v4590 = vrot.slane %v3626, 1
    %v4591 = vsel %vm2716, %v4589, %v4590
    %v4592 = vsel %vm2716, %v4588, %v4589
    %v4593 = vsel %vm2716, %v4587, %v4588
    %v4594 = vsel %vm2716, %v4586, %v4587
    %v4595 = vsel %vm2716, %v4585, %v4586
    %v4596 = vsel %vm2716, %v4584, %v4585
    %v4597 = vsel %vm2716, %v4583, %v4584
    %v4598 = vsel %vm2716, %v4582, %v4583
    %v4599 = vsel %vm2716, %v4581, %v4582
    %v4600 = vsel %vm2716, %v4580, %v4581
    %v4601 = vsel %vm2716, %v4579, %v4580
    %v4602 = vsel %vm2716, %v4578, %v4579
    %v4603 = vsel %vm2716, %v4577, %v4578
    %v4604 = vsel %vm2716, %v4576, %v4577
    %v4605 = vsel %vm2716, %v4575, %v4576
    %v4606 = vsel %vm2716, %v4574, %v4575
    %v4607 = vsel %vm2716, %v4573, %v4574
    %v4608 = vsel %vm2716, %v4572, %v4573
    %v4609 = vsel %vm2716, %v4571, %v4572
    %v4610 = vsel %vm2716, %v4570, %v4571
    %v4611 = vsel %vm2716, %v4569, %v4570
    %v4612 = vsel %vm2716, %v4568, %v4569
    %v4613 = vsel %vm2716, %v4567, %v4568
    %v4614 = vsel %vm2716, %v4566, %v4567
    %v4615 = vsel %vm2716, %v4565, %v4566
    %v4616 = vsel %vm2716, %v4564, %v4565
    %v4617 = vsel %vm2716, %v4563, %v4564
    %v4618 = vsel %vm2716, %v4562, %v4563
    %v4619 = vsel %vm2716, %v4561, %v4562
    %v4620 = vsel %vm2716, %v4560, %v4561
    %v4621 = vsel %vm2716, %v4559, %v4560
    %v4622 = vsel %vm2716, %v4590, %v4559
    %v4623 = vsel %vm1719, %v4621, 0.0
    %v4624 = vsel %vm1720, %v4620, 0.0
    %v4625 = vsel %vm1721, %v4619, 0.0
    %v4626 = vsel %vm1722, %v4618, 0.0
    %v4627 = vsel %vm1723, %v4617, 0.0
    %v4628 = vsel %vm1724, %v4616, 0.0
    %v4629 = vsel %vm1725, %v4615, 0.0
    %v4630 = vsel %vm1726, %v4614, 0.0
    %v4631 = vsel %vm1727, %v4613, 0.0
    %v4632 = vsel %vm1728, %v4612, 0.0
    %v4633 = vsel %vm1729, %v4611, 0.0
    %v4634 = vsel %vm1730, %v4610, 0.0
    %v4635 = vsel %vm1731, %v4609, 0.0
    %v4636 = vsel %vm1732, %v4608, 0.0
    %v4637 = vsel %vm1733, %v4607, 0.0
    %v4638 = vsel %vm1734, %v4606, 0.0
    %v4639 = vsel %vm1735, %v4605, 0.0
    %v4640 = vsel %vm1736, %v4604, 0.0
    %v4641 = vsel %vm1737, %v4603, 0.0
    %v4642 = vsel %vm1738, %v4602, 0.0
    %v4643 = vsel %vm1739, %v4601, 0.0
    %v4644 = vsel %vm1740, %v4600, 0.0
    %v4645 = vsel %vm1741, %v4599, 0.0
    %v4646 = vsel %vm1742, %v4598, 0.0
    %v4647 = vsel %vm1743, %v4597, 0.0
    %v4648 = vsel %vm1744, %v4596, 0.0
    %v4649 = vsel %vm1745, %v4595, 0.0
    %v4650 = vsel %vm1746, %v4594, 0.0
    %v4651 = vsel %vm1747, %v4593, 0.0
    %v4652 = vsel %vm1748, %v4592, 0.0
    %v4653 = vsel %vm1749, %v4591, 0.0
    %v4654 = vsel %vm1750, %v4622, 0.0
    %v4655 = vpack.c.bf16 %v4624, %v4623
    %v4656 = vpack.c.bf16 %v4626, %v4625
    %v4657 = vpack.c.bf16 %v4628, %v4627
    %v4658 = vpack.c.bf16 %v4630, %v4629
    %v4659 = vpack.c.bf16 %v4632, %v4631
    %v4660 = vpack.c.bf16 %v4634, %v4633
    %v4661 = vpack.c.bf16 %v4636, %v4635
    %v4662 = vpack.c.bf16 %v4638, %v4637
    %v4663 = vpack.c.bf16 %v4640, %v4639
    %v4664 = vpack.c.bf16 %v4642, %v4641
    %v4665 = vpack.c.bf16 %v4644, %v4643
    %v4666 = vpack.c.bf16 %v4646, %v4645
    %v4667 = vpack.c.bf16 %v4648, %v4647
    %v4668 = vpack.c.bf16 %v4650, %v4649
    %v4669 = vpack.c.bf16 %v4652, %v4651
    %v4670 = vpack.c.bf16 %v4654, %v4653
    %v4671 = vld [vmem:[#allocation2 + $0x114] sm:$0xf]
    %v4672 = vld [vmem:[#allocation2 + $0x118] sm:$0xf]
    %v4673 = vld [vmem:[#allocation2 + $0x11c] sm:$0xf]
    %v4674 = vld [vmem:[#allocation2 + $0x120] sm:$0xf]
    %v4679 = vunpack.c.l.b16 %v4671
    %v4680 = vunpack.c.l.b16 %v4672
    %v4681 = vunpack.c.l.b16 %v4673
    %v4682 = vunpack.c.l.b16 %v4674
    %v4683 = vpack.c.b16 %v4680, %v4679
    %v4684 = vpack.c.b16 %v4682, %v4681
    %v4688 = vsel %vm1285, %v4655, 0
    %v4691 = vsel %vm1285, %v4656, 0
    %v4694 = vsel %vm1285, %v4657, 0
    %v4697 = vsel %vm1285, %v4658, 0
    %v4700 = vsel %vm1285, %v4659, 0
    %v4703 = vsel %vm1285, %v4660, 0
    %v4706 = vsel %vm1285, %v4661, 0
    %v4709 = vsel %vm1285, %v4662, 0
    %v4712 = vsel %vm1285, %v4663, 0
    %v4715 = vsel %vm1285, %v4664, 0
    %v4718 = vsel %vm1285, %v4665, 0
    %v4721 = vsel %vm1285, %v4666, 0
    %v4724 = vsel %vm1285, %v4667, 0
    %v4727 = vsel %vm1285, %v4668, 0
    %v4730 = vsel %vm1285, %v4669, 0
    %v4733 = vsel %vm1285, %v4670, 0
    %4735 = vmatprep.subr.bf16.mxu0 0
    %4736 = vmatpush1.bf16.msra.mxu0 0
    %4737 = vmatprep.subr.bf16.mxu0 0
    %4738 = vmatpush1.bf16.msra.mxu0 0
    %4739 = vmatprep.subr.bf16.mxu0 0
    %4740 = vmatpush1.bf16.msra.mxu0 0
    %4741 = vmatprep.subr.bf16.mxu0 0
    %4742 = vmatpush1.bf16.msra.mxu0 0
    %4743 = vmatprep.subr.bf16.mxu0 0
    %4744 = vmatpush1.bf16.msra.mxu0 0
    %4745 = vmatprep.subr.bf16.mxu0 0
    %4746 = vmatpush1.bf16.msra.mxu0 0
    %4747 = vmatprep.subr.bf16.mxu0 0
    %4748 = vmatpush1.bf16.msra.mxu0 %v4684
    %4749 = vmatprep.subr.bf16.mxu0 0
    %4750 = vmatpush1.bf16.msra.mxu0 %v4683
    %4751 = vmatprep.subr.bf16.mxu0 0
    %4752 = vmatpush2.bf16.msra.mxu0 0
    %4753 = vmatprep.subr.bf16.mxu0 0
    %4754 = vmatpush2.bf16.msra.mxu0 0
    %4755 = vmatprep.subr.bf16.mxu0 0
    %4756 = vmatpush2.bf16.msra.mxu0 0
    %4757 = vmatprep.subr.bf16.mxu0 0
    %4758 = vmatpush2.bf16.msra.mxu0 0
    %4759 = vmatprep.subr.bf16.mxu0 0
    %4760 = vmatpush2.bf16.msra.mxu0 0
    %4761 = vmatprep.subr.bf16.mxu0 0
    %4762 = vmatpush2.bf16.msra.mxu0 0
    %4763 = vmatprep.subr.bf16.mxu0 0
    %4764 = vmatpush2.bf16.msra.mxu0 0
    %4765 = vmatprep.subr.bf16.mxu0 0
    %4766 = vmatpush2.bf16.msra.mxu0 0
    %4767 = vmatprep.mubr.bf16.mxu0 0
    %4768 = vmatmul.mubr.bf16.gmra.mxu0 %v4688
    %v4769 = vpop.f32.mrf.mxu0
    %v4770 = vadd.f32 0.0, %v4769
    %v4771 = vpop.f32.mrf.mxu0
    %v4772 = vpop.f32.mrf.mxu0
    %v4773 = vadd.f32 0.0, %v4772
    %v4774 = vpop.f32.mrf.mxu0
    %4775 = vmatprep.mubr.bf16.mxu0 0
    %4776 = vmatmul.mubr.bf16.gmra.mxu0 %v4691
    %v4777 = vpop.f32.mrf.mxu0
    %v4778 = vadd.f32 0.0, %v4777
    %v4779 = vpop.f32.mrf.mxu0
    %v4780 = vpop.f32.mrf.mxu0
    %v4781 = vadd.f32 0.0, %v4780
    %v4782 = vpop.f32.mrf.mxu0
    %4783 = vmatprep.mubr.bf16.mxu0 0
    %4784 = vmatmul.mubr.bf16.gmra.mxu0 %v4694
    %v4785 = vpop.f32.mrf.mxu0
    %v4786 = vadd.f32 0.0, %v4785
    %v4787 = vpop.f32.mrf.mxu0
    %v4788 = vpop.f32.mrf.mxu0
    %v4789 = vadd.f32 0.0, %v4788
    %v4790 = vpop.f32.mrf.mxu0
    %4791 = vmatprep.mubr.bf16.mxu0 0
    %4792 = vmatmul.mubr.bf16.gmra.mxu0 %v4697
    %v4793 = vpop.f32.mrf.mxu0
    %v4794 = vadd.f32 0.0, %v4793
    %v4795 = vpop.f32.mrf.mxu0
    %v4796 = vpop.f32.mrf.mxu0
    %v4797 = vadd.f32 0.0, %v4796
    %v4798 = vpop.f32.mrf.mxu0
    %4799 = vmatprep.mubr.bf16.mxu0 0
    %4800 = vmatmul.mubr.bf16.gmra.mxu0 %v4700
    %v4801 = vpop.f32.mrf.mxu0
    %v4802 = vadd.f32 0.0, %v4801
    %v4803 = vpop.f32.mrf.mxu0
    %v4804 = vpop.f32.mrf.mxu0
    %v4805 = vadd.f32 0.0, %v4804
    %v4806 = vpop.f32.mrf.mxu0
    %4807 = vmatprep.mubr.bf16.mxu0 0
    %4808 = vmatmul.mubr.bf16.gmra.mxu0 %v4703
    %v4809 = vpop.f32.mrf.mxu0
    %v4810 = vadd.f32 0.0, %v4809
    %v4811 = vpop.f32.mrf.mxu0
    %v4812 = vpop.f32.mrf.mxu0
    %v4813 = vadd.f32 0.0, %v4812
    %v4814 = vpop.f32.mrf.mxu0
    %4815 = vmatprep.mubr.bf16.mxu0 0
    %4816 = vmatmul.mubr.bf16.gmra.mxu0 %v4706
    %v4817 = vpop.f32.mrf.mxu0
    %v4818 = vadd.f32 0.0, %v4817
    %v4819 = vpop.f32.mrf.mxu0
    %v4820 = vpop.f32.mrf.mxu0
    %v4821 = vadd.f32 0.0, %v4820
    %v4822 = vpop.f32.mrf.mxu0
    %4823 = vmatprep.mubr.bf16.mxu0 0
    %4824 = vmatmul.mubr.bf16.gmra.mxu0 %v4709
    %v4825 = vpop.f32.mrf.mxu0
    %v4826 = vadd.f32 0.0, %v4825
    %v4827 = vpop.f32.mrf.mxu0
    %v4828 = vpop.f32.mrf.mxu0
    %v4829 = vadd.f32 0.0, %v4828
    %v4830 = vpop.f32.mrf.mxu0
    %4831 = vmatprep.mubr.bf16.mxu0 0
    %4832 = vmatmul.mubr.bf16.gmra.mxu0 %v4712
    %v4833 = vpop.f32.mrf.mxu0
    %v4834 = vadd.f32 0.0, %v4833
    %v4835 = vpop.f32.mrf.mxu0
    %v4836 = vpop.f32.mrf.mxu0
    %v4837 = vadd.f32 0.0, %v4836
    %v4838 = vpop.f32.mrf.mxu0
    %4839 = vmatprep.mubr.bf16.mxu0 0
    %4840 = vmatmul.mubr.bf16.gmra.mxu0 %v4715
    %v4841 = vpop.f32.mrf.mxu0
    %v4842 = vadd.f32 0.0, %v4841
    %v4843 = vpop.f32.mrf.mxu0
    %v4844 = vpop.f32.mrf.mxu0
    %v4845 = vadd.f32 0.0, %v4844
    %v4846 = vpop.f32.mrf.mxu0
    %4847 = vmatprep.mubr.bf16.mxu0 0
    %4848 = vmatmul.mubr.bf16.gmra.mxu0 %v4718
    %v4849 = vpop.f32.mrf.mxu0
    %v4850 = vadd.f32 0.0, %v4849
    %v4851 = vpop.f32.mrf.mxu0
    %v4852 = vpop.f32.mrf.mxu0
    %v4853 = vadd.f32 0.0, %v4852
    %v4854 = vpop.f32.mrf.mxu0
    %4855 = vmatprep.mubr.bf16.mxu0 0
    %4856 = vmatmul.mubr.bf16.gmra.mxu0 %v4721
    %v4857 = vpop.f32.mrf.mxu0
    %v4858 = vadd.f32 0.0, %v4857
    %v4859 = vpop.f32.mrf.mxu0
    %v4860 = vpop.f32.mrf.mxu0
    %v4861 = vadd.f32 0.0, %v4860
    %v4862 = vpop.f32.mrf.mxu0
    %4863 = vmatprep.mubr.bf16.mxu0 0
    %4864 = vmatmul.mubr.bf16.gmra.mxu0 %v4724
    %v4865 = vpop.f32.mrf.mxu0
    %v4866 = vadd.f32 0.0, %v4865
    %v4867 = vpop.f32.mrf.mxu0
    %v4868 = vpop.f32.mrf.mxu0
    %v4869 = vadd.f32 0.0, %v4868
    %v4870 = vpop.f32.mrf.mxu0
    %4871 = vmatprep.mubr.bf16.mxu0 0
    %4872 = vmatmul.mubr.bf16.gmra.mxu0 %v4727
    %v4873 = vpop.f32.mrf.mxu0
    %v4874 = vadd.f32 0.0, %v4873
    %v4875 = vpop.f32.mrf.mxu0
    %v4876 = vpop.f32.mrf.mxu0
    %v4877 = vadd.f32 0.0, %v4876
    %v4878 = vpop.f32.mrf.mxu0
    %4879 = vmatprep.mubr.bf16.mxu0 0
    %4880 = vmatmul.mubr.bf16.gmra.mxu0 %v4730
    %v4881 = vpop.f32.mrf.mxu0
    %v4882 = vadd.f32 0.0, %v4881
    %v4883 = vpop.f32.mrf.mxu0
    %v4884 = vpop.f32.mrf.mxu0
    %v4885 = vadd.f32 0.0, %v4884
    %v4886 = vpop.f32.mrf.mxu0
    %4887 = vmatprep.mubr.bf16.mxu0 0
    %4888 = vmatmul.mubr.bf16.gmra.mxu0 %v4733
    %v4889 = vpop.f32.mrf.mxu0
    %v4890 = vadd.f32 0.0, %v4889
    %v4891 = vpop.f32.mrf.mxu0
    %v4892 = vpop.f32.mrf.mxu0
    %v4893 = vadd.f32 0.0, %v4892
    %v4894 = vpop.f32.mrf.mxu0
    %4895 = vdwg.mxu0
    %v4896 = vadd.f32 %v4083, %v4770
    %v4897 = vadd.f32 %v4086, %v4773
    %v4898 = vadd.f32 %v4091, %v4778
    %v4899 = vadd.f32 %v4094, %v4781
    %v4900 = vadd.f32 %v4099, %v4786
    %v4901 = vadd.f32 %v4102, %v4789
    %v4902 = vadd.f32 %v4107, %v4794
    %v4903 = vadd.f32 %v4110, %v4797
    %v4904 = vadd.f32 %v4115, %v4802
    %v4905 = vadd.f32 %v4118, %v4805
    %v4906 = vadd.f32 %v4123, %v4810
    %v4907 = vadd.f32 %v4126, %v4813
    %v4908 = vadd.f32 %v4131, %v4818
    %v4909 = vadd.f32 %v4134, %v4821
    %v4910 = vadd.f32 %v4139, %v4826
    %v4911 = vadd.f32 %v4142, %v4829
    %v4912 = vadd.f32 %v4147, %v4834
    %v4913 = vadd.f32 %v4150, %v4837
    %v4914 = vadd.f32 %v4155, %v4842
    %v4915 = vadd.f32 %v4158, %v4845
    %v4916 = vadd.f32 %v4163, %v4850
    %v4917 = vadd.f32 %v4166, %v4853
    %v4918 = vadd.f32 %v4171, %v4858
    %v4919 = vadd.f32 %v4174, %v4861
    %v4920 = vadd.f32 %v4179, %v4866
    %v4921 = vadd.f32 %v4182, %v4869
    %v4922 = vadd.f32 %v4187, %v4874
    %v4923 = vadd.f32 %v4190, %v4877
    %v4924 = vadd.f32 %v4195, %v4882
    %v4925 = vadd.f32 %v4198, %v4885
    %v4926 = vadd.f32 %v4203, %v4890
    %v4927 = vadd.f32 %v4206, %v4893
    %v4928 = vld [vmem:[#allocation2 + $0x144] sm:$0xf]
    %v4929 = vld [vmem:[#allocation2 + $0x148] sm:$0xf]
    %v4930 = vld [vmem:[#allocation2 + $0x14c] sm:$0xf]
    %v4931 = vld [vmem:[#allocation2 + $0x150] sm:$0xf]
    %v4936 = vunpack.c.l.b16 %v4928
    %v4937 = vunpack.c.l.b16 %v4929
    %v4938 = vunpack.c.l.b16 %v4930
    %v4939 = vunpack.c.l.b16 %v4931
    %v4940 = vpack.c.b16 %v4937, %v4936
    %v4941 = vpack.c.b16 %v4939, %v4938
    %4944 = vmatprep.subr.bf16.mxu0 0
    %4945 = vmatpush1.bf16.msra.mxu0 0
    %4946 = vmatprep.subr.bf16.mxu0 0
    %4947 = vmatpush1.bf16.msra.mxu0 0
    %4948 = vmatprep.subr.bf16.mxu0 0
    %4949 = vmatpush1.bf16.msra.mxu0 0
    %4950 = vmatprep.subr.bf16.mxu0 0
    %4951 = vmatpush1.bf16.msra.mxu0 0
    %4952 = vmatprep.subr.bf16.mxu0 0
    %4953 = vmatpush1.bf16.msra.mxu0 0
    %4954 = vmatprep.subr.bf16.mxu0 0
    %4955 = vmatpush1.bf16.msra.mxu0 0
    %4956 = vmatprep.subr.bf16.mxu0 0
    %4957 = vmatpush1.bf16.msra.mxu0 %v4941
    %4958 = vmatprep.subr.bf16.mxu0 0
    %4959 = vmatpush1.bf16.msra.mxu0 %v4940
    %4960 = vmatprep.subr.bf16.mxu0 0
    %4961 = vmatpush2.bf16.msra.mxu0 0
    %4962 = vmatprep.subr.bf16.mxu0 0
    %4963 = vmatpush2.bf16.msra.mxu0 0
    %4964 = vmatprep.subr.bf16.mxu0 0
    %4965 = vmatpush2.bf16.msra.mxu0 0
    %4966 = vmatprep.subr.bf16.mxu0 0
    %4967 = vmatpush2.bf16.msra.mxu0 0
    %4968 = vmatprep.subr.bf16.mxu0 0
    %4969 = vmatpush2.bf16.msra.mxu0 0
    %4970 = vmatprep.subr.bf16.mxu0 0
    %4971 = vmatpush2.bf16.msra.mxu0 0
    %4972 = vmatprep.subr.bf16.mxu0 0
    %4973 = vmatpush2.bf16.msra.mxu0 0
    %4974 = vmatprep.subr.bf16.mxu0 0
    %4975 = vmatpush2.bf16.msra.mxu0 0
    %4976 = vmatprep.mubr.bf16.mxu0 0
    %4977 = vmatmul.mubr.bf16.gmra.mxu0 %v4688
    %v4978 = vpop.f32.mrf.mxu0
    %v4979 = vadd.f32 0.0, %v4978
    %v4980 = vpop.f32.mrf.mxu0
    %v4981 = vpop.f32.mrf.mxu0
    %v4982 = vadd.f32 0.0, %v4981
    %v4983 = vpop.f32.mrf.mxu0
    %4984 = vmatprep.mubr.bf16.mxu0 0
    %4985 = vmatmul.mubr.bf16.gmra.mxu0 %v4691
    %v4986 = vpop.f32.mrf.mxu0
    %v4987 = vadd.f32 0.0, %v4986
    %v4988 = vpop.f32.mrf.mxu0
    %v4989 = vpop.f32.mrf.mxu0
    %v4990 = vadd.f32 0.0, %v4989
    %v4991 = vpop.f32.mrf.mxu0
    %4992 = vmatprep.mubr.bf16.mxu0 0
    %4993 = vmatmul.mubr.bf16.gmra.mxu0 %v4694
    %v4994 = vpop.f32.mrf.mxu0
    %v4995 = vadd.f32 0.0, %v4994
    %v4996 = vpop.f32.mrf.mxu0
    %v4997 = vpop.f32.mrf.mxu0
    %v4998 = vadd.f32 0.0, %v4997
    %v4999 = vpop.f32.mrf.mxu0
    %5000 = vmatprep.mubr.bf16.mxu0 0
    %5001 = vmatmul.mubr.bf16.gmra.mxu0 %v4697
    %v5002 = vpop.f32.mrf.mxu0
    %v5003 = vadd.f32 0.0, %v5002
    %v5004 = vpop.f32.mrf.mxu0
    %v5005 = vpop.f32.mrf.mxu0
    %v5006 = vadd.f32 0.0, %v5005
    %v5007 = vpop.f32.mrf.mxu0
    %5008 = vmatprep.mubr.bf16.mxu0 0
    %5009 = vmatmul.mubr.bf16.gmra.mxu0 %v4700
    %v5010 = vpop.f32.mrf.mxu0
    %v5011 = vadd.f32 0.0, %v5010
    %v5012 = vpop.f32.mrf.mxu0
    %v5013 = vpop.f32.mrf.mxu0
    %v5014 = vadd.f32 0.0, %v5013
    %v5015 = vpop.f32.mrf.mxu0
    %5016 = vmatprep.mubr.bf16.mxu0 0
    %5017 = vmatmul.mubr.bf16.gmra.mxu0 %v4703
    %v5018 = vpop.f32.mrf.mxu0
    %v5019 = vadd.f32 0.0, %v5018
    %v5020 = vpop.f32.mrf.mxu0
    %v5021 = vpop.f32.mrf.mxu0
    %v5022 = vadd.f32 0.0, %v5021
    %v5023 = vpop.f32.mrf.mxu0
    %5024 = vmatprep.mubr.bf16.mxu0 0
    %5025 = vmatmul.mubr.bf16.gmra.mxu0 %v4706
    %v5026 = vpop.f32.mrf.mxu0
    %v5027 = vadd.f32 0.0, %v5026
    %v5028 = vpop.f32.mrf.mxu0
    %v5029 = vpop.f32.mrf.mxu0
    %v5030 = vadd.f32 0.0, %v5029
    %v5031 = vpop.f32.mrf.mxu0
    %5032 = vmatprep.mubr.bf16.mxu0 0
    %5033 = vmatmul.mubr.bf16.gmra.mxu0 %v4709
    %v5034 = vpop.f32.mrf.mxu0
    %v5035 = vadd.f32 0.0, %v5034
    %v5036 = vpop.f32.mrf.mxu0
    %v5037 = vpop.f32.mrf.mxu0
    %v5038 = vadd.f32 0.0, %v5037
    %v5039 = vpop.f32.mrf.mxu0
    %5040 = vmatprep.mubr.bf16.mxu0 0
    %5041 = vmatmul.mubr.bf16.gmra.mxu0 %v4712
    %v5042 = vpop.f32.mrf.mxu0
    %v5043 = vadd.f32 0.0, %v5042
    %v5044 = vpop.f32.mrf.mxu0
    %v5045 = vpop.f32.mrf.mxu0
    %v5046 = vadd.f32 0.0, %v5045
    %v5047 = vpop.f32.mrf.mxu0
    %5048 = vmatprep.mubr.bf16.mxu0 0
    %5049 = vmatmul.mubr.bf16.gmra.mxu0 %v4715
    %v5050 = vpop.f32.mrf.mxu0
    %v5051 = vadd.f32 0.0, %v5050
    %v5052 = vpop.f32.mrf.mxu0
    %v5053 = vpop.f32.mrf.mxu0
    %v5054 = vadd.f32 0.0, %v5053
    %v5055 = vpop.f32.mrf.mxu0
    %5056 = vmatprep.mubr.bf16.mxu0 0
    %5057 = vmatmul.mubr.bf16.gmra.mxu0 %v4718
    %v5058 = vpop.f32.mrf.mxu0
    %v5059 = vadd.f32 0.0, %v5058
    %v5060 = vpop.f32.mrf.mxu0
    %v5061 = vpop.f32.mrf.mxu0
    %v5062 = vadd.f32 0.0, %v5061
    %v5063 = vpop.f32.mrf.mxu0
    %5064 = vmatprep.mubr.bf16.mxu0 0
    %5065 = vmatmul.mubr.bf16.gmra.mxu0 %v4721
    %v5066 = vpop.f32.mrf.mxu0
    %v5067 = vadd.f32 0.0, %v5066
    %v5068 = vpop.f32.mrf.mxu0
    %v5069 = vpop.f32.mrf.mxu0
    %v5070 = vadd.f32 0.0, %v5069
    %v5071 = vpop.f32.mrf.mxu0
    %5072 = vmatprep.mubr.bf16.mxu0 0
    %5073 = vmatmul.mubr.bf16.gmra.mxu0 %v4724
    %v5074 = vpop.f32.mrf.mxu0
    %v5075 = vadd.f32 0.0, %v5074
    %v5076 = vpop.f32.mrf.mxu0
    %v5077 = vpop.f32.mrf.mxu0
    %v5078 = vadd.f32 0.0, %v5077
    %v5079 = vpop.f32.mrf.mxu0
    %5080 = vmatprep.mubr.bf16.mxu0 0
    %5081 = vmatmul.mubr.bf16.gmra.mxu0 %v4727
    %v5082 = vpop.f32.mrf.mxu0
    %v5083 = vadd.f32 0.0, %v5082
    %v5084 = vpop.f32.mrf.mxu0
    %v5085 = vpop.f32.mrf.mxu0
    %v5086 = vadd.f32 0.0, %v5085
    %v5087 = vpop.f32.mrf.mxu0
    %5088 = vmatprep.mubr.bf16.mxu0 0
    %5089 = vmatmul.mubr.bf16.gmra.mxu0 %v4730
    %v5090 = vpop.f32.mrf.mxu0
    %v5091 = vadd.f32 0.0, %v5090
    %v5092 = vpop.f32.mrf.mxu0
    %v5093 = vpop.f32.mrf.mxu0
    %v5094 = vadd.f32 0.0, %v5093
    %v5095 = vpop.f32.mrf.mxu0
    %5096 = vmatprep.mubr.bf16.mxu0 0
    %5097 = vmatmul.mubr.bf16.gmra.mxu0 %v4733
    %v5098 = vpop.f32.mrf.mxu0
    %v5099 = vadd.f32 0.0, %v5098
    %v5100 = vpop.f32.mrf.mxu0
    %v5101 = vpop.f32.mrf.mxu0
    %v5102 = vadd.f32 0.0, %v5101
    %v5103 = vpop.f32.mrf.mxu0
    %5104 = vdwg.mxu0
    %v5105 = vadd.f32 %v4433, %v4979
    %v5106 = vadd.f32 %v4436, %v4982
    %v5107 = vadd.f32 %v4441, %v4987
    %v5108 = vadd.f32 %v4444, %v4990
    %v5109 = vadd.f32 %v4449, %v4995
    %v5110 = vadd.f32 %v4452, %v4998
    %v5111 = vadd.f32 %v4457, %v5003
    %v5112 = vadd.f32 %v4460, %v5006
    %v5113 = vadd.f32 %v4465, %v5011
    %v5114 = vadd.f32 %v4468, %v5014
    %v5115 = vadd.f32 %v4473, %v5019
    %v5116 = vadd.f32 %v4476, %v5022
    %v5117 = vadd.f32 %v4481, %v5027
    %v5118 = vadd.f32 %v4484, %v5030
    %v5119 = vadd.f32 %v4489, %v5035
    %v5120 = vadd.f32 %v4492, %v5038
    %v5121 = vadd.f32 %v4497, %v5043
    %v5122 = vadd.f32 %v4500, %v5046
    %v5123 = vadd.f32 %v4505, %v5051
    %v5124 = vadd.f32 %v4508, %v5054
    %v5125 = vadd.f32 %v4513, %v5059
    %v5126 = vadd.f32 %v4516, %v5062
    %v5127 = vadd.f32 %v4521, %v5067
    %v5128 = vadd.f32 %v4524, %v5070
    %v5129 = vadd.f32 %v4529, %v5075
    %v5130 = vadd.f32 %v4532, %v5078
    %v5131 = vadd.f32 %v4537, %v5083
    %v5132 = vadd.f32 %v4540, %v5086
    %v5133 = vadd.f32 %v4545, %v5091
    %v5134 = vadd.f32 %v4548, %v5094
    %v5135 = vadd.f32 %v4553, %v5099
    %v5136 = vadd.f32 %v4556, %v5102
    %v5137 = vld [vmem:[#allocation2 + $0x15c] sm:$0x1]
    %v5138 = vunpack.c.l.bf16 %v5137
    %v5139 = vlaneseq
    %v5140 = vshrl.u32 %v5139, 7
    %v5141 = vsub.s32 0, %v5140
    %v5142 = vrot.slane %v5138, %v5141
    %v5143 = vadd.f32 %v4896, %v5142
    %v5144 = vadd.f32 %v4897, %v5142
    %v5145 = vadd.f32 %v4898, %v5142
    %v5146 = vadd.f32 %v4899, %v5142
    %v5147 = vadd.f32 %v4900, %v5142
    %v5148 = vadd.f32 %v4901, %v5142
    %v5149 = vadd.f32 %v4902, %v5142
    %v5150 = vadd.f32 %v4903, %v5142
    %v5151 = vadd.f32 %v4904, %v5142
    %v5152 = vadd.f32 %v4905, %v5142
    %v5153 = vadd.f32 %v4906, %v5142
    %v5154 = vadd.f32 %v4907, %v5142
    %v5155 = vadd.f32 %v4908, %v5142
    %v5156 = vadd.f32 %v4909, %v5142
    %v5157 = vadd.f32 %v4910, %v5142
    %v5158 = vadd.f32 %v4911, %v5142
    %v5159 = vadd.f32 %v4912, %v5142
    %v5160 = vadd.f32 %v4913, %v5142
    %v5161 = vadd.f32 %v4914, %v5142
    %v5162 = vadd.f32 %v4915, %v5142
    %v5163 = vadd.f32 %v4916, %v5142
    %v5164 = vadd.f32 %v4917, %v5142
    %v5165 = vadd.f32 %v4918, %v5142
    %v5166 = vadd.f32 %v4919, %v5142
    %v5167 = vadd.f32 %v4920, %v5142
    %v5168 = vadd.f32 %v4921, %v5142
    %v5169 = vadd.f32 %v4922, %v5142
    %v5170 = vadd.f32 %v4923, %v5142
    %v5171 = vadd.f32 %v4924, %v5142
    %v5172 = vadd.f32 %v4925, %v5142
    %v5173 = vadd.f32 %v4926, %v5142
    %v5174 = vadd.f32 %v4927, %v5142
    %v5175 = vld [vmem:[#allocation2 + $0x160] sm:$0x1]
    %v5176 = vunpack.c.l.bf16 %v5175
    %v5177 = vlaneseq
    %v5178 = vshrl.u32 %v5177, 7
    %v5179 = vsub.s32 0, %v5178
    %v5180 = vrot.slane %v5176, %v5179
    %v5181 = vadd.f32 %v5105, %v5180
    %v5182 = vadd.f32 %v5106, %v5180
    %v5183 = vadd.f32 %v5107, %v5180
    %v5184 = vadd.f32 %v5108, %v5180
    %v5185 = vadd.f32 %v5109, %v5180
    %v5186 = vadd.f32 %v5110, %v5180
    %v5187 = vadd.f32 %v5111, %v5180
    %v5188 = vadd.f32 %v5112, %v5180
    %v5189 = vadd.f32 %v5113, %v5180
    %v5190 = vadd.f32 %v5114, %v5180
    %v5191 = vadd.f32 %v5115, %v5180
    %v5192 = vadd.f32 %v5116, %v5180
    %v5193 = vadd.f32 %v5117, %v5180
    %v5194 = vadd.f32 %v5118, %v5180
    %v5195 = vadd.f32 %v5119, %v5180
    %v5196 = vadd.f32 %v5120, %v5180
    %v5197 = vadd.f32 %v5121, %v5180
    %v5198 = vadd.f32 %v5122, %v5180
    %v5199 = vadd.f32 %v5123, %v5180
    %v5200 = vadd.f32 %v5124, %v5180
    %v5201 = vadd.f32 %v5125, %v5180
    %v5202 = vadd.f32 %v5126, %v5180
    %v5203 = vadd.f32 %v5127, %v5180
    %v5204 = vadd.f32 %v5128, %v5180
    %v5205 = vadd.f32 %v5129, %v5180
    %v5206 = vadd.f32 %v5130, %v5180
    %v5207 = vadd.f32 %v5131, %v5180
    %v5208 = vadd.f32 %v5132, %v5180
    %v5209 = vadd.f32 %v5133, %v5180
    %v5210 = vadd.f32 %v5134, %v5180
    %v5211 = vadd.f32 %v5135, %v5180
    %v5212 = vadd.f32 %v5136, %v5180
    %v5213 = vxor.u32 %v5181, 2147483648
    %v5214 = vxor.u32 %v5182, 2147483648
    %v5215 = vxor.u32 %v5183, 2147483648
    %v5216 = vxor.u32 %v5184, 2147483648
    %v5217 = vxor.u32 %v5185, 2147483648
    %v5218 = vxor.u32 %v5186, 2147483648
    %v5219 = vxor.u32 %v5187, 2147483648
    %v5220 = vxor.u32 %v5188, 2147483648
    %v5221 = vxor.u32 %v5189, 2147483648
    %v5222 = vxor.u32 %v5190, 2147483648
    %v5223 = vxor.u32 %v5191, 2147483648
    %v5224 = vxor.u32 %v5192, 2147483648
    %v5225 = vxor.u32 %v5193, 2147483648
    %v5226 = vxor.u32 %v5194, 2147483648
    %v5227 = vxor.u32 %v5195, 2147483648
    %v5228 = vxor.u32 %v5196, 2147483648
    %v5229 = vxor.u32 %v5197, 2147483648
    %v5230 = vxor.u32 %v5198, 2147483648
    %v5231 = vxor.u32 %v5199, 2147483648
    %v5232 = vxor.u32 %v5200, 2147483648
    %v5233 = vxor.u32 %v5201, 2147483648
    %v5234 = vxor.u32 %v5202, 2147483648
    %v5235 = vxor.u32 %v5203, 2147483648
    %v5236 = vxor.u32 %v5204, 2147483648
    %v5237 = vxor.u32 %v5205, 2147483648
    %v5238 = vxor.u32 %v5206, 2147483648
    %v5239 = vxor.u32 %v5207, 2147483648
    %v5240 = vxor.u32 %v5208, 2147483648
    %v5241 = vxor.u32 %v5209, 2147483648
    %v5242 = vxor.u32 %v5210, 2147483648
    %v5243 = vxor.u32 %v5211, 2147483648
    %v5244 = vxor.u32 %v5212, 2147483648
    %v5245 = vmul.f32 %v5213, 1.442695
    %v5246 = vpow.pop %v5245
    %v5247 = vmul.f32 %v5214, 1.442695
    %v5248 = vpow.pop %v5247
    %v5249 = vmul.f32 %v5215, 1.442695
    %v5250 = vpow.pop %v5249
    %v5251 = vmul.f32 %v5216, 1.442695
    %v5252 = vpow.pop %v5251
    %v5253 = vmul.f32 %v5217, 1.442695
    %v5254 = vpow.pop %v5253
    %v5255 = vmul.f32 %v5218, 1.442695
    %v5256 = vpow.pop %v5255
    %v5257 = vmul.f32 %v5219, 1.442695
    %v5258 = vpow.pop %v5257
    %v5259 = vmul.f32 %v5220, 1.442695
    %v5260 = vpow.pop %v5259
    %v5261 = vmul.f32 %v5221, 1.442695
    %v5262 = vpow.pop %v5261
    %v5263 = vmul.f32 %v5222, 1.442695
    %v5264 = vpow.pop %v5263
    %v5265 = vmul.f32 %v5223, 1.442695
    %v5266 = vpow.pop %v5265
    %v5267 = vmul.f32 %v5224, 1.442695
    %v5268 = vpow.pop %v5267
    %v5269 = vmul.f32 %v5225, 1.442695
    %v5270 = vpow.pop %v5269
    %v5271 = vmul.f32 %v5226, 1.442695
    %v5272 = vpow.pop %v5271
    %v5273 = vmul.f32 %v5227, 1.442695
    %v5274 = vpow.pop %v5273
    %v5275 = vmul.f32 %v5228, 1.442695
    %v5276 = vpow.pop %v5275
    %v5277 = vmul.f32 %v5229, 1.442695
    %v5278 = vpow.pop %v5277
    %v5279 = vmul.f32 %v5230, 1.442695
    %v5280 = vpow.pop %v5279
    %v5281 = vmul.f32 %v5231, 1.442695
    %v5282 = vpow.pop %v5281
    %v5283 = vmul.f32 %v5232, 1.442695
    %v5284 = vpow.pop %v5283
    %v5285 = vmul.f32 %v5233, 1.442695
    %v5286 = vpow.pop %v5285
    %v5287 = vmul.f32 %v5234, 1.442695
    %v5288 = vpow.pop %v5287
    %v5289 = vmul.f32 %v5235, 1.442695
    %v5290 = vpow.pop %v5289
    %v5291 = vmul.f32 %v5236, 1.442695
    %v5292 = vpow.pop %v5291
    %v5293 = vmul.f32 %v5237, 1.442695
    %v5294 = vpow.pop %v5293
    %v5295 = vmul.f32 %v5238, 1.442695
    %v5296 = vpow.pop %v5295
    %v5297 = vmul.f32 %v5239, 1.442695
    %v5298 = vpow.pop %v5297
    %v5299 = vmul.f32 %v5240, 1.442695
    %v5300 = vpow.pop %v5299
    %v5301 = vmul.f32 %v5241, 1.442695
    %v5302 = vpow.pop %v5301
    %v5303 = vmul.f32 %v5242, 1.442695
    %v5304 = vpow.pop %v5303
    %v5305 = vmul.f32 %v5243, 1.442695
    %v5306 = vpow.pop %v5305
    %v5307 = vmul.f32 %v5244, 1.442695
    %v5308 = vpow.pop %v5307
    %v5309 = vadd.f32 %v5246, 1.0
    %v5310 = vadd.f32 %v5248, 1.0
    %v5311 = vadd.f32 %v5250, 1.0
    %v5312 = vadd.f32 %v5252, 1.0
    %v5313 = vadd.f32 %v5254, 1.0
    %v5314 = vadd.f32 %v5256, 1.0
    %v5315 = vadd.f32 %v5258, 1.0
    %v5316 = vadd.f32 %v5260, 1.0
    %v5317 = vadd.f32 %v5262, 1.0
    %v5318 = vadd.f32 %v5264, 1.0
    %v5319 = vadd.f32 %v5266, 1.0
    %v5320 = vadd.f32 %v5268, 1.0
    %v5321 = vadd.f32 %v5270, 1.0
    %v5322 = vadd.f32 %v5272, 1.0
    %v5323 = vadd.f32 %v5274, 1.0
    %v5324 = vadd.f32 %v5276, 1.0
    %v5325 = vadd.f32 %v5278, 1.0
    %v5326 = vadd.f32 %v5280, 1.0
    %v5327 = vadd.f32 %v5282, 1.0
    %v5328 = vadd.f32 %v5284, 1.0
    %v5329 = vadd.f32 %v5286, 1.0
    %v5330 = vadd.f32 %v5288, 1.0
    %v5331 = vadd.f32 %v5290, 1.0
    %v5332 = vadd.f32 %v5292, 1.0
    %v5333 = vadd.f32 %v5294, 1.0
    %v5334 = vadd.f32 %v5296, 1.0
    %v5335 = vadd.f32 %v5298, 1.0
    %v5336 = vadd.f32 %v5300, 1.0
    %v5337 = vadd.f32 %v5302, 1.0
    %v5338 = vadd.f32 %v5304, 1.0
    %v5339 = vadd.f32 %v5306, 1.0
    %v5340 = vadd.f32 %v5308, 1.0
    %v5341 = vrcp.pop %v5309
    %v5342 = vmul.f32 1.0, %v5341
    %v5343 = vrcp.pop %v5310
    %v5344 = vmul.f32 1.0, %v5343
    %v5345 = vrcp.pop %v5311
    %v5346 = vmul.f32 1.0, %v5345
    %v5347 = vrcp.pop %v5312
    %v5348 = vmul.f32 1.0, %v5347
    %v5349 = vrcp.pop %v5313
    %v5350 = vmul.f32 1.0, %v5349
    %v5351 = vrcp.pop %v5314
    %v5352 = vmul.f32 1.0, %v5351
    %v5353 = vrcp.pop %v5315
    %v5354 = vmul.f32 1.0, %v5353
    %v5355 = vrcp.pop %v5316
    %v5356 = vmul.f32 1.0, %v5355
    %v5357 = vrcp.pop %v5317
    %v5358 = vmul.f32 1.0, %v5357
    %v5359 = vrcp.pop %v5318
    %v5360 = vmul.f32 1.0, %v5359
    %v5361 = vrcp.pop %v5319
    %v5362 = vmul.f32 1.0, %v5361
    %v5363 = vrcp.pop %v5320
    %v5364 = vmul.f32 1.0, %v5363
    %v5365 = vrcp.pop %v5321
    %v5366 = vmul.f32 1.0, %v5365
    %v5367 = vrcp.pop %v5322
    %v5368 = vmul.f32 1.0, %v5367
    %v5369 = vrcp.pop %v5323
    %v5370 = vmul.f32 1.0, %v5369
    %v5371 = vrcp.pop %v5324
    %v5372 = vmul.f32 1.0, %v5371
    %v5373 = vrcp.pop %v5325
    %v5374 = vmul.f32 1.0, %v5373
    %v5375 = vrcp.pop %v5326
    %v5376 = vmul.f32 1.0, %v5375
    %v5377 = vrcp.pop %v5327
    %v5378 = vmul.f32 1.0, %v5377
    %v5379 = vrcp.pop %v5328
    %v5380 = vmul.f32 1.0, %v5379
    %v5381 = vrcp.pop %v5329
    %v5382 = vmul.f32 1.0, %v5381
    %v5383 = vrcp.pop %v5330
    %v5384 = vmul.f32 1.0, %v5383
    %v5385 = vrcp.pop %v5331
    %v5386 = vmul.f32 1.0, %v5385
    %v5387 = vrcp.pop %v5332
    %v5388 = vmul.f32 1.0, %v5387
    %v5389 = vrcp.pop %v5333
    %v5390 = vmul.f32 1.0, %v5389
    %v5391 = vrcp.pop %v5334
    %v5392 = vmul.f32 1.0, %v5391
    %v5393 = vrcp.pop %v5335
    %v5394 = vmul.f32 1.0, %v5393
    %v5395 = vrcp.pop %v5336
    %v5396 = vmul.f32 1.0, %v5395
    %v5397 = vrcp.pop %v5337
    %v5398 = vmul.f32 1.0, %v5397
    %v5399 = vrcp.pop %v5338
    %v5400 = vmul.f32 1.0, %v5399
    %v5401 = vrcp.pop %v5339
    %v5402 = vmul.f32 1.0, %v5401
    %v5403 = vrcp.pop %v5340
    %v5404 = vmul.f32 1.0, %v5403
    %v5405 = vmul.f32 %v5143, %v5342
    %v5406 = vmul.f32 %v5144, %v5344
    %v5407 = vmul.f32 %v5145, %v5346
    %v5408 = vmul.f32 %v5146, %v5348
    %v5409 = vmul.f32 %v5147, %v5350
    %v5410 = vmul.f32 %v5148, %v5352
    %v5411 = vmul.f32 %v5149, %v5354
    %v5412 = vmul.f32 %v5150, %v5356
    %v5413 = vmul.f32 %v5151, %v5358
    %v5414 = vmul.f32 %v5152, %v5360
    %v5415 = vmul.f32 %v5153, %v5362
    %v5416 = vmul.f32 %v5154, %v5364
    %v5417 = vmul.f32 %v5155, %v5366
    %v5418 = vmul.f32 %v5156, %v5368
    %v5419 = vmul.f32 %v5157, %v5370
    %v5420 = vmul.f32 %v5158, %v5372
    %v5421 = vmul.f32 %v5159, %v5374
    %v5422 = vmul.f32 %v5160, %v5376
    %v5423 = vmul.f32 %v5161, %v5378
    %v5424 = vmul.f32 %v5162, %v5380
    %v5425 = vmul.f32 %v5163, %v5382
    %v5426 = vmul.f32 %v5164, %v5384
    %v5427 = vmul.f32 %v5165, %v5386
    %v5428 = vmul.f32 %v5166, %v5388
    %v5429 = vmul.f32 %v5167, %v5390
    %v5430 = vmul.f32 %v5168, %v5392
    %v5431 = vmul.f32 %v5169, %v5394
    %v5432 = vmul.f32 %v5170, %v5396
    %v5433 = vmul.f32 %v5171, %v5398
    %v5434 = vmul.f32 %v5172, %v5400
    %v5435 = vmul.f32 %v5173, %v5402
    %v5436 = vmul.f32 %v5174, %v5404
    %v5437 = vadd.f32 %v5405, %v3595
    %v5438 = vadd.f32 %v5406, %v3596
    %v5439 = vadd.f32 %v5407, %v3597
    %v5440 = vadd.f32 %v5408, %v3598
    %v5441 = vadd.f32 %v5409, %v3599
    %v5442 = vadd.f32 %v5410, %v3600
    %v5443 = vadd.f32 %v5411, %v3601
    %v5444 = vadd.f32 %v5412, %v3602
    %v5445 = vadd.f32 %v5413, %v3603
    %v5446 = vadd.f32 %v5414, %v3604
    %v5447 = vadd.f32 %v5415, %v3605
    %v5448 = vadd.f32 %v5416, %v3606
    %v5449 = vadd.f32 %v5417, %v3607
    %v5450 = vadd.f32 %v5418, %v3608
    %v5451 = vadd.f32 %v5419, %v3609
    %v5452 = vadd.f32 %v5420, %v3610
    %v5453 = vadd.f32 %v5421, %v3611
    %v5454 = vadd.f32 %v5422, %v3612
    %v5455 = vadd.f32 %v5423, %v3613
    %v5456 = vadd.f32 %v5424, %v3614
    %v5457 = vadd.f32 %v5425, %v3615
    %v5458 = vadd.f32 %v5426, %v3616
    %v5459 = vadd.f32 %v5427, %v3617
    %v5460 = vadd.f32 %v5428, %v3618
    %v5461 = vadd.f32 %v5429, %v3619
    %v5462 = vadd.f32 %v5430, %v3620
    %v5463 = vadd.f32 %v5431, %v3621
    %v5464 = vadd.f32 %v5432, %v3622
    %v5465 = vadd.f32 %v5433, %v3623
    %v5466 = vadd.f32 %v5434, %v3624
    %v5467 = vadd.f32 %v5435, %v3625
    %v5468 = vadd.f32 %v5436, %v3626
    %v5469 = vmul.f32 %v5437, 0.70710677
    %v5470 = vmul.f32 %v5438, 0.70710677
    %v5471 = vmul.f32 %v5439, 0.70710677
    %v5472 = vmul.f32 %v5440, 0.70710677
    %v5473 = vmul.f32 %v5441, 0.70710677
    %v5474 = vmul.f32 %v5442, 0.70710677
    %v5475 = vmul.f32 %v5443, 0.70710677
    %v5476 = vmul.f32 %v5444, 0.70710677
    %v5477 = vmul.f32 %v5445, 0.70710677
    %v5478 = vmul.f32 %v5446, 0.70710677
    %v5479 = vmul.f32 %v5447, 0.70710677
    %v5480 = vmul.f32 %v5448, 0.70710677
    %v5481 = vmul.f32 %v5449, 0.70710677
    %v5482 = vmul.f32 %v5450, 0.70710677
    %v5483 = vmul.f32 %v5451, 0.70710677
    %v5484 = vmul.f32 %v5452, 0.70710677
    %v5485 = vmul.f32 %v5453, 0.70710677
    %v5486 = vmul.f32 %v5454, 0.70710677
    %v5487 = vmul.f32 %v5455, 0.70710677
    %v5488 = vmul.f32 %v5456, 0.70710677
    %v5489 = vmul.f32 %v5457, 0.70710677
    %v5490 = vmul.f32 %v5458, 0.70710677
    %v5491 = vmul.f32 %v5459, 0.70710677
    %v5492 = vmul.f32 %v5460, 0.70710677
    %v5493 = vmul.f32 %v5461, 0.70710677
    %v5494 = vmul.f32 %v5462, 0.70710677
    %v5495 = vmul.f32 %v5463, 0.70710677
    %v5496 = vmul.f32 %v5464, 0.70710677
    %v5497 = vmul.f32 %v5465, 0.70710677
    %v5498 = vmul.f32 %v5466, 0.70710677
    %v5499 = vmul.f32 %v5467, 0.70710677
    %v5500 = vmul.f32 %v5468, 0.70710677
    %v5501 = vld [vmem:[#allocation2 + $0x164] sm:$0xf]
    %v5502 = vld [vmem:[#allocation2 + $0x168] sm:$0xf]
    %v5503 = vld [vmem:[#allocation2 + $0x16c] sm:$0xf]
    %v5504 = vld [vmem:[#allocation2 + $0x170] sm:$0xf]
    %v5505 = vld [vmem:[#allocation2 + $0x174] sm:$0x1]
    %v5506 = vunpack.c.l.bf16 %v5505
    %v5507 = vpack.c.bf16 %v5470, %v5469
    %v5508 = vpack.c.bf16 %v5472, %v5471
    %v5509 = vpack.c.bf16 %v5474, %v5473
    %v5510 = vpack.c.bf16 %v5476, %v5475
    %v5511 = vpack.c.bf16 %v5478, %v5477
    %v5512 = vpack.c.bf16 %v5480, %v5479
    %v5513 = vpack.c.bf16 %v5482, %v5481
    %v5514 = vpack.c.bf16 %v5484, %v5483
    %v5515 = vpack.c.bf16 %v5486, %v5485
    %v5516 = vpack.c.bf16 %v5488, %v5487
    %v5517 = vpack.c.bf16 %v5490, %v5489
    %v5518 = vpack.c.bf16 %v5492, %v5491
    %v5519 = vpack.c.bf16 %v5494, %v5493
    %v5520 = vpack.c.bf16 %v5496, %v5495
    %v5521 = vpack.c.bf16 %v5498, %v5497
    %v5522 = vpack.c.bf16 %v5500, %v5499
    %v5523 = vlaneseq
    %v5524 = vshrl.u32 %v5523, 7
    %v5525 = vsub.s32 0, %v5524
    %v5526 = vrot.slane %v5506, %v5525
    %v5531 = vunpack.c.l.b16 %v5501
    %v5532 = vunpack.c.l.b16 %v5502
    %v5533 = vunpack.c.l.b16 %v5503
    %v5534 = vunpack.c.l.b16 %v5504
    %v5535 = vpack.c.b16 %v5532, %v5531
    %v5536 = vpack.c.b16 %v5534, %v5533
    %v5540 = vsel %vm1285, %v5507, 0
    %v5543 = vsel %vm1285, %v5508, 0
    %v5546 = vsel %vm1285, %v5509, 0
    %v5549 = vsel %vm1285, %v5510, 0
    %v5552 = vsel %vm1285, %v5511, 0
    %v5555 = vsel %vm1285, %v5512, 0
    %v5558 = vsel %vm1285, %v5513, 0
    %v5561 = vsel %vm1285, %v5514, 0
    %v5564 = vsel %vm1285, %v5515, 0
    %v5567 = vsel %vm1285, %v5516, 0
    %v5570 = vsel %vm1285, %v5517, 0
    %v5573 = vsel %vm1285, %v5518, 0
    %v5576 = vsel %vm1285, %v5519, 0
    %v5579 = vsel %vm1285, %v5520, 0
    %v5582 = vsel %vm1285, %v5521, 0
    %v5585 = vsel %vm1285, %v5522, 0
    %5587 = vmatprep.subr.bf16.mxu0 0
    %5588 = vmatpush1.bf16.msra.mxu0 0
    %5589 = vmatprep.subr.bf16.mxu0 0
    %5590 = vmatpush1.bf16.msra.mxu0 0
    %5591 = vmatprep.subr.bf16.mxu0 0
    %5592 = vmatpush1.bf16.msra.mxu0 0
    %5593 = vmatprep.subr.bf16.mxu0 0
    %5594 = vmatpush1.bf16.msra.mxu0 0
    %5595 = vmatprep.subr.bf16.mxu0 0
    %5596 = vmatpush1.bf16.msra.mxu0 0
    %5597 = vmatprep.subr.bf16.mxu0 0
    %5598 = vmatpush1.bf16.msra.mxu0 0
    %5599 = vmatprep.subr.bf16.mxu0 0
    %5600 = vmatpush1.bf16.msra.mxu0 %v5536
    %5601 = vmatprep.subr.bf16.mxu0 0
    %5602 = vmatpush1.bf16.msra.mxu0 %v5535
    %5603 = vmatprep.subr.bf16.mxu0 0
    %5604 = vmatpush2.bf16.msra.mxu0 0
    %5605 = vmatprep.subr.bf16.mxu0 0
    %5606 = vmatpush2.bf16.msra.mxu0 0
    %5607 = vmatprep.subr.bf16.mxu0 0
    %5608 = vmatpush2.bf16.msra.mxu0 0
    %5609 = vmatprep.subr.bf16.mxu0 0
    %5610 = vmatpush2.bf16.msra.mxu0 0
    %5611 = vmatprep.subr.bf16.mxu0 0
    %5612 = vmatpush2.bf16.msra.mxu0 0
    %5613 = vmatprep.subr.bf16.mxu0 0
    %5614 = vmatpush2.bf16.msra.mxu0 0
    %5615 = vmatprep.subr.bf16.mxu0 0
    %5616 = vmatpush2.bf16.msra.mxu0 0
    %5617 = vmatprep.subr.bf16.mxu0 0
    %5618 = vmatpush2.bf16.msra.mxu0 0
    %5619 = vmatprep.mubr.bf16.mxu0 0
    %5620 = vmatmul.mubr.bf16.gmra.mxu0 %v5540
    %v5621 = vpop.f32.mrf.mxu0
    %v5622 = vadd.f32 %v5526, %v5621
    %v5623 = vpop.f32.mrf.mxu0
    %v5624 = vpop.f32.mrf.mxu0
    %v5625 = vadd.f32 %v5526, %v5624
    %v5626 = vpop.f32.mrf.mxu0
    %5627 = vmatprep.mubr.bf16.mxu0 0
    %5628 = vmatmul.mubr.bf16.gmra.mxu0 %v5543
    %v5629 = vpop.f32.mrf.mxu0
    %v5630 = vadd.f32 %v5526, %v5629
    %v5631 = vpop.f32.mrf.mxu0
    %v5632 = vpop.f32.mrf.mxu0
    %v5633 = vadd.f32 %v5526, %v5632
    %v5634 = vpop.f32.mrf.mxu0
    %5635 = vmatprep.mubr.bf16.mxu0 0
    %5636 = vmatmul.mubr.bf16.gmra.mxu0 %v5546
    %v5637 = vpop.f32.mrf.mxu0
    %v5638 = vadd.f32 %v5526, %v5637
    %v5639 = vpop.f32.mrf.mxu0
    %v5640 = vpop.f32.mrf.mxu0
    %v5641 = vadd.f32 %v5526, %v5640
    %v5642 = vpop.f32.mrf.mxu0
    %5643 = vmatprep.mubr.bf16.mxu0 0
    %5644 = vmatmul.mubr.bf16.gmra.mxu0 %v5549
    %v5645 = vpop.f32.mrf.mxu0
    %v5646 = vadd.f32 %v5526, %v5645
    %v5647 = vpop.f32.mrf.mxu0
    %v5648 = vpop.f32.mrf.mxu0
    %v5649 = vadd.f32 %v5526, %v5648
    %v5650 = vpop.f32.mrf.mxu0
    %5651 = vmatprep.mubr.bf16.mxu0 0
    %5652 = vmatmul.mubr.bf16.gmra.mxu0 %v5552
    %v5653 = vpop.f32.mrf.mxu0
    %v5654 = vadd.f32 %v5526, %v5653
    %v5655 = vpop.f32.mrf.mxu0
    %v5656 = vpop.f32.mrf.mxu0
    %v5657 = vadd.f32 %v5526, %v5656
    %v5658 = vpop.f32.mrf.mxu0
    %5659 = vmatprep.mubr.bf16.mxu0 0
    %5660 = vmatmul.mubr.bf16.gmra.mxu0 %v5555
    %v5661 = vpop.f32.mrf.mxu0
    %v5662 = vadd.f32 %v5526, %v5661
    %v5663 = vpop.f32.mrf.mxu0
    %v5664 = vpop.f32.mrf.mxu0
    %v5665 = vadd.f32 %v5526, %v5664
    %v5666 = vpop.f32.mrf.mxu0
    %5667 = vmatprep.mubr.bf16.mxu0 0
    %5668 = vmatmul.mubr.bf16.gmra.mxu0 %v5558
    %v5669 = vpop.f32.mrf.mxu0
    %v5670 = vadd.f32 %v5526, %v5669
    %v5671 = vpop.f32.mrf.mxu0
    %v5672 = vpop.f32.mrf.mxu0
    %v5673 = vadd.f32 %v5526, %v5672
    %v5674 = vpop.f32.mrf.mxu0
    %5675 = vmatprep.mubr.bf16.mxu0 0
    %5676 = vmatmul.mubr.bf16.gmra.mxu0 %v5561
    %v5677 = vpop.f32.mrf.mxu0
    %v5678 = vadd.f32 %v5526, %v5677
    %v5679 = vpop.f32.mrf.mxu0
    %v5680 = vpop.f32.mrf.mxu0
    %v5681 = vadd.f32 %v5526, %v5680
    %v5682 = vpop.f32.mrf.mxu0
    %5683 = vmatprep.mubr.bf16.mxu0 0
    %5684 = vmatmul.mubr.bf16.gmra.mxu0 %v5564
    %v5685 = vpop.f32.mrf.mxu0
    %v5686 = vadd.f32 %v5526, %v5685
    %v5687 = vpop.f32.mrf.mxu0
    %v5688 = vpop.f32.mrf.mxu0
    %v5689 = vadd.f32 %v5526, %v5688
    %v5690 = vpop.f32.mrf.mxu0
    %5691 = vmatprep.mubr.bf16.mxu0 0
    %5692 = vmatmul.mubr.bf16.gmra.mxu0 %v5567
    %v5693 = vpop.f32.mrf.mxu0
    %v5694 = vadd.f32 %v5526, %v5693
    %v5695 = vpop.f32.mrf.mxu0
    %v5696 = vpop.f32.mrf.mxu0
    %v5697 = vadd.f32 %v5526, %v5696
    %v5698 = vpop.f32.mrf.mxu0
    %5699 = vmatprep.mubr.bf16.mxu0 0
    %5700 = vmatmul.mubr.bf16.gmra.mxu0 %v5570
    %v5701 = vpop.f32.mrf.mxu0
    %v5702 = vadd.f32 %v5526, %v5701
    %v5703 = vpop.f32.mrf.mxu0
    %v5704 = vpop.f32.mrf.mxu0
    %v5705 = vadd.f32 %v5526, %v5704
    %v5706 = vpop.f32.mrf.mxu0
    %5707 = vmatprep.mubr.bf16.mxu0 0
    %5708 = vmatmul.mubr.bf16.gmra.mxu0 %v5573
    %v5709 = vpop.f32.mrf.mxu0
    %v5710 = vadd.f32 %v5526, %v5709
    %v5711 = vpop.f32.mrf.mxu0
    %v5712 = vpop.f32.mrf.mxu0
    %v5713 = vadd.f32 %v5526, %v5712
    %v5714 = vpop.f32.mrf.mxu0
    %5715 = vmatprep.mubr.bf16.mxu0 0
    %5716 = vmatmul.mubr.bf16.gmra.mxu0 %v5576
    %v5717 = vpop.f32.mrf.mxu0
    %v5718 = vadd.f32 %v5526, %v5717
    %v5719 = vpop.f32.mrf.mxu0
    %v5720 = vpop.f32.mrf.mxu0
    %v5721 = vadd.f32 %v5526, %v5720
    %v5722 = vpop.f32.mrf.mxu0
    %5723 = vmatprep.mubr.bf16.mxu0 0
    %5724 = vmatmul.mubr.bf16.gmra.mxu0 %v5579
    %v5725 = vpop.f32.mrf.mxu0
    %v5726 = vadd.f32 %v5526, %v5725
    %v5727 = vpop.f32.mrf.mxu0
    %v5728 = vpop.f32.mrf.mxu0
    %v5729 = vadd.f32 %v5526, %v5728
    %v5730 = vpop.f32.mrf.mxu0
    %5731 = vmatprep.mubr.bf16.mxu0 0
    %5732 = vmatmul.mubr.bf16.gmra.mxu0 %v5582
    %v5733 = vpop.f32.mrf.mxu0
    %v5734 = vadd.f32 %v5526, %v5733
    %v5735 = vpop.f32.mrf.mxu0
    %v5736 = vpop.f32.mrf.mxu0
    %v5737 = vadd.f32 %v5526, %v5736
    %v5738 = vpop.f32.mrf.mxu0
    %5739 = vmatprep.mubr.bf16.mxu0 0
    %5740 = vmatmul.mubr.bf16.gmra.mxu0 %v5585
    %v5741 = vpop.f32.mrf.mxu0
    %v5742 = vadd.f32 %v5526, %v5741
    %v5743 = vpop.f32.mrf.mxu0
    %v5744 = vpop.f32.mrf.mxu0
    %v5745 = vadd.f32 %v5526, %v5744
    %v5746 = vpop.f32.mrf.mxu0
    %5747 = vdwg.mxu0
    %v5748 = vadd.f32 %v5622, %v1121
    %v5749 = vadd.f32 %v5625, %v1124
    %v5750 = vadd.f32 %v5630, %v1129
    %v5751 = vadd.f32 %v5633, %v1132
    %v5752 = vadd.f32 %v5638, %v1137
    %v5753 = vadd.f32 %v5641, %v1140
    %v5754 = vadd.f32 %v5646, %v1145
    %v5755 = vadd.f32 %v5649, %v1148
    %v5756 = vadd.f32 %v5654, %v1153
    %v5757 = vadd.f32 %v5657, %v1156
    %v5758 = vadd.f32 %v5662, %v1161
    %v5759 = vadd.f32 %v5665, %v1164
    %v5760 = vadd.f32 %v5670, %v1169
    %v5761 = vadd.f32 %v5673, %v1172
    %v5762 = vadd.f32 %v5678, %v1177
    %v5763 = vadd.f32 %v5681, %v1180
    %v5764 = vadd.f32 %v5686, %v1185
    %v5765 = vadd.f32 %v5689, %v1188
    %v5766 = vadd.f32 %v5694, %v1193
    %v5767 = vadd.f32 %v5697, %v1196
    %v5768 = vadd.f32 %v5702, %v1201
    %v5769 = vadd.f32 %v5705, %v1204
    %v5770 = vadd.f32 %v5710, %v1209
    %v5771 = vadd.f32 %v5713, %v1212
    %v5772 = vadd.f32 %v5718, %v1217
    %v5773 = vadd.f32 %v5721, %v1220
    %v5774 = vadd.f32 %v5726, %v1225
    %v5775 = vadd.f32 %v5729, %v1228
    %v5776 = vadd.f32 %v5734, %v1233
    %v5777 = vadd.f32 %v5737, %v1236
    %v5778 = vadd.f32 %v5742, %v1241
    %v5779 = vadd.f32 %v5745, %v1244
    %v5780 = vmul.f32 %v5748, 0.70710677
    %v5781 = vmul.f32 %v5749, 0.70710677
    %v5782 = vmul.f32 %v5750, 0.70710677
    %v5783 = vmul.f32 %v5751, 0.70710677
    %v5784 = vmul.f32 %v5752, 0.70710677
    %v5785 = vmul.f32 %v5753, 0.70710677
    %v5786 = vmul.f32 %v5754, 0.70710677
    %v5787 = vmul.f32 %v5755, 0.70710677
    %v5788 = vmul.f32 %v5756, 0.70710677
    %v5789 = vmul.f32 %v5757, 0.70710677
    %v5790 = vmul.f32 %v5758, 0.70710677
    %v5791 = vmul.f32 %v5759, 0.70710677
    %v5792 = vmul.f32 %v5760, 0.70710677
    %v5793 = vmul.f32 %v5761, 0.70710677
    %v5794 = vmul.f32 %v5762, 0.70710677
    %v5795 = vmul.f32 %v5763, 0.70710677
    %v5796 = vmul.f32 %v5764, 0.70710677
    %v5797 = vmul.f32 %v5765, 0.70710677
    %v5798 = vmul.f32 %v5766, 0.70710677
    %v5799 = vmul.f32 %v5767, 0.70710677
    %v5800 = vmul.f32 %v5768, 0.70710677
    %v5801 = vmul.f32 %v5769, 0.70710677
    %v5802 = vmul.f32 %v5770, 0.70710677
    %v5803 = vmul.f32 %v5771, 0.70710677
    %v5804 = vmul.f32 %v5772, 0.70710677
    %v5805 = vmul.f32 %v5773, 0.70710677
    %v5806 = vmul.f32 %v5774, 0.70710677
    %v5807 = vmul.f32 %v5775, 0.70710677
    %v5808 = vmul.f32 %v5776, 0.70710677
    %v5809 = vmul.f32 %v5777, 0.70710677
    %v5810 = vmul.f32 %v5778, 0.70710677
    %v5811 = vmul.f32 %v5779, 0.70710677
    %5844 = vrot.lane.b32.xlu0 %v5780, 32
    %v5845 = vpop.permute.xlu0 %5844
    %5846 = vrot.lane.b32.xlu0 %v5781, 32
    %v5847 = vpop.permute.xlu0 %5846
    %5848 = vrot.lane.b32.xlu0 %v5782, 32
    %v5849 = vpop.permute.xlu0 %5848
    %5850 = vrot.lane.b32.xlu0 %v5783, 32
    %v5851 = vpop.permute.xlu0 %5850
    %5852 = vrot.lane.b32.xlu0 %v5784, 32
    %v5853 = vpop.permute.xlu0 %5852
    %5854 = vrot.lane.b32.xlu0 %v5785, 32
    %v5855 = vpop.permute.xlu0 %5854
    %5856 = vrot.lane.b32.xlu0 %v5786, 32
    %v5857 = vpop.permute.xlu0 %5856
    %5858 = vrot.lane.b32.xlu0 %v5787, 32
    %v5859 = vpop.permute.xlu0 %5858
    %5860 = vrot.lane.b32.xlu0 %v5788, 32
    %v5861 = vpop.permute.xlu0 %5860
    %5862 = vrot.lane.b32.xlu0 %v5789, 32
    %v5863 = vpop.permute.xlu0 %5862
    %5864 = vrot.lane.b32.xlu0 %v5790, 32
    %v5865 = vpop.permute.xlu0 %5864
    %5866 = vrot.lane.b32.xlu0 %v5791, 32
    %v5867 = vpop.permute.xlu0 %5866
    %5868 = vrot.lane.b32.xlu0 %v5792, 32
    %v5869 = vpop.permute.xlu0 %5868
    %5870 = vrot.lane.b32.xlu0 %v5793, 32
    %v5871 = vpop.permute.xlu0 %5870
    %5872 = vrot.lane.b32.xlu0 %v5794, 32
    %v5873 = vpop.permute.xlu0 %5872
    %5874 = vrot.lane.b32.xlu0 %v5795, 32
    %v5875 = vpop.permute.xlu0 %5874
    %5876 = vrot.lane.b32.xlu0 %v5796, 32
    %v5877 = vpop.permute.xlu0 %5876
    %5878 = vrot.lane.b32.xlu0 %v5797, 32
    %v5879 = vpop.permute.xlu0 %5878
    %5880 = vrot.lane.b32.xlu0 %v5798, 32
    %v5881 = vpop.permute.xlu0 %5880
    %5882 = vrot.lane.b32.xlu0 %v5799, 32
    %v5883 = vpop.permute.xlu0 %5882
    %5884 = vrot.lane.b32.xlu0 %v5800, 32
    %v5885 = vpop.permute.xlu0 %5884
    %5886 = vrot.lane.b32.xlu0 %v5801, 32
    %v5887 = vpop.permute.xlu0 %5886
    %5888 = vrot.lane.b32.xlu0 %v5802, 32
    %v5889 = vpop.permute.xlu0 %5888
    %5890 = vrot.lane.b32.xlu0 %v5803, 32
    %v5891 = vpop.permute.xlu0 %5890
    %5892 = vrot.lane.b32.xlu0 %v5804, 32
    %v5893 = vpop.permute.xlu0 %5892
    %5894 = vrot.lane.b32.xlu0 %v5805, 32
    %v5895 = vpop.permute.xlu0 %5894
    %5896 = vrot.lane.b32.xlu0 %v5806, 32
    %v5897 = vpop.permute.xlu0 %5896
    %5898 = vrot.lane.b32.xlu0 %v5807, 32
    %v5899 = vpop.permute.xlu0 %5898
    %5900 = vrot.lane.b32.xlu0 %v5808, 32
    %v5901 = vpop.permute.xlu0 %5900
    %5902 = vrot.lane.b32.xlu0 %v5809, 32
    %v5903 = vpop.permute.xlu0 %5902
    %5904 = vrot.lane.b32.xlu0 %v5810, 32
    %v5905 = vpop.permute.xlu0 %5904
    %5906 = vrot.lane.b32.xlu0 %v5811, 32
    %v5907 = vpop.permute.xlu0 %5906
    %v5940 = vsel %vm1285, %v5622, %v5845
    %v5941 = vsel %vm1285, %v5625, %v5847
    %v5942 = vsel %vm1285, %v5630, %v5849
    %v5943 = vsel %vm1285, %v5633, %v5851
    %v5944 = vsel %vm1285, %v5638, %v5853
    %v5945 = vsel %vm1285, %v5641, %v5855
    %v5946 = vsel %vm1285, %v5646, %v5857
    %v5947 = vsel %vm1285, %v5649, %v5859
    %v5948 = vsel %vm1285, %v5654, %v5861
    %v5949 = vsel %vm1285, %v5657, %v5863
    %v5950 = vsel %vm1285, %v5662, %v5865
    %v5951 = vsel %vm1285, %v5665, %v5867
    %v5952 = vsel %vm1285, %v5670, %v5869
    %v5953 = vsel %vm1285, %v5673, %v5871
    %v5954 = vsel %vm1285, %v5678, %v5873
    %v5955 = vsel %vm1285, %v5681, %v5875
    %v5956 = vsel %vm1285, %v5686, %v5877
    %v5957 = vsel %vm1285, %v5689, %v5879
    %v5958 = vsel %vm1285, %v5694, %v5881
    %v5959 = vsel %vm1285, %v5697, %v5883
    %v5960 = vsel %vm1285, %v5702, %v5885
    %v5961 = vsel %vm1285, %v5705, %v5887
    %v5962 = vsel %vm1285, %v5710, %v5889
    %v5963 = vsel %vm1285, %v5713, %v5891
    %v5964 = vsel %vm1285, %v5718, %v5893
    %v5965 = vsel %vm1285, %v5721, %v5895
    %v5966 = vsel %vm1285, %v5726, %v5897
    %v5967 = vsel %vm1285, %v5729, %v5899
    %v5968 = vsel %vm1285, %v5734, %v5901
    %v5969 = vsel %vm1285, %v5737, %v5903
    %v5970 = vsel %vm1285, %v5742, %v5905
    %v5971 = vsel %vm1285, %v5745, %v5907
    %vm5972 = vcmask 523264
    %v5973 = vsel %vm5972, %v5940, 0.0
    %v5974 = vsel %vm5972, %v5941, 0.0
    %v5975 = vsel %vm5972, %v5942, 0.0
    %v5976 = vsel %vm5972, %v5943, 0.0
    %v5977 = vsel %vm5972, %v5944, 0.0
    %v5978 = vsel %vm5972, %v5945, 0.0
    %v5979 = vsel %vm5972, %v5946, 0.0
    %v5980 = vsel %vm5972, %v5947, 0.0
    %v5981 = vsel %vm5972, %v5948, 0.0
    %v5982 = vsel %vm5972, %v5949, 0.0
    %v5983 = vsel %vm5972, %v5950, 0.0
    %v5984 = vsel %vm5972, %v5951, 0.0
    %v5985 = vsel %vm5972, %v5952, 0.0
    %v5986 = vsel %vm5972, %v5953, 0.0
    %v5987 = vsel %vm5972, %v5954, 0.0
    %v5988 = vsel %vm5972, %v5955, 0.0
    %v5989 = vsel %vm5972, %v5956, 0.0
    %v5990 = vsel %vm5972, %v5957, 0.0
    %v5991 = vsel %vm5972, %v5958, 0.0
    %v5992 = vsel %vm5972, %v5959, 0.0
    %v5993 = vsel %vm5972, %v5960, 0.0
    %v5994 = vsel %vm5972, %v5961, 0.0
    %v5995 = vsel %vm5972, %v5962, 0.0
    %v5996 = vsel %vm5972, %v5963, 0.0
    %v5997 = vsel %vm5972, %v5964, 0.0
    %v5998 = vsel %vm5972, %v5965, 0.0
    %v5999 = vsel %vm5972, %v5966, 0.0
    %v6000 = vsel %vm5972, %v5967, 0.0
    %v6001 = vsel %vm5972, %v5968, 0.0
    %v6002 = vsel %vm5972, %v5969, 0.0
    %v6003 = vsel %vm5972, %v5970, 0.0
    %v6004 = vsel %vm5972, %v5971, 0.0
    %6005 = vst [vmem:[%s2] sm:$0xff] %v5973
    %6006 = vst [vmem:[%s2 + $0x8] sm:$0xff] %v5974
    %6007 = vst [vmem:[%s2 + $0x10] sm:$0xff] %v5975
    %6008 = vst [vmem:[%s2 + $0x18] sm:$0xff] %v5976
    %6009 = vst [vmem:[%s2 + $0x20] sm:$0xff] %v5977
    %6010 = vst [vmem:[%s2 + $0x28] sm:$0xff] %v5978
    %6011 = vst [vmem:[%s2 + $0x30] sm:$0xff] %v5979
    %6012 = vst [vmem:[%s2 + $0x38] sm:$0xff] %v5980
    %6013 = vst [vmem:[%s2 + $0x40] sm:$0xff] %v5981
    %6014 = vst [vmem:[%s2 + $0x48] sm:$0xff] %v5982
    %6015 = vst [vmem:[%s2 + $0x50] sm:$0xff] %v5983
    %6016 = vst [vmem:[%s2 + $0x58] sm:$0xff] %v5984
    %6017 = vst [vmem:[%s2 + $0x60] sm:$0xff] %v5985
    %6018 = vst [vmem:[%s2 + $0x68] sm:$0xff] %v5986
    %6019 = vst [vmem:[%s2 + $0x70] sm:$0xff] %v5987
    %6020 = vst [vmem:[%s2 + $0x78] sm:$0xff] %v5988
    %6021 = vst [vmem:[%s2 + $0x80] sm:$0xff] %v5989
    %6022 = vst [vmem:[%s2 + $0x88] sm:$0xff] %v5990
    %6023 = vst [vmem:[%s2 + $0x90] sm:$0xff] %v5991
    %6024 = vst [vmem:[%s2 + $0x98] sm:$0xff] %v5992
    %6025 = vst [vmem:[%s2 + $0xa0] sm:$0xff] %v5993
    %6026 = vst [vmem:[%s2 + $0xa8] sm:$0xff] %v5994
    %6027 = vst [vmem:[%s2 + $0xb0] sm:$0xff] %v5995
    %6028 = vst [vmem:[%s2 + $0xb8] sm:$0xff] %v5996
    %6029 = vst [vmem:[%s2 + $0xc0] sm:$0xff] %v5997
    %6030 = vst [vmem:[%s2 + $0xc8] sm:$0xff] %v5998
    %6031 = vst [vmem:[%s2 + $0xd0] sm:$0xff] %v5999
    %6032 = vst [vmem:[%s2 + $0xd8] sm:$0xff] %v6000
    %6033 = vst [vmem:[%s2 + $0xe0] sm:$0xff] %v6001
    %6034 = vst [vmem:[%s2 + $0xe8] sm:$0xff] %v6002
    %6035 = vst [vmem:[%s2 + $0xf0] sm:$0xff] %v6003
    %6036 = vst [vmem:[%s2 + $0xf8] sm:$0xff] %v6004
    // Predicated region
    $region14: #{encoder_forward.1} parent=1 // pred_check
      _
    $region15: #{encoder_forward.1} parent=1 // pred_check_branch
      %6038 = sbr.rel (0) target = $region17
    $region16: #{encoder_forward.1} parent=1 // pred_region
      _
    $region17: #{encoder_forward.1} parent=1 // pred_fallthru
      _
    // Predicated region
    $region18: #{encoder_forward.1} parent=1 // pred_check
      _
    $region19: #{encoder_forward.1} parent=1 // pred_check_branch
      %6040 = sbr.rel (0) target = $region21
    $region20: #{encoder_forward.1} parent=1 // pred_region
      _
    $region21: #{encoder_forward.1} parent=1 // pred_fallthru
      _
    %6041 = vsyncpa [#allocation3], 1

</llo_original>
